<compile_context>
chip_gen: v7x
topology: tpu7x:2x2x1
jax: 0.10.0
libtpu: 0.0.40
codegen_flags: <defaults>
</compile_context>

<pallas_src>
import functools

import jax
import jax.numpy as jnp
from jax.experimental import pallas as pl
from jax.experimental.pallas import tpu as pltpu


def _win(start, size, stride):
    """Static (possibly strided) window along one ref axis."""
    if stride == 1:
        return slice(start, start + size)
    return pl.ds(start, size, stride=stride)


def _conv_kernel(x_ref, w_ref, b_ref, o_ref, xpad_ref, slab_ref, *,
                 kh, kw, stride, pad, h, w, ho, wo, cin, bt):
    """One grid step = `bt` batch elements, full spatial extent.

    x_ref:    (Bt, H, W, Cin)          unpadded input block (VMEM)
    w_ref:    (KH*KW*Cin, Cout)        im2col-ordered weights (VMEM)
    b_ref:    (1, Cout)                bias (f32)
    o_ref:    (Bt, Ho, Wo, Cout)       output block
    xpad_ref: (Bt, Hp, Wp, Cin)        VMEM scratch: reflection-padded input
    slab_ref: (Bt, Ho, Wo, KH*KW*Cin)  VMEM scratch: im2col slab
    """
    # ---- 1) Reflection pad into the scratch: pure ref stores, no concats.
    xpad_ref[:, pad:pad + h, pad:pad + w, :] = x_ref[...]
    for t in range(pad):
        # top / bottom halo rows (interior columns; corners come from col pass)
        xpad_ref[:, t:t + 1, pad:pad + w, :] = x_ref[:, pad - t:pad - t + 1, :, :]
        xpad_ref[:, pad + h + t:pad + h + t + 1, pad:pad + w, :] = (
            x_ref[:, h - 2 - t:h - 1 - t, :, :])
    for t in range(pad):
        # left / right halo columns reflected from the row-padded scratch so
        # the four corners are filled correctly too.
        xpad_ref[:, :, t:t + 1, :] = (
            xpad_ref[:, :, 2 * pad - t:2 * pad - t + 1, :])
        xpad_ref[:, :, pad + w + t:pad + w + t + 1, :] = (
            xpad_ref[:, :, pad + w - 2 - t:pad + w - 1 - t, :])

    # ---- 2) im2col: each tap is a window read from the padded scratch ref,
    #         stored at its static channel offset in the slab scratch.
    for i in range(kh):
        for j in range(kw):
            koff = (i * kw + j) * cin
            slab_ref[:, :, :, koff:koff + cin] = xpad_ref[
                :, _win(i, ho, stride), _win(j, wo, stride), :]

    # ---- 3) one MXU matmul per image: M = Ho*Wo, K = KH*KW*Cin, N = Cout,
    #         f32 accumulation, single fused bias add.
    bias = b_ref[0].astype(jnp.float32)                       # (Cout,)
    for b in range(bt):
        acc = jnp.dot(slab_ref[b], w_ref[...],
                      preferred_element_type=jnp.float32)     # (Ho, Wo, Cout)
        o_ref[b] = (acc + bias).astype(o_ref.dtype)


def _pick_batch_tile(n, per_sample_vmem_bytes, budget_bytes=16 * 1024 * 1024,
                     max_bt=8):
    """Largest divisor of n (capped) whose resident footprint fits the budget."""
    bt = max(1, min(n, max_bt, budget_bytes // max(per_sample_vmem_bytes, 1)))
    while n % bt:
        bt -= 1
    return bt


def conv_layer_forward(x_nchw, weight_oihw, bias, stride, *, compute_dtype=None):
    """Equivalent of ConvLayer.forward: ReflectionPad2d(k//2) + Conv2d(k, stride)."""
    n, cin, h, w = x_nchw.shape
    cout, cin_w, kh, kw = weight_oihw.shape
    assert cin == cin_w
    pad = kh // 2                      # int(np.floor(kernel_size / 2))
    assert pad < h and pad < w         # nn.ReflectionPad2d requirement

    hp, wp = h + 2 * pad, w + 2 * pad
    ho = (hp - kh) // stride + 1
    wo = (wp - kw) // stride + 1
    k_dim = kh * kw * cin

    out_dtype = jnp.dtype(x_nchw.dtype)
    cdtype = jnp.dtype(compute_dtype) if compute_dtype is not None else out_dtype

    # Glue: NCHW -> NHWC (channels last -> lanes).
    # TODO(synk): keep activations NHWC end-to-end across layers so this and
    # the output transpose (each a full HBM read+write pass) disappear.
    x_nhwc = jnp.transpose(x_nchw, (0, 2, 3, 1)).astype(cdtype)

    # Weights as one (KH*KW*Cin, Cout) im2col matrix; row order = (i, j, cin),
    # matching the in-kernel slab channel offsets.
    w_mat = jnp.transpose(weight_oihw, (2, 3, 1, 0)).reshape(k_dim, cout)
    w_mat = w_mat.astype(cdtype)
    b2 = bias.reshape(1, cout).astype(jnp.float32)

    # Batch fold: largest batch tile that keeps the resident VMEM footprint
    # (double-buffered in/out blocks + padded & slab scratches) small.
    itemsize = cdtype.itemsize
    per_sample = (2 * h * w * cin * itemsize              # input block (x2 buffers)
                  + hp * wp * cin * itemsize              # padded scratch
                  + ho * wo * k_dim * itemsize            # im2col slab scratch
                  + 2 * ho * wo * cout * out_dtype.itemsize)  # output block (x2)
    bt = _pick_batch_tile(n, per_sample)

    kernel = functools.partial(_conv_kernel, kh=kh, kw=kw, stride=stride,
                               pad=pad, h=h, w=w, ho=ho, wo=wo, cin=cin, bt=bt)

    cost = pl.CostEstimate(
        flops=2 * n * ho * wo * k_dim * cout,
        transcendentals=0,
        bytes_accessed=(x_nhwc.size * itemsize + w_mat.size * itemsize
                        + b2.size * 4
                        + n * ho * wo * cout * out_dtype.itemsize),
    )

    out_nhwc = pl.pallas_call(
        kernel,
        out_shape=jax.ShapeDtypeStruct((n, ho, wo, cout), out_dtype),
        grid_spec=pltpu.PrefetchScalarGridSpec(
            num_scalar_prefetch=0,
            grid=(n // bt,),
            in_specs=[
                pl.BlockSpec((bt, h, w, cin), lambda b: (b, 0, 0, 0)),
                pl.BlockSpec((k_dim, cout), lambda b: (0, 0)),
                pl.BlockSpec((1, cout), lambda b: (0, 0)),
            ],
            out_specs=pl.BlockSpec((bt, ho, wo, cout), lambda b: (b, 0, 0, 0)),
            scratch_shapes=[
                pltpu.VMEM((bt, hp, wp, cin), cdtype),        # padded input
                pltpu.VMEM((bt, ho, wo, k_dim), cdtype),      # im2col slab
            ],
        ),
        compiler_params=pltpu.CompilerParams(
            dimension_semantics=("parallel",),     # batch blocks across TCs
            vmem_limit_bytes=32 * 1024 * 1024,     # explicit; fits v5e..v7x
        ),
        cost_estimate=cost,
    )(x_nhwc, w_mat, b2)

    # Glue: NHWC -> NCHW to match the PyTorch module's output convention.
    return jnp.transpose(out_nhwc, (0, 3, 1, 2))


if __name__ == "__main__":
    # Module hyperparams (small, consistent with ConvLayer(in, out, k, stride)).
    in_channels, out_channels = 4, 8
    kernel_size, stride = 3, 1
    batch, spatial = 2, 16

    key = jax.random.PRNGKey(0)
    kx, kw_, kb = jax.random.split(key, 3)

    x = jax.random.normal(kx, (batch, in_channels, spatial, spatial),
                          dtype=jnp.float32)
    # Deterministic synthetic parameters (Conv2d-like uniform init).
    fan_in = in_channels * kernel_size * kernel_size
    bound = 1.0 / (fan_in ** 0.5)
    weight = jax.random.uniform(
        kw_, (out_channels, in_channels, kernel_size, kernel_size),
        minval=-bound, maxval=bound, dtype=jnp.float32)
    bias = jax.random.uniform(kb, (out_channels,), minval=-bound,
                              maxval=bound, dtype=jnp.float32)

    out = conv_layer_forward(x, weight, bias, stride)
    out = jax.block_until_ready(out)

    # Reference check against XLA's conv on the reflection-padded input.
    pad = kernel_size // 2
    x_pad = jnp.pad(x, ((0, 0), (0, 0), (pad, pad), (pad, pad)), mode="reflect")
    ref = jax.lax.conv_general_dilated(
        x_pad, weight, window_strides=(stride, stride), padding="VALID",
        dimension_numbers=("NCHW", "OIHW", "NCHW"))
    ref = ref + bias[None, :, None, None]
    assert out.shape == ref.shape, (out.shape, ref.shape)
    assert jnp.max(jnp.abs(out - ref)) < 1e-3

    print("KERNEL_OK")
</pallas_src>

<mosaic_0001>
module attributes {stable_mosaic.version = 11 : i64} {
  func.func @_conv_kernel(%arg0: i32, %arg1: memref<2x16x16x4xf32, #tpu.memory_space<vmem>>, %arg2: memref<36x8xf32, #tpu.memory_space<vmem>>, %arg3: memref<1x8xf32, #tpu.memory_space<vmem>>, %arg4: memref<2x16x16x8xf32, #tpu.memory_space<vmem>>, %arg5: memref<2x18x18x4xf32, #tpu.memory_space<vmem>>, %arg6: memref<2x16x16x36xf32, #tpu.memory_space<vmem>>) attributes {dimension_semantics = [#tpu.dimension_semantics<parallel>], iteration_bounds = array<i64: 1>, scalar_prefetch = 0 : i64, scratch_operands = 2 : i64, tpu.core_type = #tpu.core_type<tc>, window_params = [{transform_indices = @transform_0, window_bounds = array<i64: 2, 16, 16, 4>}, {pipeline_mode = #tpu.pipeline_mode<synchronous>, transform_indices = @transform_1, window_bounds = array<i64: 36, 8>}, {pipeline_mode = #tpu.pipeline_mode<synchronous>, transform_indices = @transform_2, window_bounds = array<i64: 1, 8>}, {transform_indices = @transform_3, window_bounds = array<i64: 2, 16, 16, 8>}]} {
    %c0 = arith.constant 0 : index
    %c0_0 = arith.constant 0 : index
    %c0_1 = arith.constant 0 : index
    %c0_2 = arith.constant 0 : index
    %0 = vector.load %arg1[%c0, %c0_0, %c0_1, %c0_2] : memref<2x16x16x4xf32, #tpu.memory_space<vmem>>, vector<2x16x16x4xf32>
    %c0_3 = arith.constant 0 : index
    %c1 = arith.constant 1 : index
    %c1_4 = arith.constant 1 : index
    %c0_5 = arith.constant 0 : index
    %1 = vector.load %arg5[%c0_3, %c1, %c1_4, %c0_5] : memref<2x18x18x4xf32, #tpu.memory_space<vmem>>, vector<2x16x16x4xf32>
    tpu.vector_store %arg5[%c0_3, %c1, %c1_4, %c0_5], %0 {strides = array<i32>} : memref<2x18x18x4xf32, #tpu.memory_space<vmem>>, vector<2x16x16x4xf32>,
    %c0_6 = arith.constant 0 : index
    %c1_7 = arith.constant 1 : index
    %c0_8 = arith.constant 0 : index
    %c0_9 = arith.constant 0 : index
    %2 = vector.load %arg1[%c0_6, %c1_7, %c0_8, %c0_9] : memref<2x16x16x4xf32, #tpu.memory_space<vmem>>, vector<2x1x16x4xf32>
    %c0_10 = arith.constant 0 : index
    %c0_11 = arith.constant 0 : index
    %c1_12 = arith.constant 1 : index
    %c0_13 = arith.constant 0 : index
    %3 = vector.load %arg5[%c0_10, %c0_11, %c1_12, %c0_13] : memref<2x18x18x4xf32, #tpu.memory_space<vmem>>, vector<2x1x16x4xf32>
    tpu.vector_store %arg5[%c0_10, %c0_11, %c1_12, %c0_13], %2 {strides = array<i32>} : memref<2x18x18x4xf32, #tpu.memory_space<vmem>>, vector<2x1x16x4xf32>,
    %c0_14 = arith.constant 0 : index
    %c14 = arith.constant 14 : index
    %c0_15 = arith.constant 0 : index
    %c0_16 = arith.constant 0 : index
    %4 = vector.load %arg1[%c0_14, %c14, %c0_15, %c0_16] : memref<2x16x16x4xf32, #tpu.memory_space<vmem>>, vector<2x1x16x4xf32>
    %c0_17 = arith.constant 0 : index
    %c17 = arith.constant 17 : index
    %c1_18 = arith.constant 1 : index
    %c0_19 = arith.constant 0 : index
    %5 = vector.load %arg5[%c0_17, %c17, %c1_18, %c0_19] : memref<2x18x18x4xf32, #tpu.memory_space<vmem>>, vector<2x1x16x4xf32>
    tpu.vector_store %arg5[%c0_17, %c17, %c1_18, %c0_19], %4 {strides = array<i32>} : memref<2x18x18x4xf32, #tpu.memory_space<vmem>>, vector<2x1x16x4xf32>,
    %c0_20 = arith.constant 0 : index
    %c0_21 = arith.constant 0 : index
    %c2 = arith.constant 2 : index
    %c0_22 = arith.constant 0 : index
    %6 = vector.load %arg5[%c0_20, %c0_21, %c2, %c0_22] : memref<2x18x18x4xf32, #tpu.memory_space<vmem>>, vector<2x18x1x4xf32>
    %c0_23 = arith.constant 0 : index
    %c0_24 = arith.constant 0 : index
    %c0_25 = arith.constant 0 : index
    %c0_26 = arith.constant 0 : index
    %7 = vector.load %arg5[%c0_23, %c0_24, %c0_25, %c0_26] : memref<2x18x18x4xf32, #tpu.memory_space<vmem>>, vector<2x18x1x4xf32>
    tpu.vector_store %arg5[%c0_23, %c0_24, %c0_25, %c0_26], %6 {strides = array<i32>} : memref<2x18x18x4xf32, #tpu.memory_space<vmem>>, vector<2x18x1x4xf32>,
    %c0_27 = arith.constant 0 : index
    %c0_28 = arith.constant 0 : index
    %c15 = arith.constant 15 : index
    %c0_29 = arith.constant 0 : index
    %8 = vector.load %arg5[%c0_27, %c0_28, %c15, %c0_29] : memref<2x18x18x4xf32, #tpu.memory_space<vmem>>, vector<2x18x1x4xf32>
    %c0_30 = arith.constant 0 : index
    %c0_31 = arith.constant 0 : index
    %c17_32 = arith.constant 17 : index
    %c0_33 = arith.constant 0 : index
    %9 = vector.load %arg5[%c0_30, %c0_31, %c17_32, %c0_33] : memref<2x18x18x4xf32, #tpu.memory_space<vmem>>, vector<2x18x1x4xf32>
    tpu.vector_store %arg5[%c0_30, %c0_31, %c17_32, %c0_33], %8 {strides = array<i32>} : memref<2x18x18x4xf32, #tpu.memory_space<vmem>>, vector<2x18x1x4xf32>,
    %c0_34 = arith.constant 0 : index
    %c0_35 = arith.constant 0 : index
    %c0_36 = arith.constant 0 : index
    %c0_37 = arith.constant 0 : index
    %10 = vector.load %arg5[%c0_34, %c0_35, %c0_36, %c0_37] : memref<2x18x18x4xf32, #tpu.memory_space<vmem>>, vector<2x16x16x4xf32>
    %c0_38 = arith.constant 0 : index
    %c0_39 = arith.constant 0 : index
    %c0_40 = arith.constant 0 : index
    %c0_41 = arith.constant 0 : index
    %11 = vector.load %arg6[%c0_38, %c0_39, %c0_40, %c0_41] : memref<2x16x16x36xf32, #tpu.memory_space<vmem>>, vector<2x16x16x4xf32>
    tpu.vector_store %arg6[%c0_38, %c0_39, %c0_40, %c0_41], %10 {strides = array<i32>} : memref<2x16x16x36xf32, #tpu.memory_space<vmem>>, vector<2x16x16x4xf32>,
    %c0_42 = arith.constant 0 : index
    %c0_43 = arith.constant 0 : index
    %c1_44 = arith.constant 1 : index
    %c0_45 = arith.constant 0 : index
    %12 = vector.load %arg5[%c0_42, %c0_43, %c1_44, %c0_45] : memref<2x18x18x4xf32, #tpu.memory_space<vmem>>, vector<2x16x16x4xf32>
    %c0_46 = arith.constant 0 : index
    %c0_47 = arith.constant 0 : index
    %c0_48 = arith.constant 0 : index
    %c4 = arith.constant 4 : index
    %13 = vector.load %arg6[%c0_46, %c0_47, %c0_48, %c4] : memref<2x16x16x36xf32, #tpu.memory_space<vmem>>, vector<2x16x16x4xf32>
    tpu.vector_store %arg6[%c0_46, %c0_47, %c0_48, %c4], %12 {strides = array<i32>} : memref<2x16x16x36xf32, #tpu.memory_space<vmem>>, vector<2x16x16x4xf32>,
    %c0_49 = arith.constant 0 : index
    %c0_50 = arith.constant 0 : index
    %c2_51 = arith.constant 2 : index
    %c0_52 = arith.constant 0 : index
    %14 = vector.load %arg5[%c0_49, %c0_50, %c2_51, %c0_52] : memref<2x18x18x4xf32, #tpu.memory_space<vmem>>, vector<2x16x16x4xf32>
    %c0_53 = arith.constant 0 : index
    %c0_54 = arith.constant 0 : index
    %c0_55 = arith.constant 0 : index
    %c8 = arith.constant 8 : index
    %15 = vector.load %arg6[%c0_53, %c0_54, %c0_55, %c8] : memref<2x16x16x36xf32, #tpu.memory_space<vmem>>, vector<2x16x16x4xf32>
    tpu.vector_store %arg6[%c0_53, %c0_54, %c0_55, %c8], %14 {strides = array<i32>} : memref<2x16x16x36xf32, #tpu.memory_space<vmem>>, vector<2x16x16x4xf32>,
    %c0_56 = arith.constant 0 : index
    %c1_57 = arith.constant 1 : index
    %c0_58 = arith.constant 0 : index
    %c0_59 = arith.constant 0 : index
    %16 = vector.load %arg5[%c0_56, %c1_57, %c0_58, %c0_59] : memref<2x18x18x4xf32, #tpu.memory_space<vmem>>, vector<2x16x16x4xf32>
    %c0_60 = arith.constant 0 : index
    %c0_61 = arith.constant 0 : index
    %c0_62 = arith.constant 0 : index
    %c12 = arith.constant 12 : index
    %17 = vector.load %arg6[%c0_60, %c0_61, %c0_62, %c12] : memref<2x16x16x36xf32, #tpu.memory_space<vmem>>, vector<2x16x16x4xf32>
    tpu.vector_store %arg6[%c0_60, %c0_61, %c0_62, %c12], %16 {strides = array<i32>} : memref<2x16x16x36xf32, #tpu.memory_space<vmem>>, vector<2x16x16x4xf32>,
    %c0_63 = arith.constant 0 : index
    %c1_64 = arith.constant 1 : index
    %c1_65 = arith.constant 1 : index
    %c0_66 = arith.constant 0 : index
    %18 = vector.load %arg5[%c0_63, %c1_64, %c1_65, %c0_66] : memref<2x18x18x4xf32, #tpu.memory_space<vmem>>, vector<2x16x16x4xf32>
    %c0_67 = arith.constant 0 : index
    %c0_68 = arith.constant 0 : index
    %c0_69 = arith.constant 0 : index
    %c16 = arith.constant 16 : index
    %19 = vector.load %arg6[%c0_67, %c0_68, %c0_69, %c16] : memref<2x16x16x36xf32, #tpu.memory_space<vmem>>, vector<2x16x16x4xf32>
    tpu.vector_store %arg6[%c0_67, %c0_68, %c0_69, %c16], %18 {strides = array<i32>} : memref<2x16x16x36xf32, #tpu.memory_space<vmem>>, vector<2x16x16x4xf32>,
    %c0_70 = arith.constant 0 : index
    %c1_71 = arith.constant 1 : index
    %c2_72 = arith.constant 2 : index
    %c0_73 = arith.constant 0 : index
    %20 = vector.load %arg5[%c0_70, %c1_71, %c2_72, %c0_73] : memref<2x18x18x4xf32, #tpu.memory_space<vmem>>, vector<2x16x16x4xf32>
    %c0_74 = arith.constant 0 : index
    %c0_75 = arith.constant 0 : index
    %c0_76 = arith.constant 0 : index
    %c20 = arith.constant 20 : index
    %21 = vector.load %arg6[%c0_74, %c0_75, %c0_76, %c20] : memref<2x16x16x36xf32, #tpu.memory_space<vmem>>, vector<2x16x16x4xf32>
    tpu.vector_store %arg6[%c0_74, %c0_75, %c0_76, %c20], %20 {strides = array<i32>} : memref<2x16x16x36xf32, #tpu.memory_space<vmem>>, vector<2x16x16x4xf32>,
    %c0_77 = arith.constant 0 : index
    %c2_78 = arith.constant 2 : index
    %c0_79 = arith.constant 0 : index
    %c0_80 = arith.constant 0 : index
    %22 = vector.load %arg5[%c0_77, %c2_78, %c0_79, %c0_80] : memref<2x18x18x4xf32, #tpu.memory_space<vmem>>, vector<2x16x16x4xf32>
    %c0_81 = arith.constant 0 : index
    %c0_82 = arith.constant 0 : index
    %c0_83 = arith.constant 0 : index
    %c24 = arith.constant 24 : index
    %23 = vector.load %arg6[%c0_81, %c0_82, %c0_83, %c24] : memref<2x16x16x36xf32, #tpu.memory_space<vmem>>, vector<2x16x16x4xf32>
    tpu.vector_store %arg6[%c0_81, %c0_82, %c0_83, %c24], %22 {strides = array<i32>} : memref<2x16x16x36xf32, #tpu.memory_space<vmem>>, vector<2x16x16x4xf32>,
    %c0_84 = arith.constant 0 : index
    %c2_85 = arith.constant 2 : index
    %c1_86 = arith.constant 1 : index
    %c0_87 = arith.constant 0 : index
    %24 = vector.load %arg5[%c0_84, %c2_85, %c1_86, %c0_87] : memref<2x18x18x4xf32, #tpu.memory_space<vmem>>, vector<2x16x16x4xf32>
    %c0_88 = arith.constant 0 : index
    %c0_89 = arith.constant 0 : index
    %c0_90 = arith.constant 0 : index
    %c28 = arith.constant 28 : index
    %25 = vector.load %arg6[%c0_88, %c0_89, %c0_90, %c28] : memref<2x16x16x36xf32, #tpu.memory_space<vmem>>, vector<2x16x16x4xf32>
    tpu.vector_store %arg6[%c0_88, %c0_89, %c0_90, %c28], %24 {strides = array<i32>} : memref<2x16x16x36xf32, #tpu.memory_space<vmem>>, vector<2x16x16x4xf32>,
    %c0_91 = arith.constant 0 : index
    %c2_92 = arith.constant 2 : index
    %c2_93 = arith.constant 2 : index
    %c0_94 = arith.constant 0 : index
    %26 = vector.load %arg5[%c0_91, %c2_92, %c2_93, %c0_94] : memref<2x18x18x4xf32, #tpu.memory_space<vmem>>, vector<2x16x16x4xf32>
    %c0_95 = arith.constant 0 : index
    %c0_96 = arith.constant 0 : index
    %c0_97 = arith.constant 0 : index
    %c32 = arith.constant 32 : index
    %27 = vector.load %arg6[%c0_95, %c0_96, %c0_97, %c32] : memref<2x16x16x36xf32, #tpu.memory_space<vmem>>, vector<2x16x16x4xf32>
    tpu.vector_store %arg6[%c0_95, %c0_96, %c0_97, %c32], %26 {strides = array<i32>} : memref<2x16x16x36xf32, #tpu.memory_space<vmem>>, vector<2x16x16x4xf32>,
    %c0_98 = arith.constant 0 : index
    %c0_99 = arith.constant 0 : index
    %28 = vector.load %arg3[%c0_98, %c0_99] : memref<1x8xf32, #tpu.memory_space<vmem>>, vector<1x8xf32>
    %29 = vector.shape_cast %28 : vector<1x8xf32> to vector<8xf32>
    %c0_100 = arith.constant 0 : index
    %c0_101 = arith.constant 0 : index
    %c0_102 = arith.constant 0 : index
    %c0_103 = arith.constant 0 : index
    %30 = vector.load %arg6[%c0_100, %c0_101, %c0_102, %c0_103] : memref<2x16x16x36xf32, #tpu.memory_space<vmem>>, vector<1x16x16x36xf32>
    %31 = vector.shape_cast %30 : vector<1x16x16x36xf32> to vector<16x16x36xf32>
    %c0_104 = arith.constant 0 : index
    %c0_105 = arith.constant 0 : index
    %32 = vector.load %arg2[%c0_104, %c0_105] : memref<36x8xf32, #tpu.memory_space<vmem>>, vector<36x8xf32>
    %cst = arith.constant dense<0.000000e+00> : vector<16x16x8xf32>
    %33 = tpu.matmul %31, %32, %cst {dimension_numbers = #tpu.dot_dimension_numbers<[2], [0], [0, 1], [1], [0, 0, 0, 1, 1, 1], [], []>} : vector<16x16x36xf32>, vector<36x8xf32>, vector<16x16x8xf32> -> vector<16x16x8xf32>
    %34 = vector.shape_cast %29 : vector<8xf32> to vector<1x1x8xf32>
    %35 = vector.broadcast %34 : vector<1x1x8xf32> to vector<16x16x8xf32>
    %36 = arith.addf %33, %35 : vector<16x16x8xf32>
    %c0_106 = arith.constant 0 : index
    %c0_107 = arith.constant 0 : index
    %c0_108 = arith.constant 0 : index
    %c0_109 = arith.constant 0 : index
    %37 = vector.load %arg4[%c0_106, %c0_107, %c0_108, %c0_109] : memref<2x16x16x8xf32, #tpu.memory_space<vmem>>, vector<1x16x16x8xf32>
    %38 = vector.shape_cast %37 : vector<1x16x16x8xf32> to vector<16x16x8xf32>
    %39 = vector.shape_cast %36 : vector<16x16x8xf32> to vector<1x16x16x8xf32>
    tpu.vector_store %arg4[%c0_106, %c0_107, %c0_108, %c0_109], %39 {strides = array<i32>} : memref<2x16x16x8xf32, #tpu.memory_space<vmem>>, vector<1x16x16x8xf32>,
    %c1_110 = arith.constant 1 : index
    %c0_111 = arith.constant 0 : index
    %c0_112 = arith.constant 0 : index
    %c0_113 = arith.constant 0 : index
    %40 = vector.load %arg6[%c1_110, %c0_111, %c0_112, %c0_113] : memref<2x16x16x36xf32, #tpu.memory_space<vmem>>, vector<1x16x16x36xf32>
    %41 = vector.shape_cast %40 : vector<1x16x16x36xf32> to vector<16x16x36xf32>
    %c0_114 = arith.constant 0 : index
    %c0_115 = arith.constant 0 : index
    %42 = vector.load %arg2[%c0_114, %c0_115] : memref<36x8xf32, #tpu.memory_space<vmem>>, vector<36x8xf32>
    %cst_116 = arith.constant dense<0.000000e+00> : vector<16x16x8xf32>
    %43 = tpu.matmul %41, %42, %cst_116 {dimension_numbers = #tpu.dot_dimension_numbers<[2], [0], [0, 1], [1], [0, 0, 0, 1, 1, 1], [], []>} : vector<16x16x36xf32>, vector<36x8xf32>, vector<16x16x8xf32> -> vector<16x16x8xf32>
    %44 = vector.shape_cast %29 : vector<8xf32> to vector<1x1x8xf32>
    %45 = vector.broadcast %44 : vector<1x1x8xf32> to vector<16x16x8xf32>
    %46 = arith.addf %43, %45 : vector<16x16x8xf32>
    %c1_117 = arith.constant 1 : index
    %c0_118 = arith.constant 0 : index
    %c0_119 = arith.constant 0 : index
    %c0_120 = arith.constant 0 : index
    %47 = vector.load %arg4[%c1_117, %c0_118, %c0_119, %c0_120] : memref<2x16x16x8xf32, #tpu.memory_space<vmem>>, vector<1x16x16x8xf32>
    %48 = vector.shape_cast %47 : vector<1x16x16x8xf32> to vector<16x16x8xf32>
    %49 = vector.shape_cast %46 : vector<16x16x8xf32> to vector<1x16x16x8xf32>
    tpu.vector_store %arg4[%c1_117, %c0_118, %c0_119, %c0_120], %49 {strides = array<i32>} : memref<2x16x16x8xf32, #tpu.memory_space<vmem>>, vector<1x16x16x8xf32>,
    return
  }
  func.func @transform_0(%arg0: i32) -> (i32, i32, i32, i32) {
    %c0_i32 = arith.constant 0 : i32
    %c0_i32_0 = arith.constant 0 : i32
    %c0_i32_1 = arith.constant 0 : i32
    %c0_i32_2 = arith.constant 0 : i32
    return %arg0, %c0_i32, %c0_i32_0, %c0_i32_1 : i32, i32, i32, i32
  }
  func.func @transform_1(%arg0: i32) -> (i32, i32) {
    %c0_i32 = arith.constant 0 : i32
    %c0_i32_0 = arith.constant 0 : i32
    %c0_i32_1 = arith.constant 0 : i32
    return %c0_i32, %c0_i32_0 : i32, i32
  }
  func.func @transform_2(%arg0: i32) -> (i32, i32) {
    %c0_i32 = arith.constant 0 : i32
    %c0_i32_0 = arith.constant 0 : i32
    %c0_i32_1 = arith.constant 0 : i32
    return %c0_i32, %c0_i32_0 : i32, i32
  }
  func.func @transform_3(%arg0: i32) -> (i32, i32, i32, i32) {
    %c0_i32 = arith.constant 0 : i32
    %c0_i32_0 = arith.constant 0 : i32
    %c0_i32_1 = arith.constant 0 : i32
    %c0_i32_2 = arith.constant 0 : i32
    return %arg0, %c0_i32, %c0_i32_0, %c0_i32_1 : i32, i32, i32, i32
  }
}

</mosaic_0001>

<llo_original>
// kernel: tpu_custom_call.1
$region0: #{tpu_custom_call.1}
  #allocation0 [shape = 'u32[]', space=smem, size = 0x4, offset = 0x4, fixed_abs, tag = 'smem constant byte address 0x4 - core index']
  #allocation1 [shape = 'u32[144,128]{1,0:T(1,128)}', space=vmem, size = 0x12000, scoped, tag = 'internal scratch']
  #allocation2 [shape = 'f32[2,18,18,4]{3,2,1,0:T(8,128)}', space=vmem, size = 0x6c000, scoped, tag = 'scratch operand']
  #allocation3 [shape = 'f32[2,16,16,36]{3,2,1,0:T(8,128)}', space=vmem, size = 0x40000, scoped, tag = 'scratch operand']
  %s0 = inlined_call_operand.vmem [shape: f32[2,16,16,4], index: 0, kind: input, shape index: {}]
  %s1 = inlined_call_operand.vmem [shape: f32[36,8], index: 1, kind: input, shape index: {}]
  %s2 = inlined_call_operand.vmem [shape: f32[1,8], index: 2, kind: input, shape index: {}]
  %s3 = inlined_call_operand.vmem [shape: f32[2,16,16,8], index: 3, kind: output, shape index: {}]
  %s4 = sld [smem:[#allocation0]]
  $region22: #{tpu_custom_call.1} parent=0
    _
  %s6 = ssub.s32 1, %s4
  %s7 = scalar_select 0, %s6, %s4
  // Predicated region
  $region2: #{tpu_custom_call.1} parent=0 // pred_check
    _
  $region3: #{tpu_custom_call.1} parent=0 // pred_check_branch
    %9 = sbr.rel (0) target = $region5
  $region4: #{tpu_custom_call.1} parent=0 // pred_region
    _
  $region5: #{tpu_custom_call.1} parent=0 // pred_fallthru
    _
  // Predicated region
  $region6: #{tpu_custom_call.1} parent=0 // pred_check
    _
  $region7: #{tpu_custom_call.1} parent=0 // pred_check_branch
    %11 = sbr.rel (0) target = $region9
  $region8: #{tpu_custom_call.1} parent=0 // pred_region
    _
  $region9: #{tpu_custom_call.1} parent=0 // pred_fallthru
    _
  // Predicated region
  $region10: #{tpu_custom_call.1} parent=0 // pred_check
    _
  $region11: #{tpu_custom_call.1} parent=0 // pred_check_branch
    %13 = sbr.rel (0) target = $region13
  $region12: #{tpu_custom_call.1} parent=0 // pred_region
    _
  $region13: #{tpu_custom_call.1} parent=0 // pred_fallthru
    _
  %v14 = vld [vmem:[%s0] sm:$0xff]
  %v15 = vld [vmem:[%s0 + $0x8] sm:$0xff]
  %v16 = vld [vmem:[%s0 + $0x10] sm:$0xff]
  %v17 = vld [vmem:[%s0 + $0x18] sm:$0xff]
  %v18 = vld [vmem:[%s0 + $0x20] sm:$0xff]
  %v19 = vld [vmem:[%s0 + $0x28] sm:$0xff]
  %v20 = vld [vmem:[%s0 + $0x30] sm:$0xff]
  %v21 = vld [vmem:[%s0 + $0x38] sm:$0xff]
  %v22 = vld [vmem:[%s0 + $0x40] sm:$0xff]
  %v23 = vld [vmem:[%s0 + $0x48] sm:$0xff]
  %v24 = vld [vmem:[%s0 + $0x50] sm:$0xff]
  %v25 = vld [vmem:[%s0 + $0x58] sm:$0xff]
  %v26 = vld [vmem:[%s0 + $0x60] sm:$0xff]
  %v27 = vld [vmem:[%s0 + $0x68] sm:$0xff]
  %v28 = vld [vmem:[%s0 + $0x70] sm:$0xff]
  %v29 = vld [vmem:[%s0 + $0x78] sm:$0xff]
  %v30 = vld [vmem:[%s0 + $0x80] sm:$0xff]
  %v31 = vld [vmem:[%s0 + $0x88] sm:$0xff]
  %v32 = vld [vmem:[%s0 + $0x90] sm:$0xff]
  %v33 = vld [vmem:[%s0 + $0x98] sm:$0xff]
  %v34 = vld [vmem:[%s0 + $0xa0] sm:$0xff]
  %v35 = vld [vmem:[%s0 + $0xa8] sm:$0xff]
  %v36 = vld [vmem:[%s0 + $0xb0] sm:$0xff]
  %v37 = vld [vmem:[%s0 + $0xb8] sm:$0xff]
  %v38 = vld [vmem:[%s0 + $0xc0] sm:$0xff]
  %v39 = vld [vmem:[%s0 + $0xc8] sm:$0xff]
  %v40 = vld [vmem:[%s0 + $0xd0] sm:$0xff]
  %v41 = vld [vmem:[%s0 + $0xd8] sm:$0xff]
  %v42 = vld [vmem:[%s0 + $0xe0] sm:$0xff]
  %v43 = vld [vmem:[%s0 + $0xe8] sm:$0xff]
  %v44 = vld [vmem:[%s0 + $0xf0] sm:$0xff]
  %v45 = vld [vmem:[%s0 + $0xf8] sm:$0xff]
  %v46 = vld [vmem:[%s0 + $0x100] sm:$0xff]
  %v47 = vld [vmem:[%s0 + $0x108] sm:$0xff]
  %v48 = vld [vmem:[%s0 + $0x110] sm:$0xff]
  %v49 = vld [vmem:[%s0 + $0x118] sm:$0xff]
  %v50 = vld [vmem:[%s0 + $0x120] sm:$0xff]
  %v51 = vld [vmem:[%s0 + $0x128] sm:$0xff]
  %v52 = vld [vmem:[%s0 + $0x130] sm:$0xff]
  %v53 = vld [vmem:[%s0 + $0x138] sm:$0xff]
  %v54 = vld [vmem:[%s0 + $0x140] sm:$0xff]
  %v55 = vld [vmem:[%s0 + $0x148] sm:$0xff]
  %v56 = vld [vmem:[%s0 + $0x150] sm:$0xff]
  %v57 = vld [vmem:[%s0 + $0x158] sm:$0xff]
  %v58 = vld [vmem:[%s0 + $0x160] sm:$0xff]
  %v59 = vld [vmem:[%s0 + $0x168] sm:$0xff]
  %v60 = vld [vmem:[%s0 + $0x170] sm:$0xff]
  %v61 = vld [vmem:[%s0 + $0x178] sm:$0xff]
  %v62 = vld [vmem:[%s0 + $0x180] sm:$0xff]
  %v63 = vld [vmem:[%s0 + $0x188] sm:$0xff]
  %v64 = vld [vmem:[%s0 + $0x190] sm:$0xff]
  %v65 = vld [vmem:[%s0 + $0x198] sm:$0xff]
  %v66 = vld [vmem:[%s0 + $0x1a0] sm:$0xff]
  %v67 = vld [vmem:[%s0 + $0x1a8] sm:$0xff]
  %v68 = vld [vmem:[%s0 + $0x1b0] sm:$0xff]
  %v69 = vld [vmem:[%s0 + $0x1b8] sm:$0xff]
  %v70 = vld [vmem:[%s0 + $0x1c0] sm:$0xff]
  %v71 = vld [vmem:[%s0 + $0x1c8] sm:$0xff]
  %v72 = vld [vmem:[%s0 + $0x1d0] sm:$0xff]
  %v73 = vld [vmem:[%s0 + $0x1d8] sm:$0xff]
  %v74 = vld [vmem:[%s0 + $0x1e0] sm:$0xff]
  %v75 = vld [vmem:[%s0 + $0x1e8] sm:$0xff]
  %v76 = vld [vmem:[%s0 + $0x1f0] sm:$0xff]
  %v77 = vld [vmem:[%s0 + $0x1f8] sm:$0xff]
  %s78 = scalar_lea.vmem [#allocation2], 24
  %vm79 = vcmask 31744
  %80 = vst.msk [vmem:[%s78 + $0x1] sm:$0xff] %vm79, %v14
  %81 = vst.msk [vmem:[%s78 + $0x9] sm:$0xff] %vm79, %v15
  %82 = vst.msk [vmem:[%s78 + $0x19] sm:$0xff] %vm79, %v16
  %83 = vst.msk [vmem:[%s78 + $0x21] sm:$0xff] %vm79, %v17
  %84 = vst.msk [vmem:[%s78 + $0x31] sm:$0xff] %vm79, %v18
  %85 = vst.msk [vmem:[%s78 + $0x39] sm:$0xff] %vm79, %v19
  %86 = vst.msk [vmem:[%s78 + $0x49] sm:$0xff] %vm79, %v20
  %87 = vst.msk [vmem:[%s78 + $0x51] sm:$0xff] %vm79, %v21
  %88 = vst.msk [vmem:[%s78 + $0x61] sm:$0xff] %vm79, %v22
  %89 = vst.msk [vmem:[%s78 + $0x69] sm:$0xff] %vm79, %v23
  %90 = vst.msk [vmem:[%s78 + $0x79] sm:$0xff] %vm79, %v24
  %91 = vst.msk [vmem:[%s78 + $0x81] sm:$0xff] %vm79, %v25
  %92 = vst.msk [vmem:[%s78 + $0x91] sm:$0xff] %vm79, %v26
  %93 = vst.msk [vmem:[%s78 + $0x99] sm:$0xff] %vm79, %v27
  %94 = vst.msk [vmem:[%s78 + $0xa9] sm:$0xff] %vm79, %v28
  %95 = vst.msk [vmem:[%s78 + $0xb1] sm:$0xff] %vm79, %v29
  %96 = vst.msk [vmem:[%s78 + $0xc1] sm:$0xff] %vm79, %v30
  %97 = vst.msk [vmem:[%s78 + $0xc9] sm:$0xff] %vm79, %v31
  %98 = vst.msk [vmem:[%s78 + $0xd9] sm:$0xff] %vm79, %v32
  %99 = vst.msk [vmem:[%s78 + $0xe1] sm:$0xff] %vm79, %v33
  %100 = vst.msk [vmem:[%s78 + $0xf1] sm:$0xff] %vm79, %v34
  %101 = vst.msk [vmem:[%s78 + $0xf9] sm:$0xff] %vm79, %v35
  %102 = vst.msk [vmem:[%s78 + $0x109] sm:$0xff] %vm79, %v36
  %103 = vst.msk [vmem:[%s78 + $0x111] sm:$0xff] %vm79, %v37
  %104 = vst.msk [vmem:[%s78 + $0x121] sm:$0xff] %vm79, %v38
  %105 = vst.msk [vmem:[%s78 + $0x129] sm:$0xff] %vm79, %v39
  %106 = vst.msk [vmem:[%s78 + $0x139] sm:$0xff] %vm79, %v40
  %107 = vst.msk [vmem:[%s78 + $0x141] sm:$0xff] %vm79, %v41
  %108 = vst.msk [vmem:[%s78 + $0x151] sm:$0xff] %vm79, %v42
  %109 = vst.msk [vmem:[%s78 + $0x159] sm:$0xff] %vm79, %v43
  %110 = vst.msk [vmem:[%s78 + $0x169] sm:$0xff] %vm79, %v44
  %111 = vst.msk [vmem:[%s78 + $0x171] sm:$0xff] %vm79, %v45
  %112 = vst.msk [vmem:[%s78 + $0x1b1] sm:$0xff] %vm79, %v46
  %113 = vst.msk [vmem:[%s78 + $0x1b9] sm:$0xff] %vm79, %v47
  %114 = vst.msk [vmem:[%s78 + $0x1c9] sm:$0xff] %vm79, %v48
  %115 = vst.msk [vmem:[%s78 + $0x1d1] sm:$0xff] %vm79, %v49
  %116 = vst.msk [vmem:[%s78 + $0x1e1] sm:$0xff] %vm79, %v50
  %117 = vst.msk [vmem:[%s78 + $0x1e9] sm:$0xff] %vm79, %v51
  %118 = vst.msk [vmem:[%s78 + $0x1f9] sm:$0xff] %vm79, %v52
  %119 = vst.msk [vmem:[%s78 + $0x201] sm:$0xff] %vm79, %v53
  %120 = vst.msk [vmem:[%s78 + $0x211] sm:$0xff] %vm79, %v54
  %121 = vst.msk [vmem:[%s78 + $0x219] sm:$0xff] %vm79, %v55
  %122 = vst.msk [vmem:[%s78 + $0x229] sm:$0xff] %vm79, %v56
  %123 = vst.msk [vmem:[%s78 + $0x231] sm:$0xff] %vm79, %v57
  %124 = vst.msk [vmem:[%s78 + $0x241] sm:$0xff] %vm79, %v58
  %125 = vst.msk [vmem:[%s78 + $0x249] sm:$0xff] %vm79, %v59
  %126 = vst.msk [vmem:[%s78 + $0x259] sm:$0xff] %vm79, %v60
  %127 = vst.msk [vmem:[%s78 + $0x261] sm:$0xff] %vm79, %v61
  %128 = vst.msk [vmem:[%s78 + $0x271] sm:$0xff] %vm79, %v62
  %129 = vst.msk [vmem:[%s78 + $0x279] sm:$0xff] %vm79, %v63
  %130 = vst.msk [vmem:[%s78 + $0x289] sm:$0xff] %vm79, %v64
  %131 = vst.msk [vmem:[%s78 + $0x291] sm:$0xff] %vm79, %v65
  %132 = vst.msk [vmem:[%s78 + $0x2a1] sm:$0xff] %vm79, %v66
  %133 = vst.msk [vmem:[%s78 + $0x2a9] sm:$0xff] %vm79, %v67
  %134 = vst.msk [vmem:[%s78 + $0x2b9] sm:$0xff] %vm79, %v68
  %135 = vst.msk [vmem:[%s78 + $0x2c1] sm:$0xff] %vm79, %v69
  %136 = vst.msk [vmem:[%s78 + $0x2d1] sm:$0xff] %vm79, %v70
  %137 = vst.msk [vmem:[%s78 + $0x2d9] sm:$0xff] %vm79, %v71
  %138 = vst.msk [vmem:[%s78 + $0x2e9] sm:$0xff] %vm79, %v72
  %139 = vst.msk [vmem:[%s78 + $0x2f1] sm:$0xff] %vm79, %v73
  %140 = vst.msk [vmem:[%s78 + $0x301] sm:$0xff] %vm79, %v74
  %141 = vst.msk [vmem:[%s78 + $0x309] sm:$0xff] %vm79, %v75
  %142 = vst.msk [vmem:[%s78 + $0x319] sm:$0xff] %vm79, %v76
  %143 = vst.msk [vmem:[%s78 + $0x321] sm:$0xff] %vm79, %v77
  %s144 = scalar_lea.vmem %s0, 16
  %v145 = vld [vmem:[%s144] sm:$0xff]
  %v146 = vld [vmem:[%s144 + $0x8] sm:$0xff]
  %v147 = vld [vmem:[%s144 + $0x100] sm:$0xff]
  %v148 = vld [vmem:[%s144 + $0x108] sm:$0xff]
  %149 = vst.msk [vmem:[#allocation2 + $0x1] sm:$0xff] %vm79, %v145
  %150 = vst.msk [vmem:[#allocation2 + $0x9] sm:$0xff] %vm79, %v146
  %151 = vst.msk [vmem:[#allocation2 + $0x1b1] sm:$0xff] %vm79, %v147
  %152 = vst.msk [vmem:[#allocation2 + $0x1b9] sm:$0xff] %vm79, %v148
  %s153 = scalar_lea.vmem %s0, 224
  %v154 = vld [vmem:[%s153] sm:$0xff]
  %v155 = vld [vmem:[%s153 + $0x8] sm:$0xff]
  %v156 = vld [vmem:[%s153 + $0x100] sm:$0xff]
  %v157 = vld [vmem:[%s153 + $0x108] sm:$0xff]
  %s158 = scalar_lea.vmem [#allocation2], 408
  %159 = vst.msk [vmem:[%s158 + $0x1] sm:$0xff] %vm79, %v154
  %160 = vst.msk [vmem:[%s158 + $0x9] sm:$0xff] %vm79, %v155
  %161 = vst.msk [vmem:[%s158 + $0x1b1] sm:$0xff] %vm79, %v156
  %162 = vst.msk [vmem:[%s158 + $0x1b9] sm:$0xff] %vm79, %v157
  %v163 = vld [vmem:[#allocation2 + $0x2] sm:$0x1]
  %v164 = vld [vmem:[#allocation2 + $0x1a] sm:$0x1]
  %v165 = vld [vmem:[#allocation2 + $0x32] sm:$0x1]
  %v166 = vld [vmem:[#allocation2 + $0x4a] sm:$0x1]
  %v167 = vld [vmem:[#allocation2 + $0x62] sm:$0x1]
  %v168 = vld [vmem:[#allocation2 + $0x7a] sm:$0x1]
  %v169 = vld [vmem:[#allocation2 + $0x92] sm:$0x1]
  %v170 = vld [vmem:[#allocation2 + $0xaa] sm:$0x1]
  %v171 = vld [vmem:[#allocation2 + $0xc2] sm:$0x1]
  %v172 = vld [vmem:[#allocation2 + $0xda] sm:$0x1]
  %v173 = vld [vmem:[#allocation2 + $0xf2] sm:$0x1]
  %v174 = vld [vmem:[#allocation2 + $0x10a] sm:$0x1]
  %v175 = vld [vmem:[#allocation2 + $0x122] sm:$0x1]
  %v176 = vld [vmem:[#allocation2 + $0x13a] sm:$0x1]
  %v177 = vld [vmem:[#allocation2 + $0x152] sm:$0x1]
  %v178 = vld [vmem:[#allocation2 + $0x16a] sm:$0x1]
  %v179 = vld [vmem:[#allocation2 + $0x182] sm:$0x1]
  %v180 = vld [vmem:[#allocation2 + $0x19a] sm:$0x1]
  %v181 = vld [vmem:[#allocation2 + $0x1b2] sm:$0x1]
  %v182 = vld [vmem:[#allocation2 + $0x1ca] sm:$0x1]
  %v183 = vld [vmem:[#allocation2 + $0x1e2] sm:$0x1]
  %v184 = vld [vmem:[#allocation2 + $0x1fa] sm:$0x1]
  %v185 = vld [vmem:[#allocation2 + $0x212] sm:$0x1]
  %v186 = vld [vmem:[#allocation2 + $0x22a] sm:$0x1]
  %v187 = vld [vmem:[#allocation2 + $0x242] sm:$0x1]
  %v188 = vld [vmem:[#allocation2 + $0x25a] sm:$0x1]
  %v189 = vld [vmem:[#allocation2 + $0x272] sm:$0x1]
  %v190 = vld [vmem:[#allocation2 + $0x28a] sm:$0x1]
  %v191 = vld [vmem:[#allocation2 + $0x2a2] sm:$0x1]
  %v192 = vld [vmem:[#allocation2 + $0x2ba] sm:$0x1]
  %v193 = vld [vmem:[#allocation2 + $0x2d2] sm:$0x1]
  %v194 = vld [vmem:[#allocation2 + $0x2ea] sm:$0x1]
  %v195 = vld [vmem:[#allocation2 + $0x302] sm:$0x1]
  %v196 = vld [vmem:[#allocation2 + $0x31a] sm:$0x1]
  %v197 = vld [vmem:[#allocation2 + $0x332] sm:$0x1]
  %v198 = vld [vmem:[#allocation2 + $0x34a] sm:$0x1]
  %vm199 = vcmask 24576
  %200 = vst.msk [vmem:[#allocation2] sm:$0x1] %vm199, %v163
  %201 = vst.msk [vmem:[#allocation2 + $0x18] sm:$0x1] %vm199, %v164
  %202 = vst.msk [vmem:[#allocation2 + $0x30] sm:$0x1] %vm199, %v165
  %203 = vst.msk [vmem:[#allocation2 + $0x48] sm:$0x1] %vm199, %v166
  %204 = vst.msk [vmem:[#allocation2 + $0x60] sm:$0x1] %vm199, %v167
  %205 = vst.msk [vmem:[#allocation2 + $0x78] sm:$0x1] %vm199, %v168
  %206 = vst.msk [vmem:[#allocation2 + $0x90] sm:$0x1] %vm199, %v169
  %207 = vst.msk [vmem:[#allocation2 + $0xa8] sm:$0x1] %vm199, %v170
  %208 = vst.msk [vmem:[#allocation2 + $0xc0] sm:$0x1] %vm199, %v171
  %209 = vst.msk [vmem:[#allocation2 + $0xd8] sm:$0x1] %vm199, %v172
  %210 = vst.msk [vmem:[#allocation2 + $0xf0] sm:$0x1] %vm199, %v173
  %211 = vst.msk [vmem:[#allocation2 + $0x108] sm:$0x1] %vm199, %v174
  %212 = vst.msk [vmem:[#allocation2 + $0x120] sm:$0x1] %vm199, %v175
  %213 = vst.msk [vmem:[#allocation2 + $0x138] sm:$0x1] %vm199, %v176
  %214 = vst.msk [vmem:[#allocation2 + $0x150] sm:$0x1] %vm199, %v177
  %215 = vst.msk [vmem:[#allocation2 + $0x168] sm:$0x1] %vm199, %v178
  %216 = vst.msk [vmem:[#allocation2 + $0x180] sm:$0x1] %vm199, %v179
  %217 = vst.msk [vmem:[#allocation2 + $0x198] sm:$0x1] %vm199, %v180
  %218 = vst.msk [vmem:[#allocation2 + $0x1b0] sm:$0x1] %vm199, %v181
  %219 = vst.msk [vmem:[#allocation2 + $0x1c8] sm:$0x1] %vm199, %v182
  %220 = vst.msk [vmem:[#allocation2 + $0x1e0] sm:$0x1] %vm199, %v183
  %221 = vst.msk [vmem:[#allocation2 + $0x1f8] sm:$0x1] %vm199, %v184
  %222 = vst.msk [vmem:[#allocation2 + $0x210] sm:$0x1] %vm199, %v185
  %223 = vst.msk [vmem:[#allocation2 + $0x228] sm:$0x1] %vm199, %v186
  %224 = vst.msk [vmem:[#allocation2 + $0x240] sm:$0x1] %vm199, %v187
  %225 = vst.msk [vmem:[#allocation2 + $0x258] sm:$0x1] %vm199, %v188
  %226 = vst.msk [vmem:[#allocation2 + $0x270] sm:$0x1] %vm199, %v189
  %227 = vst.msk [vmem:[#allocation2 + $0x288] sm:$0x1] %vm199, %v190
  %228 = vst.msk [vmem:[#allocation2 + $0x2a0] sm:$0x1] %vm199, %v191
  %229 = vst.msk [vmem:[#allocation2 + $0x2b8] sm:$0x1] %vm199, %v192
  %230 = vst.msk [vmem:[#allocation2 + $0x2d0] sm:$0x1] %vm199, %v193
  %231 = vst.msk [vmem:[#allocation2 + $0x2e8] sm:$0x1] %vm199, %v194
  %232 = vst.msk [vmem:[#allocation2 + $0x300] sm:$0x1] %vm199, %v195
  %233 = vst.msk [vmem:[#allocation2 + $0x318] sm:$0x1] %vm199, %v196
  %234 = vst.msk [vmem:[#allocation2 + $0x330] sm:$0x1] %vm199, %v197
  %235 = vst.msk [vmem:[#allocation2 + $0x348] sm:$0x1] %vm199, %v198
  %v236 = vld [vmem:[#allocation2 + $0xf] sm:$0x1]
  %v237 = vld [vmem:[#allocation2 + $0x27] sm:$0x1]
  %v238 = vld [vmem:[#allocation2 + $0x3f] sm:$0x1]
  %v239 = vld [vmem:[#allocation2 + $0x57] sm:$0x1]
  %v240 = vld [vmem:[#allocation2 + $0x6f] sm:$0x1]
  %v241 = vld [vmem:[#allocation2 + $0x87] sm:$0x1]
  %v242 = vld [vmem:[#allocation2 + $0x9f] sm:$0x1]
  %v243 = vld [vmem:[#allocation2 + $0xb7] sm:$0x1]
  %v244 = vld [vmem:[#allocation2 + $0xcf] sm:$0x1]
  %v245 = vld [vmem:[#allocation2 + $0xe7] sm:$0x1]
  %v246 = vld [vmem:[#allocation2 + $0xff] sm:$0x1]
  %v247 = vld [vmem:[#allocation2 + $0x117] sm:$0x1]
  %v248 = vld [vmem:[#allocation2 + $0x12f] sm:$0x1]
  %v249 = vld [vmem:[#allocation2 + $0x147] sm:$0x1]
  %v250 = vld [vmem:[#allocation2 + $0x15f] sm:$0x1]
  %v251 = vld [vmem:[#allocation2 + $0x177] sm:$0x1]
  %v252 = vld [vmem:[#allocation2 + $0x18f] sm:$0x1]
  %v253 = vld [vmem:[#allocation2 + $0x1a7] sm:$0x1]
  %v254 = vld [vmem:[#allocation2 + $0x1bf] sm:$0x1]
  %v255 = vld [vmem:[#allocation2 + $0x1d7] sm:$0x1]
  %v256 = vld [vmem:[#allocation2 + $0x1ef] sm:$0x1]
  %v257 = vld [vmem:[#allocation2 + $0x207] sm:$0x1]
  %v258 = vld [vmem:[#allocation2 + $0x21f] sm:$0x1]
  %v259 = vld [vmem:[#allocation2 + $0x237] sm:$0x1]
  %v260 = vld [vmem:[#allocation2 + $0x24f] sm:$0x1]
  %v261 = vld [vmem:[#allocation2 + $0x267] sm:$0x1]
  %v262 = vld [vmem:[#allocation2 + $0x27f] sm:$0x1]
  %v263 = vld [vmem:[#allocation2 + $0x297] sm:$0x1]
  %v264 = vld [vmem:[#allocation2 + $0x2af] sm:$0x1]
  %v265 = vld [vmem:[#allocation2 + $0x2c7] sm:$0x1]
  %v266 = vld [vmem:[#allocation2 + $0x2df] sm:$0x1]
  %v267 = vld [vmem:[#allocation2 + $0x2f7] sm:$0x1]
  %v268 = vld [vmem:[#allocation2 + $0x30f] sm:$0x1]
  %v269 = vld [vmem:[#allocation2 + $0x327] sm:$0x1]
  %v270 = vld [vmem:[#allocation2 + $0x33f] sm:$0x1]
  %v271 = vld [vmem:[#allocation2 + $0x357] sm:$0x1]
  %272 = vst.msk [vmem:[#allocation2 + $0x11] sm:$0x1] %vm199, %v236
  %273 = vst.msk [vmem:[#allocation2 + $0x29] sm:$0x1] %vm199, %v237
  %274 = vst.msk [vmem:[#allocation2 + $0x41] sm:$0x1] %vm199, %v238
  %275 = vst.msk [vmem:[#allocation2 + $0x59] sm:$0x1] %vm199, %v239
  %276 = vst.msk [vmem:[#allocation2 + $0x71] sm:$0x1] %vm199, %v240
  %277 = vst.msk [vmem:[#allocation2 + $0x89] sm:$0x1] %vm199, %v241
  %278 = vst.msk [vmem:[#allocation2 + $0xa1] sm:$0x1] %vm199, %v242
  %279 = vst.msk [vmem:[#allocation2 + $0xb9] sm:$0x1] %vm199, %v243
  %280 = vst.msk [vmem:[#allocation2 + $0xd1] sm:$0x1] %vm199, %v244
  %281 = vst.msk [vmem:[#allocation2 + $0xe9] sm:$0x1] %vm199, %v245
  %282 = vst.msk [vmem:[#allocation2 + $0x101] sm:$0x1] %vm199, %v246
  %283 = vst.msk [vmem:[#allocation2 + $0x119] sm:$0x1] %vm199, %v247
  %284 = vst.msk [vmem:[#allocation2 + $0x131] sm:$0x1] %vm199, %v248
  %285 = vst.msk [vmem:[#allocation2 + $0x149] sm:$0x1] %vm199, %v249
  %286 = vst.msk [vmem:[#allocation2 + $0x161] sm:$0x1] %vm199, %v250
  %287 = vst.msk [vmem:[#allocation2 + $0x179] sm:$0x1] %vm199, %v251
  %288 = vst.msk [vmem:[#allocation2 + $0x191] sm:$0x1] %vm199, %v252
  %289 = vst.msk [vmem:[#allocation2 + $0x1a9] sm:$0x1] %vm199, %v253
  %290 = vst.msk [vmem:[#allocation2 + $0x1c1] sm:$0x1] %vm199, %v254
  %291 = vst.msk [vmem:[#allocation2 + $0x1d9] sm:$0x1] %vm199, %v255
  %292 = vst.msk [vmem:[#allocation2 + $0x1f1] sm:$0x1] %vm199, %v256
  %293 = vst.msk [vmem:[#allocation2 + $0x209] sm:$0x1] %vm199, %v257
  %294 = vst.msk [vmem:[#allocation2 + $0x221] sm:$0x1] %vm199, %v258
  %295 = vst.msk [vmem:[#allocation2 + $0x239] sm:$0x1] %vm199, %v259
  %296 = vst.msk [vmem:[#allocation2 + $0x251] sm:$0x1] %vm199, %v260
  %297 = vst.msk [vmem:[#allocation2 + $0x269] sm:$0x1] %vm199, %v261
  %298 = vst.msk [vmem:[#allocation2 + $0x281] sm:$0x1] %vm199, %v262
  %299 = vst.msk [vmem:[#allocation2 + $0x299] sm:$0x1] %vm199, %v263
  %300 = vst.msk [vmem:[#allocation2 + $0x2b1] sm:$0x1] %vm199, %v264
  %301 = vst.msk [vmem:[#allocation2 + $0x2c9] sm:$0x1] %vm199, %v265
  %302 = vst.msk [vmem:[#allocation2 + $0x2e1] sm:$0x1] %vm199, %v266
  %303 = vst.msk [vmem:[#allocation2 + $0x2f9] sm:$0x1] %vm199, %v267
  %304 = vst.msk [vmem:[#allocation2 + $0x311] sm:$0x1] %vm199, %v268
  %305 = vst.msk [vmem:[#allocation2 + $0x329] sm:$0x1] %vm199, %v269
  %306 = vst.msk [vmem:[#allocation2 + $0x341] sm:$0x1] %vm199, %v270
  %307 = vst.msk [vmem:[#allocation2 + $0x359] sm:$0x1] %vm199, %v271
  %v308 = vld [vmem:[#allocation2] sm:$0xff]
  %v309 = vld [vmem:[#allocation2 + $0x8] sm:$0xff]
  %v310 = vld [vmem:[#allocation2 + $0x18] sm:$0xff]
  %v311 = vld [vmem:[#allocation2 + $0x20] sm:$0xff]
  %v312 = vld [vmem:[#allocation2 + $0x30] sm:$0xff]
  %v313 = vld [vmem:[#allocation2 + $0x38] sm:$0xff]
  %v314 = vld [vmem:[#allocation2 + $0x48] sm:$0xff]
  %v315 = vld [vmem:[#allocation2 + $0x50] sm:$0xff]
  %v316 = vld [vmem:[#allocation2 + $0x60] sm:$0xff]
  %v317 = vld [vmem:[#allocation2 + $0x68] sm:$0xff]
  %v318 = vld [vmem:[#allocation2 + $0x78] sm:$0xff]
  %v319 = vld [vmem:[#allocation2 + $0x80] sm:$0xff]
  %v320 = vld [vmem:[#allocation2 + $0x90] sm:$0xff]
  %v321 = vld [vmem:[#allocation2 + $0x98] sm:$0xff]
  %v322 = vld [vmem:[#allocation2 + $0xa8] sm:$0xff]
  %v323 = vld [vmem:[#allocation2 + $0xb0] sm:$0xff]
  %v324 = vld [vmem:[#allocation2 + $0xc0] sm:$0xff]
  %v325 = vld [vmem:[#allocation2 + $0xc8] sm:$0xff]
  %v326 = vld [vmem:[#allocation2 + $0xd8] sm:$0xff]
  %v327 = vld [vmem:[#allocation2 + $0xe0] sm:$0xff]
  %v328 = vld [vmem:[#allocation2 + $0xf0] sm:$0xff]
  %v329 = vld [vmem:[#allocation2 + $0xf8] sm:$0xff]
  %v330 = vld [vmem:[#allocation2 + $0x108] sm:$0xff]
  %v331 = vld [vmem:[#allocation2 + $0x110] sm:$0xff]
  %v332 = vld [vmem:[#allocation2 + $0x120] sm:$0xff]
  %v333 = vld [vmem:[#allocation2 + $0x128] sm:$0xff]
  %v334 = vld [vmem:[#allocation2 + $0x138] sm:$0xff]
  %v335 = vld [vmem:[#allocation2 + $0x140] sm:$0xff]
  %v336 = vld [vmem:[#allocation2 + $0x150] sm:$0xff]
  %v337 = vld [vmem:[#allocation2 + $0x158] sm:$0xff]
  %v338 = vld [vmem:[#allocation2 + $0x168] sm:$0xff]
  %v339 = vld [vmem:[#allocation2 + $0x170] sm:$0xff]
  %v340 = vld [vmem:[#allocation2 + $0x1b0] sm:$0xff]
  %v341 = vld [vmem:[#allocation2 + $0x1b8] sm:$0xff]
  %v342 = vld [vmem:[#allocation2 + $0x1c8] sm:$0xff]
  %v343 = vld [vmem:[#allocation2 + $0x1d0] sm:$0xff]
  %v344 = vld [vmem:[#allocation2 + $0x1e0] sm:$0xff]
  %v345 = vld [vmem:[#allocation2 + $0x1e8] sm:$0xff]
  %v346 = vld [vmem:[#allocation2 + $0x1f8] sm:$0xff]
  %v347 = vld [vmem:[#allocation2 + $0x200] sm:$0xff]
  %v348 = vld [vmem:[#allocation2 + $0x210] sm:$0xff]
  %v349 = vld [vmem:[#allocation2 + $0x218] sm:$0xff]
  %v350 = vld [vmem:[#allocation2 + $0x228] sm:$0xff]
  %v351 = vld [vmem:[#allocation2 + $0x230] sm:$0xff]
  %v352 = vld [vmem:[#allocation2 + $0x240] sm:$0xff]
  %v353 = vld [vmem:[#allocation2 + $0x248] sm:$0xff]
  %v354 = vld [vmem:[#allocation2 + $0x258] sm:$0xff]
  %v355 = vld [vmem:[#allocation2 + $0x260] sm:$0xff]
  %v356 = vld [vmem:[#allocation2 + $0x270] sm:$0xff]
  %v357 = vld [vmem:[#allocation2 + $0x278] sm:$0xff]
  %v358 = vld [vmem:[#allocation2 + $0x288] sm:$0xff]
  %v359 = vld [vmem:[#allocation2 + $0x290] sm:$0xff]
  %v360 = vld [vmem:[#allocation2 + $0x2a0] sm:$0xff]
  %v361 = vld [vmem:[#allocation2 + $0x2a8] sm:$0xff]
  %v362 = vld [vmem:[#allocation2 + $0x2b8] sm:$0xff]
  %v363 = vld [vmem:[#allocation2 + $0x2c0] sm:$0xff]
  %v364 = vld [vmem:[#allocation2 + $0x2d0] sm:$0xff]
  %v365 = vld [vmem:[#allocation2 + $0x2d8] sm:$0xff]
  %v366 = vld [vmem:[#allocation2 + $0x2e8] sm:$0xff]
  %v367 = vld [vmem:[#allocation2 + $0x2f0] sm:$0xff]
  %v368 = vld [vmem:[#allocation2 + $0x300] sm:$0xff]
  %v369 = vld [vmem:[#allocation2 + $0x308] sm:$0xff]
  %v370 = vld [vmem:[#allocation2 + $0x318] sm:$0xff]
  %v371 = vld [vmem:[#allocation2 + $0x320] sm:$0xff]
  %372 = vst.msk [vmem:[#allocation3] sm:$0xff] %vm79, %v308
  %373 = vst.msk [vmem:[#allocation3 + $0x8] sm:$0xff] %vm79, %v309
  %374 = vst.msk [vmem:[#allocation3 + $0x10] sm:$0xff] %vm79, %v310
  %375 = vst.msk [vmem:[#allocation3 + $0x18] sm:$0xff] %vm79, %v311
  %376 = vst.msk [vmem:[#allocation3 + $0x20] sm:$0xff] %vm79, %v312
  %377 = vst.msk [vmem:[#allocation3 + $0x28] sm:$0xff] %vm79, %v313
  %378 = vst.msk [vmem:[#allocation3 + $0x30] sm:$0xff] %vm79, %v314
  %379 = vst.msk [vmem:[#allocation3 + $0x38] sm:$0xff] %vm79, %v315
  %380 = vst.msk [vmem:[#allocation3 + $0x40] sm:$0xff] %vm79, %v316
  %381 = vst.msk [vmem:[#allocation3 + $0x48] sm:$0xff] %vm79, %v317
  %382 = vst.msk [vmem:[#allocation3 + $0x50] sm:$0xff] %vm79, %v318
  %383 = vst.msk [vmem:[#allocation3 + $0x58] sm:$0xff] %vm79, %v319
  %384 = vst.msk [vmem:[#allocation3 + $0x60] sm:$0xff] %vm79, %v320
  %385 = vst.msk [vmem:[#allocation3 + $0x68] sm:$0xff] %vm79, %v321
  %386 = vst.msk [vmem:[#allocation3 + $0x70] sm:$0xff] %vm79, %v322
  %387 = vst.msk [vmem:[#allocation3 + $0x78] sm:$0xff] %vm79, %v323
  %388 = vst.msk [vmem:[#allocation3 + $0x80] sm:$0xff] %vm79, %v324
  %389 = vst.msk [vmem:[#allocation3 + $0x88] sm:$0xff] %vm79, %v325
  %390 = vst.msk [vmem:[#allocation3 + $0x90] sm:$0xff] %vm79, %v326
  %391 = vst.msk [vmem:[#allocation3 + $0x98] sm:$0xff] %vm79, %v327
  %392 = vst.msk [vmem:[#allocation3 + $0xa0] sm:$0xff] %vm79, %v328
  %393 = vst.msk [vmem:[#allocation3 + $0xa8] sm:$0xff] %vm79, %v329
  %394 = vst.msk [vmem:[#allocation3 + $0xb0] sm:$0xff] %vm79, %v330
  %395 = vst.msk [vmem:[#allocation3 + $0xb8] sm:$0xff] %vm79, %v331
  %396 = vst.msk [vmem:[#allocation3 + $0xc0] sm:$0xff] %vm79, %v332
  %397 = vst.msk [vmem:[#allocation3 + $0xc8] sm:$0xff] %vm79, %v333
  %398 = vst.msk [vmem:[#allocation3 + $0xd0] sm:$0xff] %vm79, %v334
  %399 = vst.msk [vmem:[#allocation3 + $0xd8] sm:$0xff] %vm79, %v335
  %400 = vst.msk [vmem:[#allocation3 + $0xe0] sm:$0xff] %vm79, %v336
  %401 = vst.msk [vmem:[#allocation3 + $0xe8] sm:$0xff] %vm79, %v337
  %402 = vst.msk [vmem:[#allocation3 + $0xf0] sm:$0xff] %vm79, %v338
  %403 = vst.msk [vmem:[#allocation3 + $0xf8] sm:$0xff] %vm79, %v339
  %404 = vst.msk [vmem:[#allocation3 + $0x100] sm:$0xff] %vm79, %v340
  %405 = vst.msk [vmem:[#allocation3 + $0x108] sm:$0xff] %vm79, %v341
  %406 = vst.msk [vmem:[#allocation3 + $0x110] sm:$0xff] %vm79, %v342
  %407 = vst.msk [vmem:[#allocation3 + $0x118] sm:$0xff] %vm79, %v343
  %408 = vst.msk [vmem:[#allocation3 + $0x120] sm:$0xff] %vm79, %v344
  %409 = vst.msk [vmem:[#allocation3 + $0x128] sm:$0xff] %vm79, %v345
  %410 = vst.msk [vmem:[#allocation3 + $0x130] sm:$0xff] %vm79, %v346
  %411 = vst.msk [vmem:[#allocation3 + $0x138] sm:$0xff] %vm79, %v347
  %412 = vst.msk [vmem:[#allocation3 + $0x140] sm:$0xff] %vm79, %v348
  %413 = vst.msk [vmem:[#allocation3 + $0x148] sm:$0xff] %vm79, %v349
  %414 = vst.msk [vmem:[#allocation3 + $0x150] sm:$0xff] %vm79, %v350
  %415 = vst.msk [vmem:[#allocation3 + $0x158] sm:$0xff] %vm79, %v351
  %416 = vst.msk [vmem:[#allocation3 + $0x160] sm:$0xff] %vm79, %v352
  %417 = vst.msk [vmem:[#allocation3 + $0x168] sm:$0xff] %vm79, %v353
  %418 = vst.msk [vmem:[#allocation3 + $0x170] sm:$0xff] %vm79, %v354
  %419 = vst.msk [vmem:[#allocation3 + $0x178] sm:$0xff] %vm79, %v355
  %420 = vst.msk [vmem:[#allocation3 + $0x180] sm:$0xff] %vm79, %v356
  %421 = vst.msk [vmem:[#allocation3 + $0x188] sm:$0xff] %vm79, %v357
  %422 = vst.msk [vmem:[#allocation3 + $0x190] sm:$0xff] %vm79, %v358
  %423 = vst.msk [vmem:[#allocation3 + $0x198] sm:$0xff] %vm79, %v359
  %424 = vst.msk [vmem:[#allocation3 + $0x1a0] sm:$0xff] %vm79, %v360
  %425 = vst.msk [vmem:[#allocation3 + $0x1a8] sm:$0xff] %vm79, %v361
  %426 = vst.msk [vmem:[#allocation3 + $0x1b0] sm:$0xff] %vm79, %v362
  %427 = vst.msk [vmem:[#allocation3 + $0x1b8] sm:$0xff] %vm79, %v363
  %428 = vst.msk [vmem:[#allocation3 + $0x1c0] sm:$0xff] %vm79, %v364
  %429 = vst.msk [vmem:[#allocation3 + $0x1c8] sm:$0xff] %vm79, %v365
  %430 = vst.msk [vmem:[#allocation3 + $0x1d0] sm:$0xff] %vm79, %v366
  %431 = vst.msk [vmem:[#allocation3 + $0x1d8] sm:$0xff] %vm79, %v367
  %432 = vst.msk [vmem:[#allocation3 + $0x1e0] sm:$0xff] %vm79, %v368
  %433 = vst.msk [vmem:[#allocation3 + $0x1e8] sm:$0xff] %vm79, %v369
  %434 = vst.msk [vmem:[#allocation3 + $0x1f0] sm:$0xff] %vm79, %v370
  %435 = vst.msk [vmem:[#allocation3 + $0x1f8] sm:$0xff] %vm79, %v371
  %v436 = vld [vmem:[#allocation2 + $0x1] sm:$0xff]
  %v437 = vld [vmem:[#allocation2 + $0x9] sm:$0xff]
  %v438 = vld [vmem:[#allocation2 + $0x19] sm:$0xff]
  %v439 = vld [vmem:[#allocation2 + $0x21] sm:$0xff]
  %v440 = vld [vmem:[#allocation2 + $0x31] sm:$0xff]
  %v441 = vld [vmem:[#allocation2 + $0x39] sm:$0xff]
  %v442 = vld [vmem:[#allocation2 + $0x49] sm:$0xff]
  %v443 = vld [vmem:[#allocation2 + $0x51] sm:$0xff]
  %v444 = vld [vmem:[#allocation2 + $0x61] sm:$0xff]
  %v445 = vld [vmem:[#allocation2 + $0x69] sm:$0xff]
  %v446 = vld [vmem:[#allocation2 + $0x79] sm:$0xff]
  %v447 = vld [vmem:[#allocation2 + $0x81] sm:$0xff]
  %v448 = vld [vmem:[#allocation2 + $0x91] sm:$0xff]
  %v449 = vld [vmem:[#allocation2 + $0x99] sm:$0xff]
  %v450 = vld [vmem:[#allocation2 + $0xa9] sm:$0xff]
  %v451 = vld [vmem:[#allocation2 + $0xb1] sm:$0xff]
  %v452 = vld [vmem:[#allocation2 + $0xc1] sm:$0xff]
  %v453 = vld [vmem:[#allocation2 + $0xc9] sm:$0xff]
  %v454 = vld [vmem:[#allocation2 + $0xd9] sm:$0xff]
  %v455 = vld [vmem:[#allocation2 + $0xe1] sm:$0xff]
  %v456 = vld [vmem:[#allocation2 + $0xf1] sm:$0xff]
  %v457 = vld [vmem:[#allocation2 + $0xf9] sm:$0xff]
  %v458 = vld [vmem:[#allocation2 + $0x109] sm:$0xff]
  %v459 = vld [vmem:[#allocation2 + $0x111] sm:$0xff]
  %v460 = vld [vmem:[#allocation2 + $0x121] sm:$0xff]
  %v461 = vld [vmem:[#allocation2 + $0x129] sm:$0xff]
  %v462 = vld [vmem:[#allocation2 + $0x139] sm:$0xff]
  %v463 = vld [vmem:[#allocation2 + $0x141] sm:$0xff]
  %v464 = vld [vmem:[#allocation2 + $0x151] sm:$0xff]
  %v465 = vld [vmem:[#allocation2 + $0x159] sm:$0xff]
  %v466 = vld [vmem:[#allocation2 + $0x169] sm:$0xff]
  %v467 = vld [vmem:[#allocation2 + $0x171] sm:$0xff]
  %v468 = vld [vmem:[#allocation2 + $0x1b1] sm:$0xff]
  %v469 = vld [vmem:[#allocation2 + $0x1b9] sm:$0xff]
  %v470 = vld [vmem:[#allocation2 + $0x1c9] sm:$0xff]
  %v471 = vld [vmem:[#allocation2 + $0x1d1] sm:$0xff]
  %v472 = vld [vmem:[#allocation2 + $0x1e1] sm:$0xff]
  %v473 = vld [vmem:[#allocation2 + $0x1e9] sm:$0xff]
  %v474 = vld [vmem:[#allocation2 + $0x1f9] sm:$0xff]
  %v475 = vld [vmem:[#allocation2 + $0x201] sm:$0xff]
  %v476 = vld [vmem:[#allocation2 + $0x211] sm:$0xff]
  %v477 = vld [vmem:[#allocation2 + $0x219] sm:$0xff]
  %v478 = vld [vmem:[#allocation2 + $0x229] sm:$0xff]
  %v479 = vld [vmem:[#allocation2 + $0x231] sm:$0xff]
  %v480 = vld [vmem:[#allocation2 + $0x241] sm:$0xff]
  %v481 = vld [vmem:[#allocation2 + $0x249] sm:$0xff]
  %v482 = vld [vmem:[#allocation2 + $0x259] sm:$0xff]
  %v483 = vld [vmem:[#allocation2 + $0x261] sm:$0xff]
  %v484 = vld [vmem:[#allocation2 + $0x271] sm:$0xff]
  %v485 = vld [vmem:[#allocation2 + $0x279] sm:$0xff]
  %v486 = vld [vmem:[#allocation2 + $0x289] sm:$0xff]
  %v487 = vld [vmem:[#allocation2 + $0x291] sm:$0xff]
  %v488 = vld [vmem:[#allocation2 + $0x2a1] sm:$0xff]
  %v489 = vld [vmem:[#allocation2 + $0x2a9] sm:$0xff]
  %v490 = vld [vmem:[#allocation2 + $0x2b9] sm:$0xff]
  %v491 = vld [vmem:[#allocation2 + $0x2c1] sm:$0xff]
  %v492 = vld [vmem:[#allocation2 + $0x2d1] sm:$0xff]
  %v493 = vld [vmem:[#allocation2 + $0x2d9] sm:$0xff]
  %v494 = vld [vmem:[#allocation2 + $0x2e9] sm:$0xff]
  %v495 = vld [vmem:[#allocation2 + $0x2f1] sm:$0xff]
  %v496 = vld [vmem:[#allocation2 + $0x301] sm:$0xff]
  %v497 = vld [vmem:[#allocation2 + $0x309] sm:$0xff]
  %v498 = vld [vmem:[#allocation2 + $0x319] sm:$0xff]
  %v499 = vld [vmem:[#allocation2 + $0x321] sm:$0xff]
  %564 = vrot.lane.b32.xlu0 %v436, 4
  %v565 = vpop.permute.xlu0 %564
  %566 = vrot.lane.b32.xlu0 %v437, 4
  %v567 = vpop.permute.xlu0 %566
  %568 = vrot.lane.b32.xlu0 %v438, 4
  %v569 = vpop.permute.xlu0 %568
  %570 = vrot.lane.b32.xlu0 %v439, 4
  %v571 = vpop.permute.xlu0 %570
  %572 = vrot.lane.b32.xlu0 %v440, 4
  %v573 = vpop.permute.xlu0 %572
  %574 = vrot.lane.b32.xlu0 %v441, 4
  %v575 = vpop.permute.xlu0 %574
  %576 = vrot.lane.b32.xlu0 %v442, 4
  %v577 = vpop.permute.xlu0 %576
  %578 = vrot.lane.b32.xlu0 %v443, 4
  %v579 = vpop.permute.xlu0 %578
  %580 = vrot.lane.b32.xlu0 %v444, 4
  %v581 = vpop.permute.xlu0 %580
  %582 = vrot.lane.b32.xlu0 %v445, 4
  %v583 = vpop.permute.xlu0 %582
  %584 = vrot.lane.b32.xlu0 %v446, 4
  %v585 = vpop.permute.xlu0 %584
  %586 = vrot.lane.b32.xlu0 %v447, 4
  %v587 = vpop.permute.xlu0 %586
  %588 = vrot.lane.b32.xlu0 %v448, 4
  %v589 = vpop.permute.xlu0 %588
  %590 = vrot.lane.b32.xlu0 %v449, 4
  %v591 = vpop.permute.xlu0 %590
  %592 = vrot.lane.b32.xlu0 %v450, 4
  %v593 = vpop.permute.xlu0 %592
  %594 = vrot.lane.b32.xlu0 %v451, 4
  %v595 = vpop.permute.xlu0 %594
  %596 = vrot.lane.b32.xlu0 %v452, 4
  %v597 = vpop.permute.xlu0 %596
  %598 = vrot.lane.b32.xlu0 %v453, 4
  %v599 = vpop.permute.xlu0 %598
  %600 = vrot.lane.b32.xlu0 %v454, 4
  %v601 = vpop.permute.xlu0 %600
  %602 = vrot.lane.b32.xlu0 %v455, 4
  %v603 = vpop.permute.xlu0 %602
  %604 = vrot.lane.b32.xlu0 %v456, 4
  %v605 = vpop.permute.xlu0 %604
  %606 = vrot.lane.b32.xlu0 %v457, 4
  %v607 = vpop.permute.xlu0 %606
  %608 = vrot.lane.b32.xlu0 %v458, 4
  %v609 = vpop.permute.xlu0 %608
  %610 = vrot.lane.b32.xlu0 %v459, 4
  %v611 = vpop.permute.xlu0 %610
  %612 = vrot.lane.b32.xlu0 %v460, 4
  %v613 = vpop.permute.xlu0 %612
  %614 = vrot.lane.b32.xlu0 %v461, 4
  %v615 = vpop.permute.xlu0 %614
  %616 = vrot.lane.b32.xlu0 %v462, 4
  %v617 = vpop.permute.xlu0 %616
  %618 = vrot.lane.b32.xlu0 %v463, 4
  %v619 = vpop.permute.xlu0 %618
  %620 = vrot.lane.b32.xlu0 %v464, 4
  %v621 = vpop.permute.xlu0 %620
  %622 = vrot.lane.b32.xlu0 %v465, 4
  %v623 = vpop.permute.xlu0 %622
  %624 = vrot.lane.b32.xlu0 %v466, 4
  %v625 = vpop.permute.xlu0 %624
  %626 = vrot.lane.b32.xlu0 %v467, 4
  %v627 = vpop.permute.xlu0 %626
  %628 = vrot.lane.b32.xlu0 %v468, 4
  %v629 = vpop.permute.xlu0 %628
  %630 = vrot.lane.b32.xlu0 %v469, 4
  %v631 = vpop.permute.xlu0 %630
  %632 = vrot.lane.b32.xlu0 %v470, 4
  %v633 = vpop.permute.xlu0 %632
  %634 = vrot.lane.b32.xlu0 %v471, 4
  %v635 = vpop.permute.xlu0 %634
  %636 = vrot.lane.b32.xlu0 %v472, 4
  %v637 = vpop.permute.xlu0 %636
  %638 = vrot.lane.b32.xlu0 %v473, 4
  %v639 = vpop.permute.xlu0 %638
  %640 = vrot.lane.b32.xlu0 %v474, 4
  %v641 = vpop.permute.xlu0 %640
  %642 = vrot.lane.b32.xlu0 %v475, 4
  %v643 = vpop.permute.xlu0 %642
  %644 = vrot.lane.b32.xlu0 %v476, 4
  %v645 = vpop.permute.xlu0 %644
  %646 = vrot.lane.b32.xlu0 %v477, 4
  %v647 = vpop.permute.xlu0 %646
  %648 = vrot.lane.b32.xlu0 %v478, 4
  %v649 = vpop.permute.xlu0 %648
  %650 = vrot.lane.b32.xlu0 %v479, 4
  %v651 = vpop.permute.xlu0 %650
  %652 = vrot.lane.b32.xlu0 %v480, 4
  %v653 = vpop.permute.xlu0 %652
  %654 = vrot.lane.b32.xlu0 %v481, 4
  %v655 = vpop.permute.xlu0 %654
  %656 = vrot.lane.b32.xlu0 %v482, 4
  %v657 = vpop.permute.xlu0 %656
  %658 = vrot.lane.b32.xlu0 %v483, 4
  %v659 = vpop.permute.xlu0 %658
  %660 = vrot.lane.b32.xlu0 %v484, 4
  %v661 = vpop.permute.xlu0 %660
  %662 = vrot.lane.b32.xlu0 %v485, 4
  %v663 = vpop.permute.xlu0 %662
  %664 = vrot.lane.b32.xlu0 %v486, 4
  %v665 = vpop.permute.xlu0 %664
  %666 = vrot.lane.b32.xlu0 %v487, 4
  %v667 = vpop.permute.xlu0 %666
  %668 = vrot.lane.b32.xlu0 %v488, 4
  %v669 = vpop.permute.xlu0 %668
  %670 = vrot.lane.b32.xlu0 %v489, 4
  %v671 = vpop.permute.xlu0 %670
  %672 = vrot.lane.b32.xlu0 %v490, 4
  %v673 = vpop.permute.xlu0 %672
  %674 = vrot.lane.b32.xlu0 %v491, 4
  %v675 = vpop.permute.xlu0 %674
  %676 = vrot.lane.b32.xlu0 %v492, 4
  %v677 = vpop.permute.xlu0 %676
  %678 = vrot.lane.b32.xlu0 %v493, 4
  %v679 = vpop.permute.xlu0 %678
  %680 = vrot.lane.b32.xlu0 %v494, 4
  %v681 = vpop.permute.xlu0 %680
  %682 = vrot.lane.b32.xlu0 %v495, 4
  %v683 = vpop.permute.xlu0 %682
  %684 = vrot.lane.b32.xlu0 %v496, 4
  %v685 = vpop.permute.xlu0 %684
  %686 = vrot.lane.b32.xlu0 %v497, 4
  %v687 = vpop.permute.xlu0 %686
  %688 = vrot.lane.b32.xlu0 %v498, 4
  %v689 = vpop.permute.xlu0 %688
  %690 = vrot.lane.b32.xlu0 %v499, 4
  %v691 = vpop.permute.xlu0 %690
  %vm756 = vcmask 64544
  %757 = vst.msk [vmem:[#allocation3] sm:$0xff] %vm756, %v565
  %758 = vst.msk [vmem:[#allocation3 + $0x8] sm:$0xff] %vm756, %v567
  %759 = vst.msk [vmem:[#allocation3 + $0x10] sm:$0xff] %vm756, %v569
  %760 = vst.msk [vmem:[#allocation3 + $0x18] sm:$0xff] %vm756, %v571
  %761 = vst.msk [vmem:[#allocation3 + $0x20] sm:$0xff] %vm756, %v573
  %762 = vst.msk [vmem:[#allocation3 + $0x28] sm:$0xff] %vm756, %v575
  %763 = vst.msk [vmem:[#allocation3 + $0x30] sm:$0xff] %vm756, %v577
  %764 = vst.msk [vmem:[#allocation3 + $0x38] sm:$0xff] %vm756, %v579
  %765 = vst.msk [vmem:[#allocation3 + $0x40] sm:$0xff] %vm756, %v581
  %766 = vst.msk [vmem:[#allocation3 + $0x48] sm:$0xff] %vm756, %v583
  %767 = vst.msk [vmem:[#allocation3 + $0x50] sm:$0xff] %vm756, %v585
  %768 = vst.msk [vmem:[#allocation3 + $0x58] sm:$0xff] %vm756, %v587
  %769 = vst.msk [vmem:[#allocation3 + $0x60] sm:$0xff] %vm756, %v589
  %770 = vst.msk [vmem:[#allocation3 + $0x68] sm:$0xff] %vm756, %v591
  %771 = vst.msk [vmem:[#allocation3 + $0x70] sm:$0xff] %vm756, %v593
  %772 = vst.msk [vmem:[#allocation3 + $0x78] sm:$0xff] %vm756, %v595
  %773 = vst.msk [vmem:[#allocation3 + $0x80] sm:$0xff] %vm756, %v597
  %774 = vst.msk [vmem:[#allocation3 + $0x88] sm:$0xff] %vm756, %v599
  %775 = vst.msk [vmem:[#allocation3 + $0x90] sm:$0xff] %vm756, %v601
  %776 = vst.msk [vmem:[#allocation3 + $0x98] sm:$0xff] %vm756, %v603
  %777 = vst.msk [vmem:[#allocation3 + $0xa0] sm:$0xff] %vm756, %v605
  %778 = vst.msk [vmem:[#allocation3 + $0xa8] sm:$0xff] %vm756, %v607
  %779 = vst.msk [vmem:[#allocation3 + $0xb0] sm:$0xff] %vm756, %v609
  %780 = vst.msk [vmem:[#allocation3 + $0xb8] sm:$0xff] %vm756, %v611
  %781 = vst.msk [vmem:[#allocation3 + $0xc0] sm:$0xff] %vm756, %v613
  %782 = vst.msk [vmem:[#allocation3 + $0xc8] sm:$0xff] %vm756, %v615
  %783 = vst.msk [vmem:[#allocation3 + $0xd0] sm:$0xff] %vm756, %v617
  %784 = vst.msk [vmem:[#allocation3 + $0xd8] sm:$0xff] %vm756, %v619
  %785 = vst.msk [vmem:[#allocation3 + $0xe0] sm:$0xff] %vm756, %v621
  %786 = vst.msk [vmem:[#allocation3 + $0xe8] sm:$0xff] %vm756, %v623
  %787 = vst.msk [vmem:[#allocation3 + $0xf0] sm:$0xff] %vm756, %v625
  %788 = vst.msk [vmem:[#allocation3 + $0xf8] sm:$0xff] %vm756, %v627
  %789 = vst.msk [vmem:[#allocation3 + $0x100] sm:$0xff] %vm756, %v629
  %790 = vst.msk [vmem:[#allocation3 + $0x108] sm:$0xff] %vm756, %v631
  %791 = vst.msk [vmem:[#allocation3 + $0x110] sm:$0xff] %vm756, %v633
  %792 = vst.msk [vmem:[#allocation3 + $0x118] sm:$0xff] %vm756, %v635
  %793 = vst.msk [vmem:[#allocation3 + $0x120] sm:$0xff] %vm756, %v637
  %794 = vst.msk [vmem:[#allocation3 + $0x128] sm:$0xff] %vm756, %v639
  %795 = vst.msk [vmem:[#allocation3 + $0x130] sm:$0xff] %vm756, %v641
  %796 = vst.msk [vmem:[#allocation3 + $0x138] sm:$0xff] %vm756, %v643
  %797 = vst.msk [vmem:[#allocation3 + $0x140] sm:$0xff] %vm756, %v645
  %798 = vst.msk [vmem:[#allocation3 + $0x148] sm:$0xff] %vm756, %v647
  %799 = vst.msk [vmem:[#allocation3 + $0x150] sm:$0xff] %vm756, %v649
  %800 = vst.msk [vmem:[#allocation3 + $0x158] sm:$0xff] %vm756, %v651
  %801 = vst.msk [vmem:[#allocation3 + $0x160] sm:$0xff] %vm756, %v653
  %802 = vst.msk [vmem:[#allocation3 + $0x168] sm:$0xff] %vm756, %v655
  %803 = vst.msk [vmem:[#allocation3 + $0x170] sm:$0xff] %vm756, %v657
  %804 = vst.msk [vmem:[#allocation3 + $0x178] sm:$0xff] %vm756, %v659
  %805 = vst.msk [vmem:[#allocation3 + $0x180] sm:$0xff] %vm756, %v661
  %806 = vst.msk [vmem:[#allocation3 + $0x188] sm:$0xff] %vm756, %v663
  %807 = vst.msk [vmem:[#allocation3 + $0x190] sm:$0xff] %vm756, %v665
  %808 = vst.msk [vmem:[#allocation3 + $0x198] sm:$0xff] %vm756, %v667
  %809 = vst.msk [vmem:[#allocation3 + $0x1a0] sm:$0xff] %vm756, %v669
  %810 = vst.msk [vmem:[#allocation3 + $0x1a8] sm:$0xff] %vm756, %v671
  %811 = vst.msk [vmem:[#allocation3 + $0x1b0] sm:$0xff] %vm756, %v673
  %812 = vst.msk [vmem:[#allocation3 + $0x1b8] sm:$0xff] %vm756, %v675
  %813 = vst.msk [vmem:[#allocation3 + $0x1c0] sm:$0xff] %vm756, %v677
  %814 = vst.msk [vmem:[#allocation3 + $0x1c8] sm:$0xff] %vm756, %v679
  %815 = vst.msk [vmem:[#allocation3 + $0x1d0] sm:$0xff] %vm756, %v681
  %816 = vst.msk [vmem:[#allocation3 + $0x1d8] sm:$0xff] %vm756, %v683
  %817 = vst.msk [vmem:[#allocation3 + $0x1e0] sm:$0xff] %vm756, %v685
  %818 = vst.msk [vmem:[#allocation3 + $0x1e8] sm:$0xff] %vm756, %v687
  %819 = vst.msk [vmem:[#allocation3 + $0x1f0] sm:$0xff] %vm756, %v689
  %820 = vst.msk [vmem:[#allocation3 + $0x1f8] sm:$0xff] %vm756, %v691
  %v821 = vld [vmem:[#allocation2 + $0x2] sm:$0xff]
  %v822 = vld [vmem:[#allocation2 + $0xa] sm:$0xff]
  %v823 = vld [vmem:[#allocation2 + $0x1a] sm:$0xff]
  %v824 = vld [vmem:[#allocation2 + $0x22] sm:$0xff]
  %v825 = vld [vmem:[#allocation2 + $0x32] sm:$0xff]
  %v826 = vld [vmem:[#allocation2 + $0x3a] sm:$0xff]
  %v827 = vld [vmem:[#allocation2 + $0x4a] sm:$0xff]
  %v828 = vld [vmem:[#allocation2 + $0x52] sm:$0xff]
  %v829 = vld [vmem:[#allocation2 + $0x62] sm:$0xff]
  %v830 = vld [vmem:[#allocation2 + $0x6a] sm:$0xff]
  %v831 = vld [vmem:[#allocation2 + $0x7a] sm:$0xff]
  %v832 = vld [vmem:[#allocation2 + $0x82] sm:$0xff]
  %v833 = vld [vmem:[#allocation2 + $0x92] sm:$0xff]
  %v834 = vld [vmem:[#allocation2 + $0x9a] sm:$0xff]
  %v835 = vld [vmem:[#allocation2 + $0xaa] sm:$0xff]
  %v836 = vld [vmem:[#allocation2 + $0xb2] sm:$0xff]
  %v837 = vld [vmem:[#allocation2 + $0xc2] sm:$0xff]
  %v838 = vld [vmem:[#allocation2 + $0xca] sm:$0xff]
  %v839 = vld [vmem:[#allocation2 + $0xda] sm:$0xff]
  %v840 = vld [vmem:[#allocation2 + $0xe2] sm:$0xff]
  %v841 = vld [vmem:[#allocation2 + $0xf2] sm:$0xff]
  %v842 = vld [vmem:[#allocation2 + $0xfa] sm:$0xff]
  %v843 = vld [vmem:[#allocation2 + $0x10a] sm:$0xff]
  %v844 = vld [vmem:[#allocation2 + $0x112] sm:$0xff]
  %v845 = vld [vmem:[#allocation2 + $0x122] sm:$0xff]
  %v846 = vld [vmem:[#allocation2 + $0x12a] sm:$0xff]
  %v847 = vld [vmem:[#allocation2 + $0x13a] sm:$0xff]
  %v848 = vld [vmem:[#allocation2 + $0x142] sm:$0xff]
  %v849 = vld [vmem:[#allocation2 + $0x152] sm:$0xff]
  %v850 = vld [vmem:[#allocation2 + $0x15a] sm:$0xff]
  %v851 = vld [vmem:[#allocation2 + $0x16a] sm:$0xff]
  %v852 = vld [vmem:[#allocation2 + $0x172] sm:$0xff]
  %v853 = vld [vmem:[#allocation2 + $0x1b2] sm:$0xff]
  %v854 = vld [vmem:[#allocation2 + $0x1ba] sm:$0xff]
  %v855 = vld [vmem:[#allocation2 + $0x1ca] sm:$0xff]
  %v856 = vld [vmem:[#allocation2 + $0x1d2] sm:$0xff]
  %v857 = vld [vmem:[#allocation2 + $0x1e2] sm:$0xff]
  %v858 = vld [vmem:[#allocation2 + $0x1ea] sm:$0xff]
  %v859 = vld [vmem:[#allocation2 + $0x1fa] sm:$0xff]
  %v860 = vld [vmem:[#allocation2 + $0x202] sm:$0xff]
  %v861 = vld [vmem:[#allocation2 + $0x212] sm:$0xff]
  %v862 = vld [vmem:[#allocation2 + $0x21a] sm:$0xff]
  %v863 = vld [vmem:[#allocation2 + $0x22a] sm:$0xff]
  %v864 = vld [vmem:[#allocation2 + $0x232] sm:$0xff]
  %v865 = vld [vmem:[#allocation2 + $0x242] sm:$0xff]
  %v866 = vld [vmem:[#allocation2 + $0x24a] sm:$0xff]
  %v867 = vld [vmem:[#allocation2 + $0x25a] sm:$0xff]
  %v868 = vld [vmem:[#allocation2 + $0x262] sm:$0xff]
  %v869 = vld [vmem:[#allocation2 + $0x272] sm:$0xff]
  %v870 = vld [vmem:[#allocation2 + $0x27a] sm:$0xff]
  %v871 = vld [vmem:[#allocation2 + $0x28a] sm:$0xff]
  %v872 = vld [vmem:[#allocation2 + $0x292] sm:$0xff]
  %v873 = vld [vmem:[#allocation2 + $0x2a2] sm:$0xff]
  %v874 = vld [vmem:[#allocation2 + $0x2aa] sm:$0xff]
  %v875 = vld [vmem:[#allocation2 + $0x2ba] sm:$0xff]
  %v876 = vld [vmem:[#allocation2 + $0x2c2] sm:$0xff]
  %v877 = vld [vmem:[#allocation2 + $0x2d2] sm:$0xff]
  %v878 = vld [vmem:[#allocation2 + $0x2da] sm:$0xff]
  %v879 = vld [vmem:[#allocation2 + $0x2ea] sm:$0xff]
  %v880 = vld [vmem:[#allocation2 + $0x2f2] sm:$0xff]
  %v881 = vld [vmem:[#allocation2 + $0x302] sm:$0xff]
  %v882 = vld [vmem:[#allocation2 + $0x30a] sm:$0xff]
  %v883 = vld [vmem:[#allocation2 + $0x31a] sm:$0xff]
  %v884 = vld [vmem:[#allocation2 + $0x322] sm:$0xff]
  %949 = vrot.lane.b32.xlu0 %v821, 8
  %v950 = vpop.permute.xlu0 %949
  %951 = vrot.lane.b32.xlu0 %v822, 8
  %v952 = vpop.permute.xlu0 %951
  %953 = vrot.lane.b32.xlu0 %v823, 8
  %v954 = vpop.permute.xlu0 %953
  %955 = vrot.lane.b32.xlu0 %v824, 8
  %v956 = vpop.permute.xlu0 %955
  %957 = vrot.lane.b32.xlu0 %v825, 8
  %v958 = vpop.permute.xlu0 %957
  %959 = vrot.lane.b32.xlu0 %v826, 8
  %v960 = vpop.permute.xlu0 %959
  %961 = vrot.lane.b32.xlu0 %v827, 8
  %v962 = vpop.permute.xlu0 %961
  %963 = vrot.lane.b32.xlu0 %v828, 8
  %v964 = vpop.permute.xlu0 %963
  %965 = vrot.lane.b32.xlu0 %v829, 8
  %v966 = vpop.permute.xlu0 %965
  %967 = vrot.lane.b32.xlu0 %v830, 8
  %v968 = vpop.permute.xlu0 %967
  %969 = vrot.lane.b32.xlu0 %v831, 8
  %v970 = vpop.permute.xlu0 %969
  %971 = vrot.lane.b32.xlu0 %v832, 8
  %v972 = vpop.permute.xlu0 %971
  %973 = vrot.lane.b32.xlu0 %v833, 8
  %v974 = vpop.permute.xlu0 %973
  %975 = vrot.lane.b32.xlu0 %v834, 8
  %v976 = vpop.permute.xlu0 %975
  %977 = vrot.lane.b32.xlu0 %v835, 8
  %v978 = vpop.permute.xlu0 %977
  %979 = vrot.lane.b32.xlu0 %v836, 8
  %v980 = vpop.permute.xlu0 %979
  %981 = vrot.lane.b32.xlu0 %v837, 8
  %v982 = vpop.permute.xlu0 %981
  %983 = vrot.lane.b32.xlu0 %v838, 8
  %v984 = vpop.permute.xlu0 %983
  %985 = vrot.lane.b32.xlu0 %v839, 8
  %v986 = vpop.permute.xlu0 %985
  %987 = vrot.lane.b32.xlu0 %v840, 8
  %v988 = vpop.permute.xlu0 %987
  %989 = vrot.lane.b32.xlu0 %v841, 8
  %v990 = vpop.permute.xlu0 %989
  %991 = vrot.lane.b32.xlu0 %v842, 8
  %v992 = vpop.permute.xlu0 %991
  %993 = vrot.lane.b32.xlu0 %v843, 8
  %v994 = vpop.permute.xlu0 %993
  %995 = vrot.lane.b32.xlu0 %v844, 8
  %v996 = vpop.permute.xlu0 %995
  %997 = vrot.lane.b32.xlu0 %v845, 8
  %v998 = vpop.permute.xlu0 %997
  %999 = vrot.lane.b32.xlu0 %v846, 8
  %v1000 = vpop.permute.xlu0 %999
  %1001 = vrot.lane.b32.xlu0 %v847, 8
  %v1002 = vpop.permute.xlu0 %1001
  %1003 = vrot.lane.b32.xlu0 %v848, 8
  %v1004 = vpop.permute.xlu0 %1003
  %1005 = vrot.lane.b32.xlu0 %v849, 8
  %v1006 = vpop.permute.xlu0 %1005
  %1007 = vrot.lane.b32.xlu0 %v850, 8
  %v1008 = vpop.permute.xlu0 %1007
  %1009 = vrot.lane.b32.xlu0 %v851, 8
  %v1010 = vpop.permute.xlu0 %1009
  %1011 = vrot.lane.b32.xlu0 %v852, 8
  %v1012 = vpop.permute.xlu0 %1011
  %1013 = vrot.lane.b32.xlu0 %v853, 8
  %v1014 = vpop.permute.xlu0 %1013
  %1015 = vrot.lane.b32.xlu0 %v854, 8
  %v1016 = vpop.permute.xlu0 %1015
  %1017 = vrot.lane.b32.xlu0 %v855, 8
  %v1018 = vpop.permute.xlu0 %1017
  %1019 = vrot.lane.b32.xlu0 %v856, 8
  %v1020 = vpop.permute.xlu0 %1019
  %1021 = vrot.lane.b32.xlu0 %v857, 8
  %v1022 = vpop.permute.xlu0 %1021
  %1023 = vrot.lane.b32.xlu0 %v858, 8
  %v1024 = vpop.permute.xlu0 %1023
  %1025 = vrot.lane.b32.xlu0 %v859, 8
  %v1026 = vpop.permute.xlu0 %1025
  %1027 = vrot.lane.b32.xlu0 %v860, 8
  %v1028 = vpop.permute.xlu0 %1027
  %1029 = vrot.lane.b32.xlu0 %v861, 8
  %v1030 = vpop.permute.xlu0 %1029
  %1031 = vrot.lane.b32.xlu0 %v862, 8
  %v1032 = vpop.permute.xlu0 %1031
  %1033 = vrot.lane.b32.xlu0 %v863, 8
  %v1034 = vpop.permute.xlu0 %1033
  %1035 = vrot.lane.b32.xlu0 %v864, 8
  %v1036 = vpop.permute.xlu0 %1035
  %1037 = vrot.lane.b32.xlu0 %v865, 8
  %v1038 = vpop.permute.xlu0 %1037
  %1039 = vrot.lane.b32.xlu0 %v866, 8
  %v1040 = vpop.permute.xlu0 %1039
  %1041 = vrot.lane.b32.xlu0 %v867, 8
  %v1042 = vpop.permute.xlu0 %1041
  %1043 = vrot.lane.b32.xlu0 %v868, 8
  %v1044 = vpop.permute.xlu0 %1043
  %1045 = vrot.lane.b32.xlu0 %v869, 8
  %v1046 = vpop.permute.xlu0 %1045
  %1047 = vrot.lane.b32.xlu0 %v870, 8
  %v1048 = vpop.permute.xlu0 %1047
  %1049 = vrot.lane.b32.xlu0 %v871, 8
  %v1050 = vpop.permute.xlu0 %1049
  %1051 = vrot.lane.b32.xlu0 %v872, 8
  %v1052 = vpop.permute.xlu0 %1051
  %1053 = vrot.lane.b32.xlu0 %v873, 8
  %v1054 = vpop.permute.xlu0 %1053
  %1055 = vrot.lane.b32.xlu0 %v874, 8
  %v1056 = vpop.permute.xlu0 %1055
  %1057 = vrot.lane.b32.xlu0 %v875, 8
  %v1058 = vpop.permute.xlu0 %1057
  %1059 = vrot.lane.b32.xlu0 %v876, 8
  %v1060 = vpop.permute.xlu0 %1059
  %1061 = vrot.lane.b32.xlu0 %v877, 8
  %v1062 = vpop.permute.xlu0 %1061
  %1063 = vrot.lane.b32.xlu0 %v878, 8
  %v1064 = vpop.permute.xlu0 %1063
  %1065 = vrot.lane.b32.xlu0 %v879, 8
  %v1066 = vpop.permute.xlu0 %1065
  %1067 = vrot.lane.b32.xlu0 %v880, 8
  %v1068 = vpop.permute.xlu0 %1067
  %1069 = vrot.lane.b32.xlu0 %v881, 8
  %v1070 = vpop.permute.xlu0 %1069
  %1071 = vrot.lane.b32.xlu0 %v882, 8
  %v1072 = vpop.permute.xlu0 %1071
  %1073 = vrot.lane.b32.xlu0 %v883, 8
  %v1074 = vpop.permute.xlu0 %1073
  %1075 = vrot.lane.b32.xlu0 %v884, 8
  %v1076 = vpop.permute.xlu0 %1075
  %vm1141 = vcmask 97344
  %1142 = vst.msk [vmem:[#allocation3] sm:$0xff] %vm1141, %v950
  %1143 = vst.msk [vmem:[#allocation3 + $0x8] sm:$0xff] %vm1141, %v952
  %1144 = vst.msk [vmem:[#allocation3 + $0x10] sm:$0xff] %vm1141, %v954
  %1145 = vst.msk [vmem:[#allocation3 + $0x18] sm:$0xff] %vm1141, %v956
  %1146 = vst.msk [vmem:[#allocation3 + $0x20] sm:$0xff] %vm1141, %v958
  %1147 = vst.msk [vmem:[#allocation3 + $0x28] sm:$0xff] %vm1141, %v960
  %1148 = vst.msk [vmem:[#allocation3 + $0x30] sm:$0xff] %vm1141, %v962
  %1149 = vst.msk [vmem:[#allocation3 + $0x38] sm:$0xff] %vm1141, %v964
  %1150 = vst.msk [vmem:[#allocation3 + $0x40] sm:$0xff] %vm1141, %v966
  %1151 = vst.msk [vmem:[#allocation3 + $0x48] sm:$0xff] %vm1141, %v968
  %1152 = vst.msk [vmem:[#allocation3 + $0x50] sm:$0xff] %vm1141, %v970
  %1153 = vst.msk [vmem:[#allocation3 + $0x58] sm:$0xff] %vm1141, %v972
  %1154 = vst.msk [vmem:[#allocation3 + $0x60] sm:$0xff] %vm1141, %v974
  %1155 = vst.msk [vmem:[#allocation3 + $0x68] sm:$0xff] %vm1141, %v976
  %1156 = vst.msk [vmem:[#allocation3 + $0x70] sm:$0xff] %vm1141, %v978
  %1157 = vst.msk [vmem:[#allocation3 + $0x78] sm:$0xff] %vm1141, %v980
  %1158 = vst.msk [vmem:[#allocation3 + $0x80] sm:$0xff] %vm1141, %v982
  %1159 = vst.msk [vmem:[#allocation3 + $0x88] sm:$0xff] %vm1141, %v984
  %1160 = vst.msk [vmem:[#allocation3 + $0x90] sm:$0xff] %vm1141, %v986
  %1161 = vst.msk [vmem:[#allocation3 + $0x98] sm:$0xff] %vm1141, %v988
  %1162 = vst.msk [vmem:[#allocation3 + $0xa0] sm:$0xff] %vm1141, %v990
  %1163 = vst.msk [vmem:[#allocation3 + $0xa8] sm:$0xff] %vm1141, %v992
  %1164 = vst.msk [vmem:[#allocation3 + $0xb0] sm:$0xff] %vm1141, %v994
  %1165 = vst.msk [vmem:[#allocation3 + $0xb8] sm:$0xff] %vm1141, %v996
  %1166 = vst.msk [vmem:[#allocation3 + $0xc0] sm:$0xff] %vm1141, %v998
  %1167 = vst.msk [vmem:[#allocation3 + $0xc8] sm:$0xff] %vm1141, %v1000
  %1168 = vst.msk [vmem:[#allocation3 + $0xd0] sm:$0xff] %vm1141, %v1002
  %1169 = vst.msk [vmem:[#allocation3 + $0xd8] sm:$0xff] %vm1141, %v1004
  %1170 = vst.msk [vmem:[#allocation3 + $0xe0] sm:$0xff] %vm1141, %v1006
  %1171 = vst.msk [vmem:[#allocation3 + $0xe8] sm:$0xff] %vm1141, %v1008
  %1172 = vst.msk [vmem:[#allocation3 + $0xf0] sm:$0xff] %vm1141, %v1010
  %1173 = vst.msk [vmem:[#allocation3 + $0xf8] sm:$0xff] %vm1141, %v1012
  %1174 = vst.msk [vmem:[#allocation3 + $0x100] sm:$0xff] %vm1141, %v1014
  %1175 = vst.msk [vmem:[#allocation3 + $0x108] sm:$0xff] %vm1141, %v1016
  %1176 = vst.msk [vmem:[#allocation3 + $0x110] sm:$0xff] %vm1141, %v1018
  %1177 = vst.msk [vmem:[#allocation3 + $0x118] sm:$0xff] %vm1141, %v1020
  %1178 = vst.msk [vmem:[#allocation3 + $0x120] sm:$0xff] %vm1141, %v1022
  %1179 = vst.msk [vmem:[#allocation3 + $0x128] sm:$0xff] %vm1141, %v1024
  %1180 = vst.msk [vmem:[#allocation3 + $0x130] sm:$0xff] %vm1141, %v1026
  %1181 = vst.msk [vmem:[#allocation3 + $0x138] sm:$0xff] %vm1141, %v1028
  %1182 = vst.msk [vmem:[#allocation3 + $0x140] sm:$0xff] %vm1141, %v1030
  %1183 = vst.msk [vmem:[#allocation3 + $0x148] sm:$0xff] %vm1141, %v1032
  %1184 = vst.msk [vmem:[#allocation3 + $0x150] sm:$0xff] %vm1141, %v1034
  %1185 = vst.msk [vmem:[#allocation3 + $0x158] sm:$0xff] %vm1141, %v1036
  %1186 = vst.msk [vmem:[#allocation3 + $0x160] sm:$0xff] %vm1141, %v1038
  %1187 = vst.msk [vmem:[#allocation3 + $0x168] sm:$0xff] %vm1141, %v1040
  %1188 = vst.msk [vmem:[#allocation3 + $0x170] sm:$0xff] %vm1141, %v1042
  %1189 = vst.msk [vmem:[#allocation3 + $0x178] sm:$0xff] %vm1141, %v1044
  %1190 = vst.msk [vmem:[#allocation3 + $0x180] sm:$0xff] %vm1141, %v1046
  %1191 = vst.msk [vmem:[#allocation3 + $0x188] sm:$0xff] %vm1141, %v1048
  %1192 = vst.msk [vmem:[#allocation3 + $0x190] sm:$0xff] %vm1141, %v1050
  %1193 = vst.msk [vmem:[#allocation3 + $0x198] sm:$0xff] %vm1141, %v1052
  %1194 = vst.msk [vmem:[#allocation3 + $0x1a0] sm:$0xff] %vm1141, %v1054
  %1195 = vst.msk [vmem:[#allocation3 + $0x1a8] sm:$0xff] %vm1141, %v1056
  %1196 = vst.msk [vmem:[#allocation3 + $0x1b0] sm:$0xff] %vm1141, %v1058
  %1197 = vst.msk [vmem:[#allocation3 + $0x1b8] sm:$0xff] %vm1141, %v1060
  %1198 = vst.msk [vmem:[#allocation3 + $0x1c0] sm:$0xff] %vm1141, %v1062
  %1199 = vst.msk [vmem:[#allocation3 + $0x1c8] sm:$0xff] %vm1141, %v1064
  %1200 = vst.msk [vmem:[#allocation3 + $0x1d0] sm:$0xff] %vm1141, %v1066
  %1201 = vst.msk [vmem:[#allocation3 + $0x1d8] sm:$0xff] %vm1141, %v1068
  %1202 = vst.msk [vmem:[#allocation3 + $0x1e0] sm:$0xff] %vm1141, %v1070
  %1203 = vst.msk [vmem:[#allocation3 + $0x1e8] sm:$0xff] %vm1141, %v1072
  %1204 = vst.msk [vmem:[#allocation3 + $0x1f0] sm:$0xff] %vm1141, %v1074
  %1205 = vst.msk [vmem:[#allocation3 + $0x1f8] sm:$0xff] %vm1141, %v1076
  %v1206 = vld [vmem:[%s78] sm:$0xff]
  %v1207 = vld [vmem:[%s78 + $0x8] sm:$0xff]
  %v1208 = vld [vmem:[%s78 + $0x18] sm:$0xff]
  %v1209 = vld [vmem:[%s78 + $0x20] sm:$0xff]
  %v1210 = vld [vmem:[%s78 + $0x30] sm:$0xff]
  %v1211 = vld [vmem:[%s78 + $0x38] sm:$0xff]
  %v1212 = vld [vmem:[%s78 + $0x48] sm:$0xff]
  %v1213 = vld [vmem:[%s78 + $0x50] sm:$0xff]
  %v1214 = vld [vmem:[%s78 + $0x60] sm:$0xff]
  %v1215 = vld [vmem:[%s78 + $0x68] sm:$0xff]
  %v1216 = vld [vmem:[%s78 + $0x78] sm:$0xff]
  %v1217 = vld [vmem:[%s78 + $0x80] sm:$0xff]
  %v1218 = vld [vmem:[%s78 + $0x90] sm:$0xff]
  %v1219 = vld [vmem:[%s78 + $0x98] sm:$0xff]
  %v1220 = vld [vmem:[%s78 + $0xa8] sm:$0xff]
  %v1221 = vld [vmem:[%s78 + $0xb0] sm:$0xff]
  %v1222 = vld [vmem:[%s78 + $0xc0] sm:$0xff]
  %v1223 = vld [vmem:[%s78 + $0xc8] sm:$0xff]
  %v1224 = vld [vmem:[%s78 + $0xd8] sm:$0xff]
  %v1225 = vld [vmem:[%s78 + $0xe0] sm:$0xff]
  %v1226 = vld [vmem:[%s78 + $0xf0] sm:$0xff]
  %v1227 = vld [vmem:[%s78 + $0xf8] sm:$0xff]
  %v1228 = vld [vmem:[%s78 + $0x108] sm:$0xff]
  %v1229 = vld [vmem:[%s78 + $0x110] sm:$0xff]
  %v1230 = vld [vmem:[%s78 + $0x120] sm:$0xff]
  %v1231 = vld [vmem:[%s78 + $0x128] sm:$0xff]
  %v1232 = vld [vmem:[%s78 + $0x138] sm:$0xff]
  %v1233 = vld [vmem:[%s78 + $0x140] sm:$0xff]
  %v1234 = vld [vmem:[%s78 + $0x150] sm:$0xff]
  %v1235 = vld [vmem:[%s78 + $0x158] sm:$0xff]
  %v1236 = vld [vmem:[%s78 + $0x168] sm:$0xff]
  %v1237 = vld [vmem:[%s78 + $0x170] sm:$0xff]
  %v1238 = vld [vmem:[%s78 + $0x1b0] sm:$0xff]
  %v1239 = vld [vmem:[%s78 + $0x1b8] sm:$0xff]
  %v1240 = vld [vmem:[%s78 + $0x1c8] sm:$0xff]
  %v1241 = vld [vmem:[%s78 + $0x1d0] sm:$0xff]
  %v1242 = vld [vmem:[%s78 + $0x1e0] sm:$0xff]
  %v1243 = vld [vmem:[%s78 + $0x1e8] sm:$0xff]
  %v1244 = vld [vmem:[%s78 + $0x1f8] sm:$0xff]
  %v1245 = vld [vmem:[%s78 + $0x200] sm:$0xff]
  %v1246 = vld [vmem:[%s78 + $0x210] sm:$0xff]
  %v1247 = vld [vmem:[%s78 + $0x218] sm:$0xff]
  %v1248 = vld [vmem:[%s78 + $0x228] sm:$0xff]
  %v1249 = vld [vmem:[%s78 + $0x230] sm:$0xff]
  %v1250 = vld [vmem:[%s78 + $0x240] sm:$0xff]
  %v1251 = vld [vmem:[%s78 + $0x248] sm:$0xff]
  %v1252 = vld [vmem:[%s78 + $0x258] sm:$0xff]
  %v1253 = vld [vmem:[%s78 + $0x260] sm:$0xff]
  %v1254 = vld [vmem:[%s78 + $0x270] sm:$0xff]
  %v1255 = vld [vmem:[%s78 + $0x278] sm:$0xff]
  %v1256 = vld [vmem:[%s78 + $0x288] sm:$0xff]
  %v1257 = vld [vmem:[%s78 + $0x290] sm:$0xff]
  %v1258 = vld [vmem:[%s78 + $0x2a0] sm:$0xff]
  %v1259 = vld [vmem:[%s78 + $0x2a8] sm:$0xff]
  %v1260 = vld [vmem:[%s78 + $0x2b8] sm:$0xff]
  %v1261 = vld [vmem:[%s78 + $0x2c0] sm:$0xff]
  %v1262 = vld [vmem:[%s78 + $0x2d0] sm:$0xff]
  %v1263 = vld [vmem:[%s78 + $0x2d8] sm:$0xff]
  %v1264 = vld [vmem:[%s78 + $0x2e8] sm:$0xff]
  %v1265 = vld [vmem:[%s78 + $0x2f0] sm:$0xff]
  %v1266 = vld [vmem:[%s78 + $0x300] sm:$0xff]
  %v1267 = vld [vmem:[%s78 + $0x308] sm:$0xff]
  %v1268 = vld [vmem:[%s78 + $0x318] sm:$0xff]
  %v1269 = vld [vmem:[%s78 + $0x320] sm:$0xff]
  %1334 = vrot.lane.b32.xlu0 %v1206, 12
  %v1335 = vpop.permute.xlu0 %1334
  %1336 = vrot.lane.b32.xlu0 %v1207, 12
  %v1337 = vpop.permute.xlu0 %1336
  %1338 = vrot.lane.b32.xlu0 %v1208, 12
  %v1339 = vpop.permute.xlu0 %1338
  %1340 = vrot.lane.b32.xlu0 %v1209, 12
  %v1341 = vpop.permute.xlu0 %1340
  %1342 = vrot.lane.b32.xlu0 %v1210, 12
  %v1343 = vpop.permute.xlu0 %1342
  %1344 = vrot.lane.b32.xlu0 %v1211, 12
  %v1345 = vpop.permute.xlu0 %1344
  %1346 = vrot.lane.b32.xlu0 %v1212, 12
  %v1347 = vpop.permute.xlu0 %1346
  %1348 = vrot.lane.b32.xlu0 %v1213, 12
  %v1349 = vpop.permute.xlu0 %1348
  %1350 = vrot.lane.b32.xlu0 %v1214, 12
  %v1351 = vpop.permute.xlu0 %1350
  %1352 = vrot.lane.b32.xlu0 %v1215, 12
  %v1353 = vpop.permute.xlu0 %1352
  %1354 = vrot.lane.b32.xlu0 %v1216, 12
  %v1355 = vpop.permute.xlu0 %1354
  %1356 = vrot.lane.b32.xlu0 %v1217, 12
  %v1357 = vpop.permute.xlu0 %1356
  %1358 = vrot.lane.b32.xlu0 %v1218, 12
  %v1359 = vpop.permute.xlu0 %1358
  %1360 = vrot.lane.b32.xlu0 %v1219, 12
  %v1361 = vpop.permute.xlu0 %1360
  %1362 = vrot.lane.b32.xlu0 %v1220, 12
  %v1363 = vpop.permute.xlu0 %1362
  %1364 = vrot.lane.b32.xlu0 %v1221, 12
  %v1365 = vpop.permute.xlu0 %1364
  %1366 = vrot.lane.b32.xlu0 %v1222, 12
  %v1367 = vpop.permute.xlu0 %1366
  %1368 = vrot.lane.b32.xlu0 %v1223, 12
  %v1369 = vpop.permute.xlu0 %1368
  %1370 = vrot.lane.b32.xlu0 %v1224, 12
  %v1371 = vpop.permute.xlu0 %1370
  %1372 = vrot.lane.b32.xlu0 %v1225, 12
  %v1373 = vpop.permute.xlu0 %1372
  %1374 = vrot.lane.b32.xlu0 %v1226, 12
  %v1375 = vpop.permute.xlu0 %1374
  %1376 = vrot.lane.b32.xlu0 %v1227, 12
  %v1377 = vpop.permute.xlu0 %1376
  %1378 = vrot.lane.b32.xlu0 %v1228, 12
  %v1379 = vpop.permute.xlu0 %1378
  %1380 = vrot.lane.b32.xlu0 %v1229, 12
  %v1381 = vpop.permute.xlu0 %1380
  %1382 = vrot.lane.b32.xlu0 %v1230, 12
  %v1383 = vpop.permute.xlu0 %1382
  %1384 = vrot.lane.b32.xlu0 %v1231, 12
  %v1385 = vpop.permute.xlu0 %1384
  %1386 = vrot.lane.b32.xlu0 %v1232, 12
  %v1387 = vpop.permute.xlu0 %1386
  %1388 = vrot.lane.b32.xlu0 %v1233, 12
  %v1389 = vpop.permute.xlu0 %1388
  %1390 = vrot.lane.b32.xlu0 %v1234, 12
  %v1391 = vpop.permute.xlu0 %1390
  %1392 = vrot.lane.b32.xlu0 %v1235, 12
  %v1393 = vpop.permute.xlu0 %1392
  %1394 = vrot.lane.b32.xlu0 %v1236, 12
  %v1395 = vpop.permute.xlu0 %1394
  %1396 = vrot.lane.b32.xlu0 %v1237, 12
  %v1397 = vpop.permute.xlu0 %1396
  %1398 = vrot.lane.b32.xlu0 %v1238, 12
  %v1399 = vpop.permute.xlu0 %1398
  %1400 = vrot.lane.b32.xlu0 %v1239, 12
  %v1401 = vpop.permute.xlu0 %1400
  %1402 = vrot.lane.b32.xlu0 %v1240, 12
  %v1403 = vpop.permute.xlu0 %1402
  %1404 = vrot.lane.b32.xlu0 %v1241, 12
  %v1405 = vpop.permute.xlu0 %1404
  %1406 = vrot.lane.b32.xlu0 %v1242, 12
  %v1407 = vpop.permute.xlu0 %1406
  %1408 = vrot.lane.b32.xlu0 %v1243, 12
  %v1409 = vpop.permute.xlu0 %1408
  %1410 = vrot.lane.b32.xlu0 %v1244, 12
  %v1411 = vpop.permute.xlu0 %1410
  %1412 = vrot.lane.b32.xlu0 %v1245, 12
  %v1413 = vpop.permute.xlu0 %1412
  %1414 = vrot.lane.b32.xlu0 %v1246, 12
  %v1415 = vpop.permute.xlu0 %1414
  %1416 = vrot.lane.b32.xlu0 %v1247, 12
  %v1417 = vpop.permute.xlu0 %1416
  %1418 = vrot.lane.b32.xlu0 %v1248, 12
  %v1419 = vpop.permute.xlu0 %1418
  %1420 = vrot.lane.b32.xlu0 %v1249, 12
  %v1421 = vpop.permute.xlu0 %1420
  %1422 = vrot.lane.b32.xlu0 %v1250, 12
  %v1423 = vpop.permute.xlu0 %1422
  %1424 = vrot.lane.b32.xlu0 %v1251, 12
  %v1425 = vpop.permute.xlu0 %1424
  %1426 = vrot.lane.b32.xlu0 %v1252, 12
  %v1427 = vpop.permute.xlu0 %1426
  %1428 = vrot.lane.b32.xlu0 %v1253, 12
  %v1429 = vpop.permute.xlu0 %1428
  %1430 = vrot.lane.b32.xlu0 %v1254, 12
  %v1431 = vpop.permute.xlu0 %1430
  %1432 = vrot.lane.b32.xlu0 %v1255, 12
  %v1433 = vpop.permute.xlu0 %1432
  %1434 = vrot.lane.b32.xlu0 %v1256, 12
  %v1435 = vpop.permute.xlu0 %1434
  %1436 = vrot.lane.b32.xlu0 %v1257, 12
  %v1437 = vpop.permute.xlu0 %1436
  %1438 = vrot.lane.b32.xlu0 %v1258, 12
  %v1439 = vpop.permute.xlu0 %1438
  %1440 = vrot.lane.b32.xlu0 %v1259, 12
  %v1441 = vpop.permute.xlu0 %1440
  %1442 = vrot.lane.b32.xlu0 %v1260, 12
  %v1443 = vpop.permute.xlu0 %1442
  %1444 = vrot.lane.b32.xlu0 %v1261, 12
  %v1445 = vpop.permute.xlu0 %1444
  %1446 = vrot.lane.b32.xlu0 %v1262, 12
  %v1447 = vpop.permute.xlu0 %1446
  %1448 = vrot.lane.b32.xlu0 %v1263, 12
  %v1449 = vpop.permute.xlu0 %1448
  %1450 = vrot.lane.b32.xlu0 %v1264, 12
  %v1451 = vpop.permute.xlu0 %1450
  %1452 = vrot.lane.b32.xlu0 %v1265, 12
  %v1453 = vpop.permute.xlu0 %1452
  %1454 = vrot.lane.b32.xlu0 %v1266, 12
  %v1455 = vpop.permute.xlu0 %1454
  %1456 = vrot.lane.b32.xlu0 %v1267, 12
  %v1457 = vpop.permute.xlu0 %1456
  %1458 = vrot.lane.b32.xlu0 %v1268, 12
  %v1459 = vpop.permute.xlu0 %1458
  %1460 = vrot.lane.b32.xlu0 %v1269, 12
  %v1461 = vpop.permute.xlu0 %1460
  %vm1526 = vcmask 130144
  %1527 = vst.msk [vmem:[#allocation3] sm:$0xff] %vm1526, %v1335
  %1528 = vst.msk [vmem:[#allocation3 + $0x8] sm:$0xff] %vm1526, %v1337
  %1529 = vst.msk [vmem:[#allocation3 + $0x10] sm:$0xff] %vm1526, %v1339
  %1530 = vst.msk [vmem:[#allocation3 + $0x18] sm:$0xff] %vm1526, %v1341
  %1531 = vst.msk [vmem:[#allocation3 + $0x20] sm:$0xff] %vm1526, %v1343
  %1532 = vst.msk [vmem:[#allocation3 + $0x28] sm:$0xff] %vm1526, %v1345
  %1533 = vst.msk [vmem:[#allocation3 + $0x30] sm:$0xff] %vm1526, %v1347
  %1534 = vst.msk [vmem:[#allocation3 + $0x38] sm:$0xff] %vm1526, %v1349
  %1535 = vst.msk [vmem:[#allocation3 + $0x40] sm:$0xff] %vm1526, %v1351
  %1536 = vst.msk [vmem:[#allocation3 + $0x48] sm:$0xff] %vm1526, %v1353
  %1537 = vst.msk [vmem:[#allocation3 + $0x50] sm:$0xff] %vm1526, %v1355
  %1538 = vst.msk [vmem:[#allocation3 + $0x58] sm:$0xff] %vm1526, %v1357
  %1539 = vst.msk [vmem:[#allocation3 + $0x60] sm:$0xff] %vm1526, %v1359
  %1540 = vst.msk [vmem:[#allocation3 + $0x68] sm:$0xff] %vm1526, %v1361
  %1541 = vst.msk [vmem:[#allocation3 + $0x70] sm:$0xff] %vm1526, %v1363
  %1542 = vst.msk [vmem:[#allocation3 + $0x78] sm:$0xff] %vm1526, %v1365
  %1543 = vst.msk [vmem:[#allocation3 + $0x80] sm:$0xff] %vm1526, %v1367
  %1544 = vst.msk [vmem:[#allocation3 + $0x88] sm:$0xff] %vm1526, %v1369
  %1545 = vst.msk [vmem:[#allocation3 + $0x90] sm:$0xff] %vm1526, %v1371
  %1546 = vst.msk [vmem:[#allocation3 + $0x98] sm:$0xff] %vm1526, %v1373
  %1547 = vst.msk [vmem:[#allocation3 + $0xa0] sm:$0xff] %vm1526, %v1375
  %1548 = vst.msk [vmem:[#allocation3 + $0xa8] sm:$0xff] %vm1526, %v1377
  %1549 = vst.msk [vmem:[#allocation3 + $0xb0] sm:$0xff] %vm1526, %v1379
  %1550 = vst.msk [vmem:[#allocation3 + $0xb8] sm:$0xff] %vm1526, %v1381
  %1551 = vst.msk [vmem:[#allocation3 + $0xc0] sm:$0xff] %vm1526, %v1383
  %1552 = vst.msk [vmem:[#allocation3 + $0xc8] sm:$0xff] %vm1526, %v1385
  %1553 = vst.msk [vmem:[#allocation3 + $0xd0] sm:$0xff] %vm1526, %v1387
  %1554 = vst.msk [vmem:[#allocation3 + $0xd8] sm:$0xff] %vm1526, %v1389
  %1555 = vst.msk [vmem:[#allocation3 + $0xe0] sm:$0xff] %vm1526, %v1391
  %1556 = vst.msk [vmem:[#allocation3 + $0xe8] sm:$0xff] %vm1526, %v1393
  %1557 = vst.msk [vmem:[#allocation3 + $0xf0] sm:$0xff] %vm1526, %v1395
  %1558 = vst.msk [vmem:[#allocation3 + $0xf8] sm:$0xff] %vm1526, %v1397
  %1559 = vst.msk [vmem:[#allocation3 + $0x100] sm:$0xff] %vm1526, %v1399
  %1560 = vst.msk [vmem:[#allocation3 + $0x108] sm:$0xff] %vm1526, %v1401
  %1561 = vst.msk [vmem:[#allocation3 + $0x110] sm:$0xff] %vm1526, %v1403
  %1562 = vst.msk [vmem:[#allocation3 + $0x118] sm:$0xff] %vm1526, %v1405
  %1563 = vst.msk [vmem:[#allocation3 + $0x120] sm:$0xff] %vm1526, %v1407
  %1564 = vst.msk [vmem:[#allocation3 + $0x128] sm:$0xff] %vm1526, %v1409
  %1565 = vst.msk [vmem:[#allocation3 + $0x130] sm:$0xff] %vm1526, %v1411
  %1566 = vst.msk [vmem:[#allocation3 + $0x138] sm:$0xff] %vm1526, %v1413
  %1567 = vst.msk [vmem:[#allocation3 + $0x140] sm:$0xff] %vm1526, %v1415
  %1568 = vst.msk [vmem:[#allocation3 + $0x148] sm:$0xff] %vm1526, %v1417
  %1569 = vst.msk [vmem:[#allocation3 + $0x150] sm:$0xff] %vm1526, %v1419
  %1570 = vst.msk [vmem:[#allocation3 + $0x158] sm:$0xff] %vm1526, %v1421
  %1571 = vst.msk [vmem:[#allocation3 + $0x160] sm:$0xff] %vm1526, %v1423
  %1572 = vst.msk [vmem:[#allocation3 + $0x168] sm:$0xff] %vm1526, %v1425
  %1573 = vst.msk [vmem:[#allocation3 + $0x170] sm:$0xff] %vm1526, %v1427
  %1574 = vst.msk [vmem:[#allocation3 + $0x178] sm:$0xff] %vm1526, %v1429
  %1575 = vst.msk [vmem:[#allocation3 + $0x180] sm:$0xff] %vm1526, %v1431
  %1576 = vst.msk [vmem:[#allocation3 + $0x188] sm:$0xff] %vm1526, %v1433
  %1577 = vst.msk [vmem:[#allocation3 + $0x190] sm:$0xff] %vm1526, %v1435
  %1578 = vst.msk [vmem:[#allocation3 + $0x198] sm:$0xff] %vm1526, %v1437
  %1579 = vst.msk [vmem:[#allocation3 + $0x1a0] sm:$0xff] %vm1526, %v1439
  %1580 = vst.msk [vmem:[#allocation3 + $0x1a8] sm:$0xff] %vm1526, %v1441
  %1581 = vst.msk [vmem:[#allocation3 + $0x1b0] sm:$0xff] %vm1526, %v1443
  %1582 = vst.msk [vmem:[#allocation3 + $0x1b8] sm:$0xff] %vm1526, %v1445
  %1583 = vst.msk [vmem:[#allocation3 + $0x1c0] sm:$0xff] %vm1526, %v1447
  %1584 = vst.msk [vmem:[#allocation3 + $0x1c8] sm:$0xff] %vm1526, %v1449
  %1585 = vst.msk [vmem:[#allocation3 + $0x1d0] sm:$0xff] %vm1526, %v1451
  %1586 = vst.msk [vmem:[#allocation3 + $0x1d8] sm:$0xff] %vm1526, %v1453
  %1587 = vst.msk [vmem:[#allocation3 + $0x1e0] sm:$0xff] %vm1526, %v1455
  %1588 = vst.msk [vmem:[#allocation3 + $0x1e8] sm:$0xff] %vm1526, %v1457
  %1589 = vst.msk [vmem:[#allocation3 + $0x1f0] sm:$0xff] %vm1526, %v1459
  %1590 = vst.msk [vmem:[#allocation3 + $0x1f8] sm:$0xff] %vm1526, %v1461
  %v1591 = vld [vmem:[%s78 + $0x1] sm:$0xff]
  %v1592 = vld [vmem:[%s78 + $0x9] sm:$0xff]
  %v1593 = vld [vmem:[%s78 + $0x19] sm:$0xff]
  %v1594 = vld [vmem:[%s78 + $0x21] sm:$0xff]
  %v1595 = vld [vmem:[%s78 + $0x31] sm:$0xff]
  %v1596 = vld [vmem:[%s78 + $0x39] sm:$0xff]
  %v1597 = vld [vmem:[%s78 + $0x49] sm:$0xff]
  %v1598 = vld [vmem:[%s78 + $0x51] sm:$0xff]
  %v1599 = vld [vmem:[%s78 + $0x61] sm:$0xff]
  %v1600 = vld [vmem:[%s78 + $0x69] sm:$0xff]
  %v1601 = vld [vmem:[%s78 + $0x79] sm:$0xff]
  %v1602 = vld [vmem:[%s78 + $0x81] sm:$0xff]
  %v1603 = vld [vmem:[%s78 + $0x91] sm:$0xff]
  %v1604 = vld [vmem:[%s78 + $0x99] sm:$0xff]
  %v1605 = vld [vmem:[%s78 + $0xa9] sm:$0xff]
  %v1606 = vld [vmem:[%s78 + $0xb1] sm:$0xff]
  %v1607 = vld [vmem:[%s78 + $0xc1] sm:$0xff]
  %v1608 = vld [vmem:[%s78 + $0xc9] sm:$0xff]
  %v1609 = vld [vmem:[%s78 + $0xd9] sm:$0xff]
  %v1610 = vld [vmem:[%s78 + $0xe1] sm:$0xff]
  %v1611 = vld [vmem:[%s78 + $0xf1] sm:$0xff]
  %v1612 = vld [vmem:[%s78 + $0xf9] sm:$0xff]
  %v1613 = vld [vmem:[%s78 + $0x109] sm:$0xff]
  %v1614 = vld [vmem:[%s78 + $0x111] sm:$0xff]
  %v1615 = vld [vmem:[%s78 + $0x121] sm:$0xff]
  %v1616 = vld [vmem:[%s78 + $0x129] sm:$0xff]
  %v1617 = vld [vmem:[%s78 + $0x139] sm:$0xff]
  %v1618 = vld [vmem:[%s78 + $0x141] sm:$0xff]
  %v1619 = vld [vmem:[%s78 + $0x151] sm:$0xff]
  %v1620 = vld [vmem:[%s78 + $0x159] sm:$0xff]
  %v1621 = vld [vmem:[%s78 + $0x169] sm:$0xff]
  %v1622 = vld [vmem:[%s78 + $0x171] sm:$0xff]
  %v1623 = vld [vmem:[%s78 + $0x1b1] sm:$0xff]
  %v1624 = vld [vmem:[%s78 + $0x1b9] sm:$0xff]
  %v1625 = vld [vmem:[%s78 + $0x1c9] sm:$0xff]
  %v1626 = vld [vmem:[%s78 + $0x1d1] sm:$0xff]
  %v1627 = vld [vmem:[%s78 + $0x1e1] sm:$0xff]
  %v1628 = vld [vmem:[%s78 + $0x1e9] sm:$0xff]
  %v1629 = vld [vmem:[%s78 + $0x1f9] sm:$0xff]
  %v1630 = vld [vmem:[%s78 + $0x201] sm:$0xff]
  %v1631 = vld [vmem:[%s78 + $0x211] sm:$0xff]
  %v1632 = vld [vmem:[%s78 + $0x219] sm:$0xff]
  %v1633 = vld [vmem:[%s78 + $0x229] sm:$0xff]
  %v1634 = vld [vmem:[%s78 + $0x231] sm:$0xff]
  %v1635 = vld [vmem:[%s78 + $0x241] sm:$0xff]
  %v1636 = vld [vmem:[%s78 + $0x249] sm:$0xff]
  %v1637 = vld [vmem:[%s78 + $0x259] sm:$0xff]
  %v1638 = vld [vmem:[%s78 + $0x261] sm:$0xff]
  %v1639 = vld [vmem:[%s78 + $0x271] sm:$0xff]
  %v1640 = vld [vmem:[%s78 + $0x279] sm:$0xff]
  %v1641 = vld [vmem:[%s78 + $0x289] sm:$0xff]
  %v1642 = vld [vmem:[%s78 + $0x291] sm:$0xff]
  %v1643 = vld [vmem:[%s78 + $0x2a1] sm:$0xff]
  %v1644 = vld [vmem:[%s78 + $0x2a9] sm:$0xff]
  %v1645 = vld [vmem:[%s78 + $0x2b9] sm:$0xff]
  %v1646 = vld [vmem:[%s78 + $0x2c1] sm:$0xff]
  %v1647 = vld [vmem:[%s78 + $0x2d1] sm:$0xff]
  %v1648 = vld [vmem:[%s78 + $0x2d9] sm:$0xff]
  %v1649 = vld [vmem:[%s78 + $0x2e9] sm:$0xff]
  %v1650 = vld [vmem:[%s78 + $0x2f1] sm:$0xff]
  %v1651 = vld [vmem:[%s78 + $0x301] sm:$0xff]
  %v1652 = vld [vmem:[%s78 + $0x309] sm:$0xff]
  %v1653 = vld [vmem:[%s78 + $0x319] sm:$0xff]
  %v1654 = vld [vmem:[%s78 + $0x321] sm:$0xff]
  %1719 = vrot.lane.b32.xlu0 %v1591, 16
  %v1720 = vpop.permute.xlu0 %1719
  %1721 = vrot.lane.b32.xlu0 %v1592, 16
  %v1722 = vpop.permute.xlu0 %1721
  %1723 = vrot.lane.b32.xlu0 %v1593, 16
  %v1724 = vpop.permute.xlu0 %1723
  %1725 = vrot.lane.b32.xlu0 %v1594, 16
  %v1726 = vpop.permute.xlu0 %1725
  %1727 = vrot.lane.b32.xlu0 %v1595, 16
  %v1728 = vpop.permute.xlu0 %1727
  %1729 = vrot.lane.b32.xlu0 %v1596, 16
  %v1730 = vpop.permute.xlu0 %1729
  %1731 = vrot.lane.b32.xlu0 %v1597, 16
  %v1732 = vpop.permute.xlu0 %1731
  %1733 = vrot.lane.b32.xlu0 %v1598, 16
  %v1734 = vpop.permute.xlu0 %1733
  %1735 = vrot.lane.b32.xlu0 %v1599, 16
  %v1736 = vpop.permute.xlu0 %1735
  %1737 = vrot.lane.b32.xlu0 %v1600, 16
  %v1738 = vpop.permute.xlu0 %1737
  %1739 = vrot.lane.b32.xlu0 %v1601, 16
  %v1740 = vpop.permute.xlu0 %1739
  %1741 = vrot.lane.b32.xlu0 %v1602, 16
  %v1742 = vpop.permute.xlu0 %1741
  %1743 = vrot.lane.b32.xlu0 %v1603, 16
  %v1744 = vpop.permute.xlu0 %1743
  %1745 = vrot.lane.b32.xlu0 %v1604, 16
  %v1746 = vpop.permute.xlu0 %1745
  %1747 = vrot.lane.b32.xlu0 %v1605, 16
  %v1748 = vpop.permute.xlu0 %1747
  %1749 = vrot.lane.b32.xlu0 %v1606, 16
  %v1750 = vpop.permute.xlu0 %1749
  %1751 = vrot.lane.b32.xlu0 %v1607, 16
  %v1752 = vpop.permute.xlu0 %1751
  %1753 = vrot.lane.b32.xlu0 %v1608, 16
  %v1754 = vpop.permute.xlu0 %1753
  %1755 = vrot.lane.b32.xlu0 %v1609, 16
  %v1756 = vpop.permute.xlu0 %1755
  %1757 = vrot.lane.b32.xlu0 %v1610, 16
  %v1758 = vpop.permute.xlu0 %1757
  %1759 = vrot.lane.b32.xlu0 %v1611, 16
  %v1760 = vpop.permute.xlu0 %1759
  %1761 = vrot.lane.b32.xlu0 %v1612, 16
  %v1762 = vpop.permute.xlu0 %1761
  %1763 = vrot.lane.b32.xlu0 %v1613, 16
  %v1764 = vpop.permute.xlu0 %1763
  %1765 = vrot.lane.b32.xlu0 %v1614, 16
  %v1766 = vpop.permute.xlu0 %1765
  %1767 = vrot.lane.b32.xlu0 %v1615, 16
  %v1768 = vpop.permute.xlu0 %1767
  %1769 = vrot.lane.b32.xlu0 %v1616, 16
  %v1770 = vpop.permute.xlu0 %1769
  %1771 = vrot.lane.b32.xlu0 %v1617, 16
  %v1772 = vpop.permute.xlu0 %1771
  %1773 = vrot.lane.b32.xlu0 %v1618, 16
  %v1774 = vpop.permute.xlu0 %1773
  %1775 = vrot.lane.b32.xlu0 %v1619, 16
  %v1776 = vpop.permute.xlu0 %1775
  %1777 = vrot.lane.b32.xlu0 %v1620, 16
  %v1778 = vpop.permute.xlu0 %1777
  %1779 = vrot.lane.b32.xlu0 %v1621, 16
  %v1780 = vpop.permute.xlu0 %1779
  %1781 = vrot.lane.b32.xlu0 %v1622, 16
  %v1782 = vpop.permute.xlu0 %1781
  %1783 = vrot.lane.b32.xlu0 %v1623, 16
  %v1784 = vpop.permute.xlu0 %1783
  %1785 = vrot.lane.b32.xlu0 %v1624, 16
  %v1786 = vpop.permute.xlu0 %1785
  %1787 = vrot.lane.b32.xlu0 %v1625, 16
  %v1788 = vpop.permute.xlu0 %1787
  %1789 = vrot.lane.b32.xlu0 %v1626, 16
  %v1790 = vpop.permute.xlu0 %1789
  %1791 = vrot.lane.b32.xlu0 %v1627, 16
  %v1792 = vpop.permute.xlu0 %1791
  %1793 = vrot.lane.b32.xlu0 %v1628, 16
  %v1794 = vpop.permute.xlu0 %1793
  %1795 = vrot.lane.b32.xlu0 %v1629, 16
  %v1796 = vpop.permute.xlu0 %1795
  %1797 = vrot.lane.b32.xlu0 %v1630, 16
  %v1798 = vpop.permute.xlu0 %1797
  %1799 = vrot.lane.b32.xlu0 %v1631, 16
  %v1800 = vpop.permute.xlu0 %1799
  %1801 = vrot.lane.b32.xlu0 %v1632, 16
  %v1802 = vpop.permute.xlu0 %1801
  %1803 = vrot.lane.b32.xlu0 %v1633, 16
  %v1804 = vpop.permute.xlu0 %1803
  %1805 = vrot.lane.b32.xlu0 %v1634, 16
  %v1806 = vpop.permute.xlu0 %1805
  %1807 = vrot.lane.b32.xlu0 %v1635, 16
  %v1808 = vpop.permute.xlu0 %1807
  %1809 = vrot.lane.b32.xlu0 %v1636, 16
  %v1810 = vpop.permute.xlu0 %1809
  %1811 = vrot.lane.b32.xlu0 %v1637, 16
  %v1812 = vpop.permute.xlu0 %1811
  %1813 = vrot.lane.b32.xlu0 %v1638, 16
  %v1814 = vpop.permute.xlu0 %1813
  %1815 = vrot.lane.b32.xlu0 %v1639, 16
  %v1816 = vpop.permute.xlu0 %1815
  %1817 = vrot.lane.b32.xlu0 %v1640, 16
  %v1818 = vpop.permute.xlu0 %1817
  %1819 = vrot.lane.b32.xlu0 %v1641, 16
  %v1820 = vpop.permute.xlu0 %1819
  %1821 = vrot.lane.b32.xlu0 %v1642, 16
  %v1822 = vpop.permute.xlu0 %1821
  %1823 = vrot.lane.b32.xlu0 %v1643, 16
  %v1824 = vpop.permute.xlu0 %1823
  %1825 = vrot.lane.b32.xlu0 %v1644, 16
  %v1826 = vpop.permute.xlu0 %1825
  %1827 = vrot.lane.b32.xlu0 %v1645, 16
  %v1828 = vpop.permute.xlu0 %1827
  %1829 = vrot.lane.b32.xlu0 %v1646, 16
  %v1830 = vpop.permute.xlu0 %1829
  %1831 = vrot.lane.b32.xlu0 %v1647, 16
  %v1832 = vpop.permute.xlu0 %1831
  %1833 = vrot.lane.b32.xlu0 %v1648, 16
  %v1834 = vpop.permute.xlu0 %1833
  %1835 = vrot.lane.b32.xlu0 %v1649, 16
  %v1836 = vpop.permute.xlu0 %1835
  %1837 = vrot.lane.b32.xlu0 %v1650, 16
  %v1838 = vpop.permute.xlu0 %1837
  %1839 = vrot.lane.b32.xlu0 %v1651, 16
  %v1840 = vpop.permute.xlu0 %1839
  %1841 = vrot.lane.b32.xlu0 %v1652, 16
  %v1842 = vpop.permute.xlu0 %1841
  %1843 = vrot.lane.b32.xlu0 %v1653, 16
  %v1844 = vpop.permute.xlu0 %1843
  %1845 = vrot.lane.b32.xlu0 %v1654, 16
  %v1846 = vpop.permute.xlu0 %1845
  %vm1911 = vcmask 162944
  %1912 = vst.msk [vmem:[#allocation3] sm:$0xff] %vm1911, %v1720
  %1913 = vst.msk [vmem:[#allocation3 + $0x8] sm:$0xff] %vm1911, %v1722
  %1914 = vst.msk [vmem:[#allocation3 + $0x10] sm:$0xff] %vm1911, %v1724
  %1915 = vst.msk [vmem:[#allocation3 + $0x18] sm:$0xff] %vm1911, %v1726
  %1916 = vst.msk [vmem:[#allocation3 + $0x20] sm:$0xff] %vm1911, %v1728
  %1917 = vst.msk [vmem:[#allocation3 + $0x28] sm:$0xff] %vm1911, %v1730
  %1918 = vst.msk [vmem:[#allocation3 + $0x30] sm:$0xff] %vm1911, %v1732
  %1919 = vst.msk [vmem:[#allocation3 + $0x38] sm:$0xff] %vm1911, %v1734
  %1920 = vst.msk [vmem:[#allocation3 + $0x40] sm:$0xff] %vm1911, %v1736
  %1921 = vst.msk [vmem:[#allocation3 + $0x48] sm:$0xff] %vm1911, %v1738
  %1922 = vst.msk [vmem:[#allocation3 + $0x50] sm:$0xff] %vm1911, %v1740
  %1923 = vst.msk [vmem:[#allocation3 + $0x58] sm:$0xff] %vm1911, %v1742
  %1924 = vst.msk [vmem:[#allocation3 + $0x60] sm:$0xff] %vm1911, %v1744
  %1925 = vst.msk [vmem:[#allocation3 + $0x68] sm:$0xff] %vm1911, %v1746
  %1926 = vst.msk [vmem:[#allocation3 + $0x70] sm:$0xff] %vm1911, %v1748
  %1927 = vst.msk [vmem:[#allocation3 + $0x78] sm:$0xff] %vm1911, %v1750
  %1928 = vst.msk [vmem:[#allocation3 + $0x80] sm:$0xff] %vm1911, %v1752
  %1929 = vst.msk [vmem:[#allocation3 + $0x88] sm:$0xff] %vm1911, %v1754
  %1930 = vst.msk [vmem:[#allocation3 + $0x90] sm:$0xff] %vm1911, %v1756
  %1931 = vst.msk [vmem:[#allocation3 + $0x98] sm:$0xff] %vm1911, %v1758
  %1932 = vst.msk [vmem:[#allocation3 + $0xa0] sm:$0xff] %vm1911, %v1760
  %1933 = vst.msk [vmem:[#allocation3 + $0xa8] sm:$0xff] %vm1911, %v1762
  %1934 = vst.msk [vmem:[#allocation3 + $0xb0] sm:$0xff] %vm1911, %v1764
  %1935 = vst.msk [vmem:[#allocation3 + $0xb8] sm:$0xff] %vm1911, %v1766
  %1936 = vst.msk [vmem:[#allocation3 + $0xc0] sm:$0xff] %vm1911, %v1768
  %1937 = vst.msk [vmem:[#allocation3 + $0xc8] sm:$0xff] %vm1911, %v1770
  %1938 = vst.msk [vmem:[#allocation3 + $0xd0] sm:$0xff] %vm1911, %v1772
  %1939 = vst.msk [vmem:[#allocation3 + $0xd8] sm:$0xff] %vm1911, %v1774
  %1940 = vst.msk [vmem:[#allocation3 + $0xe0] sm:$0xff] %vm1911, %v1776
  %1941 = vst.msk [vmem:[#allocation3 + $0xe8] sm:$0xff] %vm1911, %v1778
  %1942 = vst.msk [vmem:[#allocation3 + $0xf0] sm:$0xff] %vm1911, %v1780
  %1943 = vst.msk [vmem:[#allocation3 + $0xf8] sm:$0xff] %vm1911, %v1782
  %1944 = vst.msk [vmem:[#allocation3 + $0x100] sm:$0xff] %vm1911, %v1784
  %1945 = vst.msk [vmem:[#allocation3 + $0x108] sm:$0xff] %vm1911, %v1786
  %1946 = vst.msk [vmem:[#allocation3 + $0x110] sm:$0xff] %vm1911, %v1788
  %1947 = vst.msk [vmem:[#allocation3 + $0x118] sm:$0xff] %vm1911, %v1790
  %1948 = vst.msk [vmem:[#allocation3 + $0x120] sm:$0xff] %vm1911, %v1792
  %1949 = vst.msk [vmem:[#allocation3 + $0x128] sm:$0xff] %vm1911, %v1794
  %1950 = vst.msk [vmem:[#allocation3 + $0x130] sm:$0xff] %vm1911, %v1796
  %1951 = vst.msk [vmem:[#allocation3 + $0x138] sm:$0xff] %vm1911, %v1798
  %1952 = vst.msk [vmem:[#allocation3 + $0x140] sm:$0xff] %vm1911, %v1800
  %1953 = vst.msk [vmem:[#allocation3 + $0x148] sm:$0xff] %vm1911, %v1802
  %1954 = vst.msk [vmem:[#allocation3 + $0x150] sm:$0xff] %vm1911, %v1804
  %1955 = vst.msk [vmem:[#allocation3 + $0x158] sm:$0xff] %vm1911, %v1806
  %1956 = vst.msk [vmem:[#allocation3 + $0x160] sm:$0xff] %vm1911, %v1808
  %1957 = vst.msk [vmem:[#allocation3 + $0x168] sm:$0xff] %vm1911, %v1810
  %1958 = vst.msk [vmem:[#allocation3 + $0x170] sm:$0xff] %vm1911, %v1812
  %1959 = vst.msk [vmem:[#allocation3 + $0x178] sm:$0xff] %vm1911, %v1814
  %1960 = vst.msk [vmem:[#allocation3 + $0x180] sm:$0xff] %vm1911, %v1816
  %1961 = vst.msk [vmem:[#allocation3 + $0x188] sm:$0xff] %vm1911, %v1818
  %1962 = vst.msk [vmem:[#allocation3 + $0x190] sm:$0xff] %vm1911, %v1820
  %1963 = vst.msk [vmem:[#allocation3 + $0x198] sm:$0xff] %vm1911, %v1822
  %1964 = vst.msk [vmem:[#allocation3 + $0x1a0] sm:$0xff] %vm1911, %v1824
  %1965 = vst.msk [vmem:[#allocation3 + $0x1a8] sm:$0xff] %vm1911, %v1826
  %1966 = vst.msk [vmem:[#allocation3 + $0x1b0] sm:$0xff] %vm1911, %v1828
  %1967 = vst.msk [vmem:[#allocation3 + $0x1b8] sm:$0xff] %vm1911, %v1830
  %1968 = vst.msk [vmem:[#allocation3 + $0x1c0] sm:$0xff] %vm1911, %v1832
  %1969 = vst.msk [vmem:[#allocation3 + $0x1c8] sm:$0xff] %vm1911, %v1834
  %1970 = vst.msk [vmem:[#allocation3 + $0x1d0] sm:$0xff] %vm1911, %v1836
  %1971 = vst.msk [vmem:[#allocation3 + $0x1d8] sm:$0xff] %vm1911, %v1838
  %1972 = vst.msk [vmem:[#allocation3 + $0x1e0] sm:$0xff] %vm1911, %v1840
  %1973 = vst.msk [vmem:[#allocation3 + $0x1e8] sm:$0xff] %vm1911, %v1842
  %1974 = vst.msk [vmem:[#allocation3 + $0x1f0] sm:$0xff] %vm1911, %v1844
  %1975 = vst.msk [vmem:[#allocation3 + $0x1f8] sm:$0xff] %vm1911, %v1846
  %v1976 = vld [vmem:[%s78 + $0x2] sm:$0xff]
  %v1977 = vld [vmem:[%s78 + $0xa] sm:$0xff]
  %v1978 = vld [vmem:[%s78 + $0x1a] sm:$0xff]
  %v1979 = vld [vmem:[%s78 + $0x22] sm:$0xff]
  %v1980 = vld [vmem:[%s78 + $0x32] sm:$0xff]
  %v1981 = vld [vmem:[%s78 + $0x3a] sm:$0xff]
  %v1982 = vld [vmem:[%s78 + $0x4a] sm:$0xff]
  %v1983 = vld [vmem:[%s78 + $0x52] sm:$0xff]
  %v1984 = vld [vmem:[%s78 + $0x62] sm:$0xff]
  %v1985 = vld [vmem:[%s78 + $0x6a] sm:$0xff]
  %v1986 = vld [vmem:[%s78 + $0x7a] sm:$0xff]
  %v1987 = vld [vmem:[%s78 + $0x82] sm:$0xff]
  %v1988 = vld [vmem:[%s78 + $0x92] sm:$0xff]
  %v1989 = vld [vmem:[%s78 + $0x9a] sm:$0xff]
  %v1990 = vld [vmem:[%s78 + $0xaa] sm:$0xff]
  %v1991 = vld [vmem:[%s78 + $0xb2] sm:$0xff]
  %v1992 = vld [vmem:[%s78 + $0xc2] sm:$0xff]
  %v1993 = vld [vmem:[%s78 + $0xca] sm:$0xff]
  %v1994 = vld [vmem:[%s78 + $0xda] sm:$0xff]
  %v1995 = vld [vmem:[%s78 + $0xe2] sm:$0xff]
  %v1996 = vld [vmem:[%s78 + $0xf2] sm:$0xff]
  %v1997 = vld [vmem:[%s78 + $0xfa] sm:$0xff]
  %v1998 = vld [vmem:[%s78 + $0x10a] sm:$0xff]
  %v1999 = vld [vmem:[%s78 + $0x112] sm:$0xff]
  %v2000 = vld [vmem:[%s78 + $0x122] sm:$0xff]
  %v2001 = vld [vmem:[%s78 + $0x12a] sm:$0xff]
  %v2002 = vld [vmem:[%s78 + $0x13a] sm:$0xff]
  %v2003 = vld [vmem:[%s78 + $0x142] sm:$0xff]
  %v2004 = vld [vmem:[%s78 + $0x152] sm:$0xff]
  %v2005 = vld [vmem:[%s78 + $0x15a] sm:$0xff]
  %v2006 = vld [vmem:[%s78 + $0x16a] sm:$0xff]
  %v2007 = vld [vmem:[%s78 + $0x172] sm:$0xff]
  %v2008 = vld [vmem:[%s78 + $0x1b2] sm:$0xff]
  %v2009 = vld [vmem:[%s78 + $0x1ba] sm:$0xff]
  %v2010 = vld [vmem:[%s78 + $0x1ca] sm:$0xff]
  %v2011 = vld [vmem:[%s78 + $0x1d2] sm:$0xff]
  %v2012 = vld [vmem:[%s78 + $0x1e2] sm:$0xff]
  %v2013 = vld [vmem:[%s78 + $0x1ea] sm:$0xff]
  %v2014 = vld [vmem:[%s78 + $0x1fa] sm:$0xff]
  %v2015 = vld [vmem:[%s78 + $0x202] sm:$0xff]
  %v2016 = vld [vmem:[%s78 + $0x212] sm:$0xff]
  %v2017 = vld [vmem:[%s78 + $0x21a] sm:$0xff]
  %v2018 = vld [vmem:[%s78 + $0x22a] sm:$0xff]
  %v2019 = vld [vmem:[%s78 + $0x232] sm:$0xff]
  %v2020 = vld [vmem:[%s78 + $0x242] sm:$0xff]
  %v2021 = vld [vmem:[%s78 + $0x24a] sm:$0xff]
  %v2022 = vld [vmem:[%s78 + $0x25a] sm:$0xff]
  %v2023 = vld [vmem:[%s78 + $0x262] sm:$0xff]
  %v2024 = vld [vmem:[%s78 + $0x272] sm:$0xff]
  %v2025 = vld [vmem:[%s78 + $0x27a] sm:$0xff]
  %v2026 = vld [vmem:[%s78 + $0x28a] sm:$0xff]
  %v2027 = vld [vmem:[%s78 + $0x292] sm:$0xff]
  %v2028 = vld [vmem:[%s78 + $0x2a2] sm:$0xff]
  %v2029 = vld [vmem:[%s78 + $0x2aa] sm:$0xff]
  %v2030 = vld [vmem:[%s78 + $0x2ba] sm:$0xff]
  %v2031 = vld [vmem:[%s78 + $0x2c2] sm:$0xff]
  %v2032 = vld [vmem:[%s78 + $0x2d2] sm:$0xff]
  %v2033 = vld [vmem:[%s78 + $0x2da] sm:$0xff]
  %v2034 = vld [vmem:[%s78 + $0x2ea] sm:$0xff]
  %v2035 = vld [vmem:[%s78 + $0x2f2] sm:$0xff]
  %v2036 = vld [vmem:[%s78 + $0x302] sm:$0xff]
  %v2037 = vld [vmem:[%s78 + $0x30a] sm:$0xff]
  %v2038 = vld [vmem:[%s78 + $0x31a] sm:$0xff]
  %v2039 = vld [vmem:[%s78 + $0x322] sm:$0xff]
  %2104 = vrot.lane.b32.xlu0 %v1976, 20
  %v2105 = vpop.permute.xlu0 %2104
  %2106 = vrot.lane.b32.xlu0 %v1977, 20
  %v2107 = vpop.permute.xlu0 %2106
  %2108 = vrot.lane.b32.xlu0 %v1978, 20
  %v2109 = vpop.permute.xlu0 %2108
  %2110 = vrot.lane.b32.xlu0 %v1979, 20
  %v2111 = vpop.permute.xlu0 %2110
  %2112 = vrot.lane.b32.xlu0 %v1980, 20
  %v2113 = vpop.permute.xlu0 %2112
  %2114 = vrot.lane.b32.xlu0 %v1981, 20
  %v2115 = vpop.permute.xlu0 %2114
  %2116 = vrot.lane.b32.xlu0 %v1982, 20
  %v2117 = vpop.permute.xlu0 %2116
  %2118 = vrot.lane.b32.xlu0 %v1983, 20
  %v2119 = vpop.permute.xlu0 %2118
  %2120 = vrot.lane.b32.xlu0 %v1984, 20
  %v2121 = vpop.permute.xlu0 %2120
  %2122 = vrot.lane.b32.xlu0 %v1985, 20
  %v2123 = vpop.permute.xlu0 %2122
  %2124 = vrot.lane.b32.xlu0 %v1986, 20
  %v2125 = vpop.permute.xlu0 %2124
  %2126 = vrot.lane.b32.xlu0 %v1987, 20
  %v2127 = vpop.permute.xlu0 %2126
  %2128 = vrot.lane.b32.xlu0 %v1988, 20
  %v2129 = vpop.permute.xlu0 %2128
  %2130 = vrot.lane.b32.xlu0 %v1989, 20
  %v2131 = vpop.permute.xlu0 %2130
  %2132 = vrot.lane.b32.xlu0 %v1990, 20
  %v2133 = vpop.permute.xlu0 %2132
  %2134 = vrot.lane.b32.xlu0 %v1991, 20
  %v2135 = vpop.permute.xlu0 %2134
  %2136 = vrot.lane.b32.xlu0 %v1992, 20
  %v2137 = vpop.permute.xlu0 %2136
  %2138 = vrot.lane.b32.xlu0 %v1993, 20
  %v2139 = vpop.permute.xlu0 %2138
  %2140 = vrot.lane.b32.xlu0 %v1994, 20
  %v2141 = vpop.permute.xlu0 %2140
  %2142 = vrot.lane.b32.xlu0 %v1995, 20
  %v2143 = vpop.permute.xlu0 %2142
  %2144 = vrot.lane.b32.xlu0 %v1996, 20
  %v2145 = vpop.permute.xlu0 %2144
  %2146 = vrot.lane.b32.xlu0 %v1997, 20
  %v2147 = vpop.permute.xlu0 %2146
  %2148 = vrot.lane.b32.xlu0 %v1998, 20
  %v2149 = vpop.permute.xlu0 %2148
  %2150 = vrot.lane.b32.xlu0 %v1999, 20
  %v2151 = vpop.permute.xlu0 %2150
  %2152 = vrot.lane.b32.xlu0 %v2000, 20
  %v2153 = vpop.permute.xlu0 %2152
  %2154 = vrot.lane.b32.xlu0 %v2001, 20
  %v2155 = vpop.permute.xlu0 %2154
  %2156 = vrot.lane.b32.xlu0 %v2002, 20
  %v2157 = vpop.permute.xlu0 %2156
  %2158 = vrot.lane.b32.xlu0 %v2003, 20
  %v2159 = vpop.permute.xlu0 %2158
  %2160 = vrot.lane.b32.xlu0 %v2004, 20
  %v2161 = vpop.permute.xlu0 %2160
  %2162 = vrot.lane.b32.xlu0 %v2005, 20
  %v2163 = vpop.permute.xlu0 %2162
  %2164 = vrot.lane.b32.xlu0 %v2006, 20
  %v2165 = vpop.permute.xlu0 %2164
  %2166 = vrot.lane.b32.xlu0 %v2007, 20
  %v2167 = vpop.permute.xlu0 %2166
  %2168 = vrot.lane.b32.xlu0 %v2008, 20
  %v2169 = vpop.permute.xlu0 %2168
  %2170 = vrot.lane.b32.xlu0 %v2009, 20
  %v2171 = vpop.permute.xlu0 %2170
  %2172 = vrot.lane.b32.xlu0 %v2010, 20
  %v2173 = vpop.permute.xlu0 %2172
  %2174 = vrot.lane.b32.xlu0 %v2011, 20
  %v2175 = vpop.permute.xlu0 %2174
  %2176 = vrot.lane.b32.xlu0 %v2012, 20
  %v2177 = vpop.permute.xlu0 %2176
  %2178 = vrot.lane.b32.xlu0 %v2013, 20
  %v2179 = vpop.permute.xlu0 %2178
  %2180 = vrot.lane.b32.xlu0 %v2014, 20
  %v2181 = vpop.permute.xlu0 %2180
  %2182 = vrot.lane.b32.xlu0 %v2015, 20
  %v2183 = vpop.permute.xlu0 %2182
  %2184 = vrot.lane.b32.xlu0 %v2016, 20
  %v2185 = vpop.permute.xlu0 %2184
  %2186 = vrot.lane.b32.xlu0 %v2017, 20
  %v2187 = vpop.permute.xlu0 %2186
  %2188 = vrot.lane.b32.xlu0 %v2018, 20
  %v2189 = vpop.permute.xlu0 %2188
  %2190 = vrot.lane.b32.xlu0 %v2019, 20
  %v2191 = vpop.permute.xlu0 %2190
  %2192 = vrot.lane.b32.xlu0 %v2020, 20
  %v2193 = vpop.permute.xlu0 %2192
  %2194 = vrot.lane.b32.xlu0 %v2021, 20
  %v2195 = vpop.permute.xlu0 %2194
  %2196 = vrot.lane.b32.xlu0 %v2022, 20
  %v2197 = vpop.permute.xlu0 %2196
  %2198 = vrot.lane.b32.xlu0 %v2023, 20
  %v2199 = vpop.permute.xlu0 %2198
  %2200 = vrot.lane.b32.xlu0 %v2024, 20
  %v2201 = vpop.permute.xlu0 %2200
  %2202 = vrot.lane.b32.xlu0 %v2025, 20
  %v2203 = vpop.permute.xlu0 %2202
  %2204 = vrot.lane.b32.xlu0 %v2026, 20
  %v2205 = vpop.permute.xlu0 %2204
  %2206 = vrot.lane.b32.xlu0 %v2027, 20
  %v2207 = vpop.permute.xlu0 %2206
  %2208 = vrot.lane.b32.xlu0 %v2028, 20
  %v2209 = vpop.permute.xlu0 %2208
  %2210 = vrot.lane.b32.xlu0 %v2029, 20
  %v2211 = vpop.permute.xlu0 %2210
  %2212 = vrot.lane.b32.xlu0 %v2030, 20
  %v2213 = vpop.permute.xlu0 %2212
  %2214 = vrot.lane.b32.xlu0 %v2031, 20
  %v2215 = vpop.permute.xlu0 %2214
  %2216 = vrot.lane.b32.xlu0 %v2032, 20
  %v2217 = vpop.permute.xlu0 %2216
  %2218 = vrot.lane.b32.xlu0 %v2033, 20
  %v2219 = vpop.permute.xlu0 %2218
  %2220 = vrot.lane.b32.xlu0 %v2034, 20
  %v2221 = vpop.permute.xlu0 %2220
  %2222 = vrot.lane.b32.xlu0 %v2035, 20
  %v2223 = vpop.permute.xlu0 %2222
  %2224 = vrot.lane.b32.xlu0 %v2036, 20
  %v2225 = vpop.permute.xlu0 %2224
  %2226 = vrot.lane.b32.xlu0 %v2037, 20
  %v2227 = vpop.permute.xlu0 %2226
  %2228 = vrot.lane.b32.xlu0 %v2038, 20
  %v2229 = vpop.permute.xlu0 %2228
  %2230 = vrot.lane.b32.xlu0 %v2039, 20
  %v2231 = vpop.permute.xlu0 %2230
  %vm2296 = vcmask 195744
  %2297 = vst.msk [vmem:[#allocation3] sm:$0xff] %vm2296, %v2105
  %2298 = vst.msk [vmem:[#allocation3 + $0x8] sm:$0xff] %vm2296, %v2107
  %2299 = vst.msk [vmem:[#allocation3 + $0x10] sm:$0xff] %vm2296, %v2109
  %2300 = vst.msk [vmem:[#allocation3 + $0x18] sm:$0xff] %vm2296, %v2111
  %2301 = vst.msk [vmem:[#allocation3 + $0x20] sm:$0xff] %vm2296, %v2113
  %2302 = vst.msk [vmem:[#allocation3 + $0x28] sm:$0xff] %vm2296, %v2115
  %2303 = vst.msk [vmem:[#allocation3 + $0x30] sm:$0xff] %vm2296, %v2117
  %2304 = vst.msk [vmem:[#allocation3 + $0x38] sm:$0xff] %vm2296, %v2119
  %2305 = vst.msk [vmem:[#allocation3 + $0x40] sm:$0xff] %vm2296, %v2121
  %2306 = vst.msk [vmem:[#allocation3 + $0x48] sm:$0xff] %vm2296, %v2123
  %2307 = vst.msk [vmem:[#allocation3 + $0x50] sm:$0xff] %vm2296, %v2125
  %2308 = vst.msk [vmem:[#allocation3 + $0x58] sm:$0xff] %vm2296, %v2127
  %2309 = vst.msk [vmem:[#allocation3 + $0x60] sm:$0xff] %vm2296, %v2129
  %2310 = vst.msk [vmem:[#allocation3 + $0x68] sm:$0xff] %vm2296, %v2131
  %2311 = vst.msk [vmem:[#allocation3 + $0x70] sm:$0xff] %vm2296, %v2133
  %2312 = vst.msk [vmem:[#allocation3 + $0x78] sm:$0xff] %vm2296, %v2135
  %2313 = vst.msk [vmem:[#allocation3 + $0x80] sm:$0xff] %vm2296, %v2137
  %2314 = vst.msk [vmem:[#allocation3 + $0x88] sm:$0xff] %vm2296, %v2139
  %2315 = vst.msk [vmem:[#allocation3 + $0x90] sm:$0xff] %vm2296, %v2141
  %2316 = vst.msk [vmem:[#allocation3 + $0x98] sm:$0xff] %vm2296, %v2143
  %2317 = vst.msk [vmem:[#allocation3 + $0xa0] sm:$0xff] %vm2296, %v2145
  %2318 = vst.msk [vmem:[#allocation3 + $0xa8] sm:$0xff] %vm2296, %v2147
  %2319 = vst.msk [vmem:[#allocation3 + $0xb0] sm:$0xff] %vm2296, %v2149
  %2320 = vst.msk [vmem:[#allocation3 + $0xb8] sm:$0xff] %vm2296, %v2151
  %2321 = vst.msk [vmem:[#allocation3 + $0xc0] sm:$0xff] %vm2296, %v2153
  %2322 = vst.msk [vmem:[#allocation3 + $0xc8] sm:$0xff] %vm2296, %v2155
  %2323 = vst.msk [vmem:[#allocation3 + $0xd0] sm:$0xff] %vm2296, %v2157
  %2324 = vst.msk [vmem:[#allocation3 + $0xd8] sm:$0xff] %vm2296, %v2159
  %2325 = vst.msk [vmem:[#allocation3 + $0xe0] sm:$0xff] %vm2296, %v2161
  %2326 = vst.msk [vmem:[#allocation3 + $0xe8] sm:$0xff] %vm2296, %v2163
  %2327 = vst.msk [vmem:[#allocation3 + $0xf0] sm:$0xff] %vm2296, %v2165
  %2328 = vst.msk [vmem:[#allocation3 + $0xf8] sm:$0xff] %vm2296, %v2167
  %2329 = vst.msk [vmem:[#allocation3 + $0x100] sm:$0xff] %vm2296, %v2169
  %2330 = vst.msk [vmem:[#allocation3 + $0x108] sm:$0xff] %vm2296, %v2171
  %2331 = vst.msk [vmem:[#allocation3 + $0x110] sm:$0xff] %vm2296, %v2173
  %2332 = vst.msk [vmem:[#allocation3 + $0x118] sm:$0xff] %vm2296, %v2175
  %2333 = vst.msk [vmem:[#allocation3 + $0x120] sm:$0xff] %vm2296, %v2177
  %2334 = vst.msk [vmem:[#allocation3 + $0x128] sm:$0xff] %vm2296, %v2179
  %2335 = vst.msk [vmem:[#allocation3 + $0x130] sm:$0xff] %vm2296, %v2181
  %2336 = vst.msk [vmem:[#allocation3 + $0x138] sm:$0xff] %vm2296, %v2183
  %2337 = vst.msk [vmem:[#allocation3 + $0x140] sm:$0xff] %vm2296, %v2185
  %2338 = vst.msk [vmem:[#allocation3 + $0x148] sm:$0xff] %vm2296, %v2187
  %2339 = vst.msk [vmem:[#allocation3 + $0x150] sm:$0xff] %vm2296, %v2189
  %2340 = vst.msk [vmem:[#allocation3 + $0x158] sm:$0xff] %vm2296, %v2191
  %2341 = vst.msk [vmem:[#allocation3 + $0x160] sm:$0xff] %vm2296, %v2193
  %2342 = vst.msk [vmem:[#allocation3 + $0x168] sm:$0xff] %vm2296, %v2195
  %2343 = vst.msk [vmem:[#allocation3 + $0x170] sm:$0xff] %vm2296, %v2197
  %2344 = vst.msk [vmem:[#allocation3 + $0x178] sm:$0xff] %vm2296, %v2199
  %2345 = vst.msk [vmem:[#allocation3 + $0x180] sm:$0xff] %vm2296, %v2201
  %2346 = vst.msk [vmem:[#allocation3 + $0x188] sm:$0xff] %vm2296, %v2203
  %2347 = vst.msk [vmem:[#allocation3 + $0x190] sm:$0xff] %vm2296, %v2205
  %2348 = vst.msk [vmem:[#allocation3 + $0x198] sm:$0xff] %vm2296, %v2207
  %2349 = vst.msk [vmem:[#allocation3 + $0x1a0] sm:$0xff] %vm2296, %v2209
  %2350 = vst.msk [vmem:[#allocation3 + $0x1a8] sm:$0xff] %vm2296, %v2211
  %2351 = vst.msk [vmem:[#allocation3 + $0x1b0] sm:$0xff] %vm2296, %v2213
  %2352 = vst.msk [vmem:[#allocation3 + $0x1b8] sm:$0xff] %vm2296, %v2215
  %2353 = vst.msk [vmem:[#allocation3 + $0x1c0] sm:$0xff] %vm2296, %v2217
  %2354 = vst.msk [vmem:[#allocation3 + $0x1c8] sm:$0xff] %vm2296, %v2219
  %2355 = vst.msk [vmem:[#allocation3 + $0x1d0] sm:$0xff] %vm2296, %v2221
  %2356 = vst.msk [vmem:[#allocation3 + $0x1d8] sm:$0xff] %vm2296, %v2223
  %2357 = vst.msk [vmem:[#allocation3 + $0x1e0] sm:$0xff] %vm2296, %v2225
  %2358 = vst.msk [vmem:[#allocation3 + $0x1e8] sm:$0xff] %vm2296, %v2227
  %2359 = vst.msk [vmem:[#allocation3 + $0x1f0] sm:$0xff] %vm2296, %v2229
  %2360 = vst.msk [vmem:[#allocation3 + $0x1f8] sm:$0xff] %vm2296, %v2231
  %s2361 = scalar_lea.vmem [#allocation2], 48
  %v2362 = vld [vmem:[%s2361] sm:$0xff]
  %v2363 = vld [vmem:[%s2361 + $0x8] sm:$0xff]
  %v2364 = vld [vmem:[%s2361 + $0x18] sm:$0xff]
  %v2365 = vld [vmem:[%s2361 + $0x20] sm:$0xff]
  %v2366 = vld [vmem:[%s2361 + $0x30] sm:$0xff]
  %v2367 = vld [vmem:[%s2361 + $0x38] sm:$0xff]
  %v2368 = vld [vmem:[%s2361 + $0x48] sm:$0xff]
  %v2369 = vld [vmem:[%s2361 + $0x50] sm:$0xff]
  %v2370 = vld [vmem:[%s2361 + $0x60] sm:$0xff]
  %v2371 = vld [vmem:[%s2361 + $0x68] sm:$0xff]
  %v2372 = vld [vmem:[%s2361 + $0x78] sm:$0xff]
  %v2373 = vld [vmem:[%s2361 + $0x80] sm:$0xff]
  %v2374 = vld [vmem:[%s2361 + $0x90] sm:$0xff]
  %v2375 = vld [vmem:[%s2361 + $0x98] sm:$0xff]
  %v2376 = vld [vmem:[%s2361 + $0xa8] sm:$0xff]
  %v2377 = vld [vmem:[%s2361 + $0xb0] sm:$0xff]
  %v2378 = vld [vmem:[%s2361 + $0xc0] sm:$0xff]
  %v2379 = vld [vmem:[%s2361 + $0xc8] sm:$0xff]
  %v2380 = vld [vmem:[%s2361 + $0xd8] sm:$0xff]
  %v2381 = vld [vmem:[%s2361 + $0xe0] sm:$0xff]
  %v2382 = vld [vmem:[%s2361 + $0xf0] sm:$0xff]
  %v2383 = vld [vmem:[%s2361 + $0xf8] sm:$0xff]
  %v2384 = vld [vmem:[%s2361 + $0x108] sm:$0xff]
  %v2385 = vld [vmem:[%s2361 + $0x110] sm:$0xff]
  %v2386 = vld [vmem:[%s2361 + $0x120] sm:$0xff]
  %v2387 = vld [vmem:[%s2361 + $0x128] sm:$0xff]
  %v2388 = vld [vmem:[%s2361 + $0x138] sm:$0xff]
  %v2389 = vld [vmem:[%s2361 + $0x140] sm:$0xff]
  %v2390 = vld [vmem:[%s2361 + $0x150] sm:$0xff]
  %v2391 = vld [vmem:[%s2361 + $0x158] sm:$0xff]
  %v2392 = vld [vmem:[%s2361 + $0x168] sm:$0xff]
  %v2393 = vld [vmem:[%s2361 + $0x170] sm:$0xff]
  %v2394 = vld [vmem:[%s2361 + $0x1b0] sm:$0xff]
  %v2395 = vld [vmem:[%s2361 + $0x1b8] sm:$0xff]
  %v2396 = vld [vmem:[%s2361 + $0x1c8] sm:$0xff]
  %v2397 = vld [vmem:[%s2361 + $0x1d0] sm:$0xff]
  %v2398 = vld [vmem:[%s2361 + $0x1e0] sm:$0xff]
  %v2399 = vld [vmem:[%s2361 + $0x1e8] sm:$0xff]
  %v2400 = vld [vmem:[%s2361 + $0x1f8] sm:$0xff]
  %v2401 = vld [vmem:[%s2361 + $0x200] sm:$0xff]
  %v2402 = vld [vmem:[%s2361 + $0x210] sm:$0xff]
  %v2403 = vld [vmem:[%s2361 + $0x218] sm:$0xff]
  %v2404 = vld [vmem:[%s2361 + $0x228] sm:$0xff]
  %v2405 = vld [vmem:[%s2361 + $0x230] sm:$0xff]
  %v2406 = vld [vmem:[%s2361 + $0x240] sm:$0xff]
  %v2407 = vld [vmem:[%s2361 + $0x248] sm:$0xff]
  %v2408 = vld [vmem:[%s2361 + $0x258] sm:$0xff]
  %v2409 = vld [vmem:[%s2361 + $0x260] sm:$0xff]
  %v2410 = vld [vmem:[%s2361 + $0x270] sm:$0xff]
  %v2411 = vld [vmem:[%s2361 + $0x278] sm:$0xff]
  %v2412 = vld [vmem:[%s2361 + $0x288] sm:$0xff]
  %v2413 = vld [vmem:[%s2361 + $0x290] sm:$0xff]
  %v2414 = vld [vmem:[%s2361 + $0x2a0] sm:$0xff]
  %v2415 = vld [vmem:[%s2361 + $0x2a8] sm:$0xff]
  %v2416 = vld [vmem:[%s2361 + $0x2b8] sm:$0xff]
  %v2417 = vld [vmem:[%s2361 + $0x2c0] sm:$0xff]
  %v2418 = vld [vmem:[%s2361 + $0x2d0] sm:$0xff]
  %v2419 = vld [vmem:[%s2361 + $0x2d8] sm:$0xff]
  %v2420 = vld [vmem:[%s2361 + $0x2e8] sm:$0xff]
  %v2421 = vld [vmem:[%s2361 + $0x2f0] sm:$0xff]
  %v2422 = vld [vmem:[%s2361 + $0x300] sm:$0xff]
  %v2423 = vld [vmem:[%s2361 + $0x308] sm:$0xff]
  %v2424 = vld [vmem:[%s2361 + $0x318] sm:$0xff]
  %v2425 = vld [vmem:[%s2361 + $0x320] sm:$0xff]
  %2490 = vrot.lane.b32.xlu0 %v2362, 24
  %v2491 = vpop.permute.xlu0 %2490
  %2492 = vrot.lane.b32.xlu0 %v2363, 24
  %v2493 = vpop.permute.xlu0 %2492
  %2494 = vrot.lane.b32.xlu0 %v2364, 24
  %v2495 = vpop.permute.xlu0 %2494
  %2496 = vrot.lane.b32.xlu0 %v2365, 24
  %v2497 = vpop.permute.xlu0 %2496
  %2498 = vrot.lane.b32.xlu0 %v2366, 24
  %v2499 = vpop.permute.xlu0 %2498
  %2500 = vrot.lane.b32.xlu0 %v2367, 24
  %v2501 = vpop.permute.xlu0 %2500
  %2502 = vrot.lane.b32.xlu0 %v2368, 24
  %v2503 = vpop.permute.xlu0 %2502
  %2504 = vrot.lane.b32.xlu0 %v2369, 24
  %v2505 = vpop.permute.xlu0 %2504
  %2506 = vrot.lane.b32.xlu0 %v2370, 24
  %v2507 = vpop.permute.xlu0 %2506
  %2508 = vrot.lane.b32.xlu0 %v2371, 24
  %v2509 = vpop.permute.xlu0 %2508
  %2510 = vrot.lane.b32.xlu0 %v2372, 24
  %v2511 = vpop.permute.xlu0 %2510
  %2512 = vrot.lane.b32.xlu0 %v2373, 24
  %v2513 = vpop.permute.xlu0 %2512
  %2514 = vrot.lane.b32.xlu0 %v2374, 24
  %v2515 = vpop.permute.xlu0 %2514
  %2516 = vrot.lane.b32.xlu0 %v2375, 24
  %v2517 = vpop.permute.xlu0 %2516
  %2518 = vrot.lane.b32.xlu0 %v2376, 24
  %v2519 = vpop.permute.xlu0 %2518
  %2520 = vrot.lane.b32.xlu0 %v2377, 24
  %v2521 = vpop.permute.xlu0 %2520
  %2522 = vrot.lane.b32.xlu0 %v2378, 24
  %v2523 = vpop.permute.xlu0 %2522
  %2524 = vrot.lane.b32.xlu0 %v2379, 24
  %v2525 = vpop.permute.xlu0 %2524
  %2526 = vrot.lane.b32.xlu0 %v2380, 24
  %v2527 = vpop.permute.xlu0 %2526
  %2528 = vrot.lane.b32.xlu0 %v2381, 24
  %v2529 = vpop.permute.xlu0 %2528
  %2530 = vrot.lane.b32.xlu0 %v2382, 24
  %v2531 = vpop.permute.xlu0 %2530
  %2532 = vrot.lane.b32.xlu0 %v2383, 24
  %v2533 = vpop.permute.xlu0 %2532
  %2534 = vrot.lane.b32.xlu0 %v2384, 24
  %v2535 = vpop.permute.xlu0 %2534
  %2536 = vrot.lane.b32.xlu0 %v2385, 24
  %v2537 = vpop.permute.xlu0 %2536
  %2538 = vrot.lane.b32.xlu0 %v2386, 24
  %v2539 = vpop.permute.xlu0 %2538
  %2540 = vrot.lane.b32.xlu0 %v2387, 24
  %v2541 = vpop.permute.xlu0 %2540
  %2542 = vrot.lane.b32.xlu0 %v2388, 24
  %v2543 = vpop.permute.xlu0 %2542
  %2544 = vrot.lane.b32.xlu0 %v2389, 24
  %v2545 = vpop.permute.xlu0 %2544
  %2546 = vrot.lane.b32.xlu0 %v2390, 24
  %v2547 = vpop.permute.xlu0 %2546
  %2548 = vrot.lane.b32.xlu0 %v2391, 24
  %v2549 = vpop.permute.xlu0 %2548
  %2550 = vrot.lane.b32.xlu0 %v2392, 24
  %v2551 = vpop.permute.xlu0 %2550
  %2552 = vrot.lane.b32.xlu0 %v2393, 24
  %v2553 = vpop.permute.xlu0 %2552
  %2554 = vrot.lane.b32.xlu0 %v2394, 24
  %v2555 = vpop.permute.xlu0 %2554
  %2556 = vrot.lane.b32.xlu0 %v2395, 24
  %v2557 = vpop.permute.xlu0 %2556
  %2558 = vrot.lane.b32.xlu0 %v2396, 24
  %v2559 = vpop.permute.xlu0 %2558
  %2560 = vrot.lane.b32.xlu0 %v2397, 24
  %v2561 = vpop.permute.xlu0 %2560
  %2562 = vrot.lane.b32.xlu0 %v2398, 24
  %v2563 = vpop.permute.xlu0 %2562
  %2564 = vrot.lane.b32.xlu0 %v2399, 24
  %v2565 = vpop.permute.xlu0 %2564
  %2566 = vrot.lane.b32.xlu0 %v2400, 24
  %v2567 = vpop.permute.xlu0 %2566
  %2568 = vrot.lane.b32.xlu0 %v2401, 24
  %v2569 = vpop.permute.xlu0 %2568
  %2570 = vrot.lane.b32.xlu0 %v2402, 24
  %v2571 = vpop.permute.xlu0 %2570
  %2572 = vrot.lane.b32.xlu0 %v2403, 24
  %v2573 = vpop.permute.xlu0 %2572
  %2574 = vrot.lane.b32.xlu0 %v2404, 24
  %v2575 = vpop.permute.xlu0 %2574
  %2576 = vrot.lane.b32.xlu0 %v2405, 24
  %v2577 = vpop.permute.xlu0 %2576
  %2578 = vrot.lane.b32.xlu0 %v2406, 24
  %v2579 = vpop.permute.xlu0 %2578
  %2580 = vrot.lane.b32.xlu0 %v2407, 24
  %v2581 = vpop.permute.xlu0 %2580
  %2582 = vrot.lane.b32.xlu0 %v2408, 24
  %v2583 = vpop.permute.xlu0 %2582
  %2584 = vrot.lane.b32.xlu0 %v2409, 24
  %v2585 = vpop.permute.xlu0 %2584
  %2586 = vrot.lane.b32.xlu0 %v2410, 24
  %v2587 = vpop.permute.xlu0 %2586
  %2588 = vrot.lane.b32.xlu0 %v2411, 24
  %v2589 = vpop.permute.xlu0 %2588
  %2590 = vrot.lane.b32.xlu0 %v2412, 24
  %v2591 = vpop.permute.xlu0 %2590
  %2592 = vrot.lane.b32.xlu0 %v2413, 24
  %v2593 = vpop.permute.xlu0 %2592
  %2594 = vrot.lane.b32.xlu0 %v2414, 24
  %v2595 = vpop.permute.xlu0 %2594
  %2596 = vrot.lane.b32.xlu0 %v2415, 24
  %v2597 = vpop.permute.xlu0 %2596
  %2598 = vrot.lane.b32.xlu0 %v2416, 24
  %v2599 = vpop.permute.xlu0 %2598
  %2600 = vrot.lane.b32.xlu0 %v2417, 24
  %v2601 = vpop.permute.xlu0 %2600
  %2602 = vrot.lane.b32.xlu0 %v2418, 24
  %v2603 = vpop.permute.xlu0 %2602
  %2604 = vrot.lane.b32.xlu0 %v2419, 24
  %v2605 = vpop.permute.xlu0 %2604
  %2606 = vrot.lane.b32.xlu0 %v2420, 24
  %v2607 = vpop.permute.xlu0 %2606
  %2608 = vrot.lane.b32.xlu0 %v2421, 24
  %v2609 = vpop.permute.xlu0 %2608
  %2610 = vrot.lane.b32.xlu0 %v2422, 24
  %v2611 = vpop.permute.xlu0 %2610
  %2612 = vrot.lane.b32.xlu0 %v2423, 24
  %v2613 = vpop.permute.xlu0 %2612
  %2614 = vrot.lane.b32.xlu0 %v2424, 24
  %v2615 = vpop.permute.xlu0 %2614
  %2616 = vrot.lane.b32.xlu0 %v2425, 24
  %v2617 = vpop.permute.xlu0 %2616
  %vm2682 = vcmask 228544
  %2683 = vst.msk [vmem:[#allocation3] sm:$0xff] %vm2682, %v2491
  %2684 = vst.msk [vmem:[#allocation3 + $0x8] sm:$0xff] %vm2682, %v2493
  %2685 = vst.msk [vmem:[#allocation3 + $0x10] sm:$0xff] %vm2682, %v2495
  %2686 = vst.msk [vmem:[#allocation3 + $0x18] sm:$0xff] %vm2682, %v2497
  %2687 = vst.msk [vmem:[#allocation3 + $0x20] sm:$0xff] %vm2682, %v2499
  %2688 = vst.msk [vmem:[#allocation3 + $0x28] sm:$0xff] %vm2682, %v2501
  %2689 = vst.msk [vmem:[#allocation3 + $0x30] sm:$0xff] %vm2682, %v2503
  %2690 = vst.msk [vmem:[#allocation3 + $0x38] sm:$0xff] %vm2682, %v2505
  %2691 = vst.msk [vmem:[#allocation3 + $0x40] sm:$0xff] %vm2682, %v2507
  %2692 = vst.msk [vmem:[#allocation3 + $0x48] sm:$0xff] %vm2682, %v2509
  %2693 = vst.msk [vmem:[#allocation3 + $0x50] sm:$0xff] %vm2682, %v2511
  %2694 = vst.msk [vmem:[#allocation3 + $0x58] sm:$0xff] %vm2682, %v2513
  %2695 = vst.msk [vmem:[#allocation3 + $0x60] sm:$0xff] %vm2682, %v2515
  %2696 = vst.msk [vmem:[#allocation3 + $0x68] sm:$0xff] %vm2682, %v2517
  %2697 = vst.msk [vmem:[#allocation3 + $0x70] sm:$0xff] %vm2682, %v2519
  %2698 = vst.msk [vmem:[#allocation3 + $0x78] sm:$0xff] %vm2682, %v2521
  %2699 = vst.msk [vmem:[#allocation3 + $0x80] sm:$0xff] %vm2682, %v2523
  %2700 = vst.msk [vmem:[#allocation3 + $0x88] sm:$0xff] %vm2682, %v2525
  %2701 = vst.msk [vmem:[#allocation3 + $0x90] sm:$0xff] %vm2682, %v2527
  %2702 = vst.msk [vmem:[#allocation3 + $0x98] sm:$0xff] %vm2682, %v2529
  %2703 = vst.msk [vmem:[#allocation3 + $0xa0] sm:$0xff] %vm2682, %v2531
  %2704 = vst.msk [vmem:[#allocation3 + $0xa8] sm:$0xff] %vm2682, %v2533
  %2705 = vst.msk [vmem:[#allocation3 + $0xb0] sm:$0xff] %vm2682, %v2535
  %2706 = vst.msk [vmem:[#allocation3 + $0xb8] sm:$0xff] %vm2682, %v2537
  %2707 = vst.msk [vmem:[#allocation3 + $0xc0] sm:$0xff] %vm2682, %v2539
  %2708 = vst.msk [vmem:[#allocation3 + $0xc8] sm:$0xff] %vm2682, %v2541
  %2709 = vst.msk [vmem:[#allocation3 + $0xd0] sm:$0xff] %vm2682, %v2543
  %2710 = vst.msk [vmem:[#allocation3 + $0xd8] sm:$0xff] %vm2682, %v2545
  %2711 = vst.msk [vmem:[#allocation3 + $0xe0] sm:$0xff] %vm2682, %v2547
  %2712 = vst.msk [vmem:[#allocation3 + $0xe8] sm:$0xff] %vm2682, %v2549
  %2713 = vst.msk [vmem:[#allocation3 + $0xf0] sm:$0xff] %vm2682, %v2551
  %2714 = vst.msk [vmem:[#allocation3 + $0xf8] sm:$0xff] %vm2682, %v2553
  %2715 = vst.msk [vmem:[#allocation3 + $0x100] sm:$0xff] %vm2682, %v2555
  %2716 = vst.msk [vmem:[#allocation3 + $0x108] sm:$0xff] %vm2682, %v2557
  %2717 = vst.msk [vmem:[#allocation3 + $0x110] sm:$0xff] %vm2682, %v2559
  %2718 = vst.msk [vmem:[#allocation3 + $0x118] sm:$0xff] %vm2682, %v2561
  %2719 = vst.msk [vmem:[#allocation3 + $0x120] sm:$0xff] %vm2682, %v2563
  %2720 = vst.msk [vmem:[#allocation3 + $0x128] sm:$0xff] %vm2682, %v2565
  %2721 = vst.msk [vmem:[#allocation3 + $0x130] sm:$0xff] %vm2682, %v2567
  %2722 = vst.msk [vmem:[#allocation3 + $0x138] sm:$0xff] %vm2682, %v2569
  %2723 = vst.msk [vmem:[#allocation3 + $0x140] sm:$0xff] %vm2682, %v2571
  %2724 = vst.msk [vmem:[#allocation3 + $0x148] sm:$0xff] %vm2682, %v2573
  %2725 = vst.msk [vmem:[#allocation3 + $0x150] sm:$0xff] %vm2682, %v2575
  %2726 = vst.msk [vmem:[#allocation3 + $0x158] sm:$0xff] %vm2682, %v2577
  %2727 = vst.msk [vmem:[#allocation3 + $0x160] sm:$0xff] %vm2682, %v2579
  %2728 = vst.msk [vmem:[#allocation3 + $0x168] sm:$0xff] %vm2682, %v2581
  %2729 = vst.msk [vmem:[#allocation3 + $0x170] sm:$0xff] %vm2682, %v2583
  %2730 = vst.msk [vmem:[#allocation3 + $0x178] sm:$0xff] %vm2682, %v2585
  %2731 = vst.msk [vmem:[#allocation3 + $0x180] sm:$0xff] %vm2682, %v2587
  %2732 = vst.msk [vmem:[#allocation3 + $0x188] sm:$0xff] %vm2682, %v2589
  %2733 = vst.msk [vmem:[#allocation3 + $0x190] sm:$0xff] %vm2682, %v2591
  %2734 = vst.msk [vmem:[#allocation3 + $0x198] sm:$0xff] %vm2682, %v2593
  %2735 = vst.msk [vmem:[#allocation3 + $0x1a0] sm:$0xff] %vm2682, %v2595
  %2736 = vst.msk [vmem:[#allocation3 + $0x1a8] sm:$0xff] %vm2682, %v2597
  %2737 = vst.msk [vmem:[#allocation3 + $0x1b0] sm:$0xff] %vm2682, %v2599
  %2738 = vst.msk [vmem:[#allocation3 + $0x1b8] sm:$0xff] %vm2682, %v2601
  %2739 = vst.msk [vmem:[#allocation3 + $0x1c0] sm:$0xff] %vm2682, %v2603
  %2740 = vst.msk [vmem:[#allocation3 + $0x1c8] sm:$0xff] %vm2682, %v2605
  %2741 = vst.msk [vmem:[#allocation3 + $0x1d0] sm:$0xff] %vm2682, %v2607
  %2742 = vst.msk [vmem:[#allocation3 + $0x1d8] sm:$0xff] %vm2682, %v2609
  %2743 = vst.msk [vmem:[#allocation3 + $0x1e0] sm:$0xff] %vm2682, %v2611
  %2744 = vst.msk [vmem:[#allocation3 + $0x1e8] sm:$0xff] %vm2682, %v2613
  %2745 = vst.msk [vmem:[#allocation3 + $0x1f0] sm:$0xff] %vm2682, %v2615
  %2746 = vst.msk [vmem:[#allocation3 + $0x1f8] sm:$0xff] %vm2682, %v2617
  %v2747 = vld [vmem:[%s2361 + $0x1] sm:$0xff]
  %v2748 = vld [vmem:[%s2361 + $0x9] sm:$0xff]
  %v2749 = vld [vmem:[%s2361 + $0x19] sm:$0xff]
  %v2750 = vld [vmem:[%s2361 + $0x21] sm:$0xff]
  %v2751 = vld [vmem:[%s2361 + $0x31] sm:$0xff]
  %v2752 = vld [vmem:[%s2361 + $0x39] sm:$0xff]
  %v2753 = vld [vmem:[%s2361 + $0x49] sm:$0xff]
  %v2754 = vld [vmem:[%s2361 + $0x51] sm:$0xff]
  %v2755 = vld [vmem:[%s2361 + $0x61] sm:$0xff]
  %v2756 = vld [vmem:[%s2361 + $0x69] sm:$0xff]
  %v2757 = vld [vmem:[%s2361 + $0x79] sm:$0xff]
  %v2758 = vld [vmem:[%s2361 + $0x81] sm:$0xff]
  %v2759 = vld [vmem:[%s2361 + $0x91] sm:$0xff]
  %v2760 = vld [vmem:[%s2361 + $0x99] sm:$0xff]
  %v2761 = vld [vmem:[%s2361 + $0xa9] sm:$0xff]
  %v2762 = vld [vmem:[%s2361 + $0xb1] sm:$0xff]
  %v2763 = vld [vmem:[%s2361 + $0xc1] sm:$0xff]
  %v2764 = vld [vmem:[%s2361 + $0xc9] sm:$0xff]
  %v2765 = vld [vmem:[%s2361 + $0xd9] sm:$0xff]
  %v2766 = vld [vmem:[%s2361 + $0xe1] sm:$0xff]
  %v2767 = vld [vmem:[%s2361 + $0xf1] sm:$0xff]
  %v2768 = vld [vmem:[%s2361 + $0xf9] sm:$0xff]
  %v2769 = vld [vmem:[%s2361 + $0x109] sm:$0xff]
  %v2770 = vld [vmem:[%s2361 + $0x111] sm:$0xff]
  %v2771 = vld [vmem:[%s2361 + $0x121] sm:$0xff]
  %v2772 = vld [vmem:[%s2361 + $0x129] sm:$0xff]
  %v2773 = vld [vmem:[%s2361 + $0x139] sm:$0xff]
  %v2774 = vld [vmem:[%s2361 + $0x141] sm:$0xff]
  %v2775 = vld [vmem:[%s2361 + $0x151] sm:$0xff]
  %v2776 = vld [vmem:[%s2361 + $0x159] sm:$0xff]
  %v2777 = vld [vmem:[%s2361 + $0x169] sm:$0xff]
  %v2778 = vld [vmem:[%s2361 + $0x171] sm:$0xff]
  %v2779 = vld [vmem:[%s2361 + $0x1b1] sm:$0xff]
  %v2780 = vld [vmem:[%s2361 + $0x1b9] sm:$0xff]
  %v2781 = vld [vmem:[%s2361 + $0x1c9] sm:$0xff]
  %v2782 = vld [vmem:[%s2361 + $0x1d1] sm:$0xff]
  %v2783 = vld [vmem:[%s2361 + $0x1e1] sm:$0xff]
  %v2784 = vld [vmem:[%s2361 + $0x1e9] sm:$0xff]
  %v2785 = vld [vmem:[%s2361 + $0x1f9] sm:$0xff]
  %v2786 = vld [vmem:[%s2361 + $0x201] sm:$0xff]
  %v2787 = vld [vmem:[%s2361 + $0x211] sm:$0xff]
  %v2788 = vld [vmem:[%s2361 + $0x219] sm:$0xff]
  %v2789 = vld [vmem:[%s2361 + $0x229] sm:$0xff]
  %v2790 = vld [vmem:[%s2361 + $0x231] sm:$0xff]
  %v2791 = vld [vmem:[%s2361 + $0x241] sm:$0xff]
  %v2792 = vld [vmem:[%s2361 + $0x249] sm:$0xff]
  %v2793 = vld [vmem:[%s2361 + $0x259] sm:$0xff]
  %v2794 = vld [vmem:[%s2361 + $0x261] sm:$0xff]
  %v2795 = vld [vmem:[%s2361 + $0x271] sm:$0xff]
  %v2796 = vld [vmem:[%s2361 + $0x279] sm:$0xff]
  %v2797 = vld [vmem:[%s2361 + $0x289] sm:$0xff]
  %v2798 = vld [vmem:[%s2361 + $0x291] sm:$0xff]
  %v2799 = vld [vmem:[%s2361 + $0x2a1] sm:$0xff]
  %v2800 = vld [vmem:[%s2361 + $0x2a9] sm:$0xff]
  %v2801 = vld [vmem:[%s2361 + $0x2b9] sm:$0xff]
  %v2802 = vld [vmem:[%s2361 + $0x2c1] sm:$0xff]
  %v2803 = vld [vmem:[%s2361 + $0x2d1] sm:$0xff]
  %v2804 = vld [vmem:[%s2361 + $0x2d9] sm:$0xff]
  %v2805 = vld [vmem:[%s2361 + $0x2e9] sm:$0xff]
  %v2806 = vld [vmem:[%s2361 + $0x2f1] sm:$0xff]
  %v2807 = vld [vmem:[%s2361 + $0x301] sm:$0xff]
  %v2808 = vld [vmem:[%s2361 + $0x309] sm:$0xff]
  %v2809 = vld [vmem:[%s2361 + $0x319] sm:$0xff]
  %v2810 = vld [vmem:[%s2361 + $0x321] sm:$0xff]
  %2875 = vrot.lane.b32.xlu0 %v2747, 28
  %v2876 = vpop.permute.xlu0 %2875
  %2877 = vrot.lane.b32.xlu0 %v2748, 28
  %v2878 = vpop.permute.xlu0 %2877
  %2879 = vrot.lane.b32.xlu0 %v2749, 28
  %v2880 = vpop.permute.xlu0 %2879
  %2881 = vrot.lane.b32.xlu0 %v2750, 28
  %v2882 = vpop.permute.xlu0 %2881
  %2883 = vrot.lane.b32.xlu0 %v2751, 28
  %v2884 = vpop.permute.xlu0 %2883
  %2885 = vrot.lane.b32.xlu0 %v2752, 28
  %v2886 = vpop.permute.xlu0 %2885
  %2887 = vrot.lane.b32.xlu0 %v2753, 28
  %v2888 = vpop.permute.xlu0 %2887
  %2889 = vrot.lane.b32.xlu0 %v2754, 28
  %v2890 = vpop.permute.xlu0 %2889
  %2891 = vrot.lane.b32.xlu0 %v2755, 28
  %v2892 = vpop.permute.xlu0 %2891
  %2893 = vrot.lane.b32.xlu0 %v2756, 28
  %v2894 = vpop.permute.xlu0 %2893
  %2895 = vrot.lane.b32.xlu0 %v2757, 28
  %v2896 = vpop.permute.xlu0 %2895
  %2897 = vrot.lane.b32.xlu0 %v2758, 28
  %v2898 = vpop.permute.xlu0 %2897
  %2899 = vrot.lane.b32.xlu0 %v2759, 28
  %v2900 = vpop.permute.xlu0 %2899
  %2901 = vrot.lane.b32.xlu0 %v2760, 28
  %v2902 = vpop.permute.xlu0 %2901
  %2903 = vrot.lane.b32.xlu0 %v2761, 28
  %v2904 = vpop.permute.xlu0 %2903
  %2905 = vrot.lane.b32.xlu0 %v2762, 28
  %v2906 = vpop.permute.xlu0 %2905
  %2907 = vrot.lane.b32.xlu0 %v2763, 28
  %v2908 = vpop.permute.xlu0 %2907
  %2909 = vrot.lane.b32.xlu0 %v2764, 28
  %v2910 = vpop.permute.xlu0 %2909
  %2911 = vrot.lane.b32.xlu0 %v2765, 28
  %v2912 = vpop.permute.xlu0 %2911
  %2913 = vrot.lane.b32.xlu0 %v2766, 28
  %v2914 = vpop.permute.xlu0 %2913
  %2915 = vrot.lane.b32.xlu0 %v2767, 28
  %v2916 = vpop.permute.xlu0 %2915
  %2917 = vrot.lane.b32.xlu0 %v2768, 28
  %v2918 = vpop.permute.xlu0 %2917
  %2919 = vrot.lane.b32.xlu0 %v2769, 28
  %v2920 = vpop.permute.xlu0 %2919
  %2921 = vrot.lane.b32.xlu0 %v2770, 28
  %v2922 = vpop.permute.xlu0 %2921
  %2923 = vrot.lane.b32.xlu0 %v2771, 28
  %v2924 = vpop.permute.xlu0 %2923
  %2925 = vrot.lane.b32.xlu0 %v2772, 28
  %v2926 = vpop.permute.xlu0 %2925
  %2927 = vrot.lane.b32.xlu0 %v2773, 28
  %v2928 = vpop.permute.xlu0 %2927
  %2929 = vrot.lane.b32.xlu0 %v2774, 28
  %v2930 = vpop.permute.xlu0 %2929
  %2931 = vrot.lane.b32.xlu0 %v2775, 28
  %v2932 = vpop.permute.xlu0 %2931
  %2933 = vrot.lane.b32.xlu0 %v2776, 28
  %v2934 = vpop.permute.xlu0 %2933
  %2935 = vrot.lane.b32.xlu0 %v2777, 28
  %v2936 = vpop.permute.xlu0 %2935
  %2937 = vrot.lane.b32.xlu0 %v2778, 28
  %v2938 = vpop.permute.xlu0 %2937
  %2939 = vrot.lane.b32.xlu0 %v2779, 28
  %v2940 = vpop.permute.xlu0 %2939
  %2941 = vrot.lane.b32.xlu0 %v2780, 28
  %v2942 = vpop.permute.xlu0 %2941
  %2943 = vrot.lane.b32.xlu0 %v2781, 28
  %v2944 = vpop.permute.xlu0 %2943
  %2945 = vrot.lane.b32.xlu0 %v2782, 28
  %v2946 = vpop.permute.xlu0 %2945
  %2947 = vrot.lane.b32.xlu0 %v2783, 28
  %v2948 = vpop.permute.xlu0 %2947
  %2949 = vrot.lane.b32.xlu0 %v2784, 28
  %v2950 = vpop.permute.xlu0 %2949
  %2951 = vrot.lane.b32.xlu0 %v2785, 28
  %v2952 = vpop.permute.xlu0 %2951
  %2953 = vrot.lane.b32.xlu0 %v2786, 28
  %v2954 = vpop.permute.xlu0 %2953
  %2955 = vrot.lane.b32.xlu0 %v2787, 28
  %v2956 = vpop.permute.xlu0 %2955
  %2957 = vrot.lane.b32.xlu0 %v2788, 28
  %v2958 = vpop.permute.xlu0 %2957
  %2959 = vrot.lane.b32.xlu0 %v2789, 28
  %v2960 = vpop.permute.xlu0 %2959
  %2961 = vrot.lane.b32.xlu0 %v2790, 28
  %v2962 = vpop.permute.xlu0 %2961
  %2963 = vrot.lane.b32.xlu0 %v2791, 28
  %v2964 = vpop.permute.xlu0 %2963
  %2965 = vrot.lane.b32.xlu0 %v2792, 28
  %v2966 = vpop.permute.xlu0 %2965
  %2967 = vrot.lane.b32.xlu0 %v2793, 28
  %v2968 = vpop.permute.xlu0 %2967
  %2969 = vrot.lane.b32.xlu0 %v2794, 28
  %v2970 = vpop.permute.xlu0 %2969
  %2971 = vrot.lane.b32.xlu0 %v2795, 28
  %v2972 = vpop.permute.xlu0 %2971
  %2973 = vrot.lane.b32.xlu0 %v2796, 28
  %v2974 = vpop.permute.xlu0 %2973
  %2975 = vrot.lane.b32.xlu0 %v2797, 28
  %v2976 = vpop.permute.xlu0 %2975
  %2977 = vrot.lane.b32.xlu0 %v2798, 28
  %v2978 = vpop.permute.xlu0 %2977
  %2979 = vrot.lane.b32.xlu0 %v2799, 28
  %v2980 = vpop.permute.xlu0 %2979
  %2981 = vrot.lane.b32.xlu0 %v2800, 28
  %v2982 = vpop.permute.xlu0 %2981
  %2983 = vrot.lane.b32.xlu0 %v2801, 28
  %v2984 = vpop.permute.xlu0 %2983
  %2985 = vrot.lane.b32.xlu0 %v2802, 28
  %v2986 = vpop.permute.xlu0 %2985
  %2987 = vrot.lane.b32.xlu0 %v2803, 28
  %v2988 = vpop.permute.xlu0 %2987
  %2989 = vrot.lane.b32.xlu0 %v2804, 28
  %v2990 = vpop.permute.xlu0 %2989
  %2991 = vrot.lane.b32.xlu0 %v2805, 28
  %v2992 = vpop.permute.xlu0 %2991
  %2993 = vrot.lane.b32.xlu0 %v2806, 28
  %v2994 = vpop.permute.xlu0 %2993
  %2995 = vrot.lane.b32.xlu0 %v2807, 28
  %v2996 = vpop.permute.xlu0 %2995
  %2997 = vrot.lane.b32.xlu0 %v2808, 28
  %v2998 = vpop.permute.xlu0 %2997
  %2999 = vrot.lane.b32.xlu0 %v2809, 28
  %v3000 = vpop.permute.xlu0 %2999
  %3001 = vrot.lane.b32.xlu0 %v2810, 28
  %v3002 = vpop.permute.xlu0 %3001
  %vm3067 = vcmask 261344
  %3068 = vst.msk [vmem:[#allocation3] sm:$0xff] %vm3067, %v2876
  %3069 = vst.msk [vmem:[#allocation3 + $0x8] sm:$0xff] %vm3067, %v2878
  %3070 = vst.msk [vmem:[#allocation3 + $0x10] sm:$0xff] %vm3067, %v2880
  %3071 = vst.msk [vmem:[#allocation3 + $0x18] sm:$0xff] %vm3067, %v2882
  %3072 = vst.msk [vmem:[#allocation3 + $0x20] sm:$0xff] %vm3067, %v2884
  %3073 = vst.msk [vmem:[#allocation3 + $0x28] sm:$0xff] %vm3067, %v2886
  %3074 = vst.msk [vmem:[#allocation3 + $0x30] sm:$0xff] %vm3067, %v2888
  %3075 = vst.msk [vmem:[#allocation3 + $0x38] sm:$0xff] %vm3067, %v2890
  %3076 = vst.msk [vmem:[#allocation3 + $0x40] sm:$0xff] %vm3067, %v2892
  %3077 = vst.msk [vmem:[#allocation3 + $0x48] sm:$0xff] %vm3067, %v2894
  %3078 = vst.msk [vmem:[#allocation3 + $0x50] sm:$0xff] %vm3067, %v2896
  %3079 = vst.msk [vmem:[#allocation3 + $0x58] sm:$0xff] %vm3067, %v2898
  %3080 = vst.msk [vmem:[#allocation3 + $0x60] sm:$0xff] %vm3067, %v2900
  %3081 = vst.msk [vmem:[#allocation3 + $0x68] sm:$0xff] %vm3067, %v2902
  %3082 = vst.msk [vmem:[#allocation3 + $0x70] sm:$0xff] %vm3067, %v2904
  %3083 = vst.msk [vmem:[#allocation3 + $0x78] sm:$0xff] %vm3067, %v2906
  %3084 = vst.msk [vmem:[#allocation3 + $0x80] sm:$0xff] %vm3067, %v2908
  %3085 = vst.msk [vmem:[#allocation3 + $0x88] sm:$0xff] %vm3067, %v2910
  %3086 = vst.msk [vmem:[#allocation3 + $0x90] sm:$0xff] %vm3067, %v2912
  %3087 = vst.msk [vmem:[#allocation3 + $0x98] sm:$0xff] %vm3067, %v2914
  %3088 = vst.msk [vmem:[#allocation3 + $0xa0] sm:$0xff] %vm3067, %v2916
  %3089 = vst.msk [vmem:[#allocation3 + $0xa8] sm:$0xff] %vm3067, %v2918
  %3090 = vst.msk [vmem:[#allocation3 + $0xb0] sm:$0xff] %vm3067, %v2920
  %3091 = vst.msk [vmem:[#allocation3 + $0xb8] sm:$0xff] %vm3067, %v2922
  %3092 = vst.msk [vmem:[#allocation3 + $0xc0] sm:$0xff] %vm3067, %v2924
  %3093 = vst.msk [vmem:[#allocation3 + $0xc8] sm:$0xff] %vm3067, %v2926
  %3094 = vst.msk [vmem:[#allocation3 + $0xd0] sm:$0xff] %vm3067, %v2928
  %3095 = vst.msk [vmem:[#allocation3 + $0xd8] sm:$0xff] %vm3067, %v2930
  %3096 = vst.msk [vmem:[#allocation3 + $0xe0] sm:$0xff] %vm3067, %v2932
  %3097 = vst.msk [vmem:[#allocation3 + $0xe8] sm:$0xff] %vm3067, %v2934
  %3098 = vst.msk [vmem:[#allocation3 + $0xf0] sm:$0xff] %vm3067, %v2936
  %3099 = vst.msk [vmem:[#allocation3 + $0xf8] sm:$0xff] %vm3067, %v2938
  %3100 = vst.msk [vmem:[#allocation3 + $0x100] sm:$0xff] %vm3067, %v2940
  %3101 = vst.msk [vmem:[#allocation3 + $0x108] sm:$0xff] %vm3067, %v2942
  %3102 = vst.msk [vmem:[#allocation3 + $0x110] sm:$0xff] %vm3067, %v2944
  %3103 = vst.msk [vmem:[#allocation3 + $0x118] sm:$0xff] %vm3067, %v2946
  %3104 = vst.msk [vmem:[#allocation3 + $0x120] sm:$0xff] %vm3067, %v2948
  %3105 = vst.msk [vmem:[#allocation3 + $0x128] sm:$0xff] %vm3067, %v2950
  %3106 = vst.msk [vmem:[#allocation3 + $0x130] sm:$0xff] %vm3067, %v2952
  %3107 = vst.msk [vmem:[#allocation3 + $0x138] sm:$0xff] %vm3067, %v2954
  %3108 = vst.msk [vmem:[#allocation3 + $0x140] sm:$0xff] %vm3067, %v2956
  %3109 = vst.msk [vmem:[#allocation3 + $0x148] sm:$0xff] %vm3067, %v2958
  %3110 = vst.msk [vmem:[#allocation3 + $0x150] sm:$0xff] %vm3067, %v2960
  %3111 = vst.msk [vmem:[#allocation3 + $0x158] sm:$0xff] %vm3067, %v2962
  %3112 = vst.msk [vmem:[#allocation3 + $0x160] sm:$0xff] %vm3067, %v2964
  %3113 = vst.msk [vmem:[#allocation3 + $0x168] sm:$0xff] %vm3067, %v2966
  %3114 = vst.msk [vmem:[#allocation3 + $0x170] sm:$0xff] %vm3067, %v2968
  %3115 = vst.msk [vmem:[#allocation3 + $0x178] sm:$0xff] %vm3067, %v2970
  %3116 = vst.msk [vmem:[#allocation3 + $0x180] sm:$0xff] %vm3067, %v2972
  %3117 = vst.msk [vmem:[#allocation3 + $0x188] sm:$0xff] %vm3067, %v2974
  %3118 = vst.msk [vmem:[#allocation3 + $0x190] sm:$0xff] %vm3067, %v2976
  %3119 = vst.msk [vmem:[#allocation3 + $0x198] sm:$0xff] %vm3067, %v2978
  %3120 = vst.msk [vmem:[#allocation3 + $0x1a0] sm:$0xff] %vm3067, %v2980
  %3121 = vst.msk [vmem:[#allocation3 + $0x1a8] sm:$0xff] %vm3067, %v2982
  %3122 = vst.msk [vmem:[#allocation3 + $0x1b0] sm:$0xff] %vm3067, %v2984
  %3123 = vst.msk [vmem:[#allocation3 + $0x1b8] sm:$0xff] %vm3067, %v2986
  %3124 = vst.msk [vmem:[#allocation3 + $0x1c0] sm:$0xff] %vm3067, %v2988
  %3125 = vst.msk [vmem:[#allocation3 + $0x1c8] sm:$0xff] %vm3067, %v2990
  %3126 = vst.msk [vmem:[#allocation3 + $0x1d0] sm:$0xff] %vm3067, %v2992
  %3127 = vst.msk [vmem:[#allocation3 + $0x1d8] sm:$0xff] %vm3067, %v2994
  %3128 = vst.msk [vmem:[#allocation3 + $0x1e0] sm:$0xff] %vm3067, %v2996
  %3129 = vst.msk [vmem:[#allocation3 + $0x1e8] sm:$0xff] %vm3067, %v2998
  %3130 = vst.msk [vmem:[#allocation3 + $0x1f0] sm:$0xff] %vm3067, %v3000
  %3131 = vst.msk [vmem:[#allocation3 + $0x1f8] sm:$0xff] %vm3067, %v3002
  %v3132 = vld [vmem:[%s2361 + $0x2] sm:$0xff]
  %v3133 = vld [vmem:[%s2361 + $0xa] sm:$0xff]
  %v3134 = vld [vmem:[%s2361 + $0x1a] sm:$0xff]
  %v3135 = vld [vmem:[%s2361 + $0x22] sm:$0xff]
  %v3136 = vld [vmem:[%s2361 + $0x32] sm:$0xff]
  %v3137 = vld [vmem:[%s2361 + $0x3a] sm:$0xff]
  %v3138 = vld [vmem:[%s2361 + $0x4a] sm:$0xff]
  %v3139 = vld [vmem:[%s2361 + $0x52] sm:$0xff]
  %v3140 = vld [vmem:[%s2361 + $0x62] sm:$0xff]
  %v3141 = vld [vmem:[%s2361 + $0x6a] sm:$0xff]
  %v3142 = vld [vmem:[%s2361 + $0x7a] sm:$0xff]
  %v3143 = vld [vmem:[%s2361 + $0x82] sm:$0xff]
  %v3144 = vld [vmem:[%s2361 + $0x92] sm:$0xff]
  %v3145 = vld [vmem:[%s2361 + $0x9a] sm:$0xff]
  %v3146 = vld [vmem:[%s2361 + $0xaa] sm:$0xff]
  %v3147 = vld [vmem:[%s2361 + $0xb2] sm:$0xff]
  %v3148 = vld [vmem:[%s2361 + $0xc2] sm:$0xff]
  %v3149 = vld [vmem:[%s2361 + $0xca] sm:$0xff]
  %v3150 = vld [vmem:[%s2361 + $0xda] sm:$0xff]
  %v3151 = vld [vmem:[%s2361 + $0xe2] sm:$0xff]
  %v3152 = vld [vmem:[%s2361 + $0xf2] sm:$0xff]
  %v3153 = vld [vmem:[%s2361 + $0xfa] sm:$0xff]
  %v3154 = vld [vmem:[%s2361 + $0x10a] sm:$0xff]
  %v3155 = vld [vmem:[%s2361 + $0x112] sm:$0xff]
  %v3156 = vld [vmem:[%s2361 + $0x122] sm:$0xff]
  %v3157 = vld [vmem:[%s2361 + $0x12a] sm:$0xff]
  %v3158 = vld [vmem:[%s2361 + $0x13a] sm:$0xff]
  %v3159 = vld [vmem:[%s2361 + $0x142] sm:$0xff]
  %v3160 = vld [vmem:[%s2361 + $0x152] sm:$0xff]
  %v3161 = vld [vmem:[%s2361 + $0x15a] sm:$0xff]
  %v3162 = vld [vmem:[%s2361 + $0x16a] sm:$0xff]
  %v3163 = vld [vmem:[%s2361 + $0x172] sm:$0xff]
  %v3164 = vld [vmem:[%s2361 + $0x1b2] sm:$0xff]
  %v3165 = vld [vmem:[%s2361 + $0x1ba] sm:$0xff]
  %v3166 = vld [vmem:[%s2361 + $0x1ca] sm:$0xff]
  %v3167 = vld [vmem:[%s2361 + $0x1d2] sm:$0xff]
  %v3168 = vld [vmem:[%s2361 + $0x1e2] sm:$0xff]
  %v3169 = vld [vmem:[%s2361 + $0x1ea] sm:$0xff]
  %v3170 = vld [vmem:[%s2361 + $0x1fa] sm:$0xff]
  %v3171 = vld [vmem:[%s2361 + $0x202] sm:$0xff]
  %v3172 = vld [vmem:[%s2361 + $0x212] sm:$0xff]
  %v3173 = vld [vmem:[%s2361 + $0x21a] sm:$0xff]
  %v3174 = vld [vmem:[%s2361 + $0x22a] sm:$0xff]
  %v3175 = vld [vmem:[%s2361 + $0x232] sm:$0xff]
  %v3176 = vld [vmem:[%s2361 + $0x242] sm:$0xff]
  %v3177 = vld [vmem:[%s2361 + $0x24a] sm:$0xff]
  %v3178 = vld [vmem:[%s2361 + $0x25a] sm:$0xff]
  %v3179 = vld [vmem:[%s2361 + $0x262] sm:$0xff]
  %v3180 = vld [vmem:[%s2361 + $0x272] sm:$0xff]
  %v3181 = vld [vmem:[%s2361 + $0x27a] sm:$0xff]
  %v3182 = vld [vmem:[%s2361 + $0x28a] sm:$0xff]
  %v3183 = vld [vmem:[%s2361 + $0x292] sm:$0xff]
  %v3184 = vld [vmem:[%s2361 + $0x2a2] sm:$0xff]
  %v3185 = vld [vmem:[%s2361 + $0x2aa] sm:$0xff]
  %v3186 = vld [vmem:[%s2361 + $0x2ba] sm:$0xff]
  %v3187 = vld [vmem:[%s2361 + $0x2c2] sm:$0xff]
  %v3188 = vld [vmem:[%s2361 + $0x2d2] sm:$0xff]
  %v3189 = vld [vmem:[%s2361 + $0x2da] sm:$0xff]
  %v3190 = vld [vmem:[%s2361 + $0x2ea] sm:$0xff]
  %v3191 = vld [vmem:[%s2361 + $0x2f2] sm:$0xff]
  %v3192 = vld [vmem:[%s2361 + $0x302] sm:$0xff]
  %v3193 = vld [vmem:[%s2361 + $0x30a] sm:$0xff]
  %v3194 = vld [vmem:[%s2361 + $0x31a] sm:$0xff]
  %v3195 = vld [vmem:[%s2361 + $0x322] sm:$0xff]
  %3260 = vrot.lane.b32.xlu0 %v3132, 32
  %v3261 = vpop.permute.xlu0 %3260
  %3262 = vrot.lane.b32.xlu0 %v3133, 32
  %v3263 = vpop.permute.xlu0 %3262
  %3264 = vrot.lane.b32.xlu0 %v3134, 32
  %v3265 = vpop.permute.xlu0 %3264
  %3266 = vrot.lane.b32.xlu0 %v3135, 32
  %v3267 = vpop.permute.xlu0 %3266
  %3268 = vrot.lane.b32.xlu0 %v3136, 32
  %v3269 = vpop.permute.xlu0 %3268
  %3270 = vrot.lane.b32.xlu0 %v3137, 32
  %v3271 = vpop.permute.xlu0 %3270
  %3272 = vrot.lane.b32.xlu0 %v3138, 32
  %v3273 = vpop.permute.xlu0 %3272
  %3274 = vrot.lane.b32.xlu0 %v3139, 32
  %v3275 = vpop.permute.xlu0 %3274
  %3276 = vrot.lane.b32.xlu0 %v3140, 32
  %v3277 = vpop.permute.xlu0 %3276
  %3278 = vrot.lane.b32.xlu0 %v3141, 32
  %v3279 = vpop.permute.xlu0 %3278
  %3280 = vrot.lane.b32.xlu0 %v3142, 32
  %v3281 = vpop.permute.xlu0 %3280
  %3282 = vrot.lane.b32.xlu0 %v3143, 32
  %v3283 = vpop.permute.xlu0 %3282
  %3284 = vrot.lane.b32.xlu0 %v3144, 32
  %v3285 = vpop.permute.xlu0 %3284
  %3286 = vrot.lane.b32.xlu0 %v3145, 32
  %v3287 = vpop.permute.xlu0 %3286
  %3288 = vrot.lane.b32.xlu0 %v3146, 32
  %v3289 = vpop.permute.xlu0 %3288
  %3290 = vrot.lane.b32.xlu0 %v3147, 32
  %v3291 = vpop.permute.xlu0 %3290
  %3292 = vrot.lane.b32.xlu0 %v3148, 32
  %v3293 = vpop.permute.xlu0 %3292
  %3294 = vrot.lane.b32.xlu0 %v3149, 32
  %v3295 = vpop.permute.xlu0 %3294
  %3296 = vrot.lane.b32.xlu0 %v3150, 32
  %v3297 = vpop.permute.xlu0 %3296
  %3298 = vrot.lane.b32.xlu0 %v3151, 32
  %v3299 = vpop.permute.xlu0 %3298
  %3300 = vrot.lane.b32.xlu0 %v3152, 32
  %v3301 = vpop.permute.xlu0 %3300
  %3302 = vrot.lane.b32.xlu0 %v3153, 32
  %v3303 = vpop.permute.xlu0 %3302
  %3304 = vrot.lane.b32.xlu0 %v3154, 32
  %v3305 = vpop.permute.xlu0 %3304
  %3306 = vrot.lane.b32.xlu0 %v3155, 32
  %v3307 = vpop.permute.xlu0 %3306
  %3308 = vrot.lane.b32.xlu0 %v3156, 32
  %v3309 = vpop.permute.xlu0 %3308
  %3310 = vrot.lane.b32.xlu0 %v3157, 32
  %v3311 = vpop.permute.xlu0 %3310
  %3312 = vrot.lane.b32.xlu0 %v3158, 32
  %v3313 = vpop.permute.xlu0 %3312
  %3314 = vrot.lane.b32.xlu0 %v3159, 32
  %v3315 = vpop.permute.xlu0 %3314
  %3316 = vrot.lane.b32.xlu0 %v3160, 32
  %v3317 = vpop.permute.xlu0 %3316
  %3318 = vrot.lane.b32.xlu0 %v3161, 32
  %v3319 = vpop.permute.xlu0 %3318
  %3320 = vrot.lane.b32.xlu0 %v3162, 32
  %v3321 = vpop.permute.xlu0 %3320
  %3322 = vrot.lane.b32.xlu0 %v3163, 32
  %v3323 = vpop.permute.xlu0 %3322
  %3324 = vrot.lane.b32.xlu0 %v3164, 32
  %v3325 = vpop.permute.xlu0 %3324
  %3326 = vrot.lane.b32.xlu0 %v3165, 32
  %v3327 = vpop.permute.xlu0 %3326
  %3328 = vrot.lane.b32.xlu0 %v3166, 32
  %v3329 = vpop.permute.xlu0 %3328
  %3330 = vrot.lane.b32.xlu0 %v3167, 32
  %v3331 = vpop.permute.xlu0 %3330
  %3332 = vrot.lane.b32.xlu0 %v3168, 32
  %v3333 = vpop.permute.xlu0 %3332
  %3334 = vrot.lane.b32.xlu0 %v3169, 32
  %v3335 = vpop.permute.xlu0 %3334
  %3336 = vrot.lane.b32.xlu0 %v3170, 32
  %v3337 = vpop.permute.xlu0 %3336
  %3338 = vrot.lane.b32.xlu0 %v3171, 32
  %v3339 = vpop.permute.xlu0 %3338
  %3340 = vrot.lane.b32.xlu0 %v3172, 32
  %v3341 = vpop.permute.xlu0 %3340
  %3342 = vrot.lane.b32.xlu0 %v3173, 32
  %v3343 = vpop.permute.xlu0 %3342
  %3344 = vrot.lane.b32.xlu0 %v3174, 32
  %v3345 = vpop.permute.xlu0 %3344
  %3346 = vrot.lane.b32.xlu0 %v3175, 32
  %v3347 = vpop.permute.xlu0 %3346
  %3348 = vrot.lane.b32.xlu0 %v3176, 32
  %v3349 = vpop.permute.xlu0 %3348
  %3350 = vrot.lane.b32.xlu0 %v3177, 32
  %v3351 = vpop.permute.xlu0 %3350
  %3352 = vrot.lane.b32.xlu0 %v3178, 32
  %v3353 = vpop.permute.xlu0 %3352
  %3354 = vrot.lane.b32.xlu0 %v3179, 32
  %v3355 = vpop.permute.xlu0 %3354
  %3356 = vrot.lane.b32.xlu0 %v3180, 32
  %v3357 = vpop.permute.xlu0 %3356
  %3358 = vrot.lane.b32.xlu0 %v3181, 32
  %v3359 = vpop.permute.xlu0 %3358
  %3360 = vrot.lane.b32.xlu0 %v3182, 32
  %v3361 = vpop.permute.xlu0 %3360
  %3362 = vrot.lane.b32.xlu0 %v3183, 32
  %v3363 = vpop.permute.xlu0 %3362
  %3364 = vrot.lane.b32.xlu0 %v3184, 32
  %v3365 = vpop.permute.xlu0 %3364
  %3366 = vrot.lane.b32.xlu0 %v3185, 32
  %v3367 = vpop.permute.xlu0 %3366
  %3368 = vrot.lane.b32.xlu0 %v3186, 32
  %v3369 = vpop.permute.xlu0 %3368
  %3370 = vrot.lane.b32.xlu0 %v3187, 32
  %v3371 = vpop.permute.xlu0 %3370
  %3372 = vrot.lane.b32.xlu0 %v3188, 32
  %v3373 = vpop.permute.xlu0 %3372
  %3374 = vrot.lane.b32.xlu0 %v3189, 32
  %v3375 = vpop.permute.xlu0 %3374
  %3376 = vrot.lane.b32.xlu0 %v3190, 32
  %v3377 = vpop.permute.xlu0 %3376
  %3378 = vrot.lane.b32.xlu0 %v3191, 32
  %v3379 = vpop.permute.xlu0 %3378
  %3380 = vrot.lane.b32.xlu0 %v3192, 32
  %v3381 = vpop.permute.xlu0 %3380
  %3382 = vrot.lane.b32.xlu0 %v3193, 32
  %v3383 = vpop.permute.xlu0 %3382
  %3384 = vrot.lane.b32.xlu0 %v3194, 32
  %v3385 = vpop.permute.xlu0 %3384
  %3386 = vrot.lane.b32.xlu0 %v3195, 32
  %v3387 = vpop.permute.xlu0 %3386
  %vm3452 = vcmask 294144
  %3453 = vst.msk [vmem:[#allocation3] sm:$0xff] %vm3452, %v3261
  %3454 = vst.msk [vmem:[#allocation3 + $0x8] sm:$0xff] %vm3452, %v3263
  %3455 = vst.msk [vmem:[#allocation3 + $0x10] sm:$0xff] %vm3452, %v3265
  %3456 = vst.msk [vmem:[#allocation3 + $0x18] sm:$0xff] %vm3452, %v3267
  %3457 = vst.msk [vmem:[#allocation3 + $0x20] sm:$0xff] %vm3452, %v3269
  %3458 = vst.msk [vmem:[#allocation3 + $0x28] sm:$0xff] %vm3452, %v3271
  %3459 = vst.msk [vmem:[#allocation3 + $0x30] sm:$0xff] %vm3452, %v3273
  %3460 = vst.msk [vmem:[#allocation3 + $0x38] sm:$0xff] %vm3452, %v3275
  %3461 = vst.msk [vmem:[#allocation3 + $0x40] sm:$0xff] %vm3452, %v3277
  %3462 = vst.msk [vmem:[#allocation3 + $0x48] sm:$0xff] %vm3452, %v3279
  %3463 = vst.msk [vmem:[#allocation3 + $0x50] sm:$0xff] %vm3452, %v3281
  %3464 = vst.msk [vmem:[#allocation3 + $0x58] sm:$0xff] %vm3452, %v3283
  %3465 = vst.msk [vmem:[#allocation3 + $0x60] sm:$0xff] %vm3452, %v3285
  %3466 = vst.msk [vmem:[#allocation3 + $0x68] sm:$0xff] %vm3452, %v3287
  %3467 = vst.msk [vmem:[#allocation3 + $0x70] sm:$0xff] %vm3452, %v3289
  %3468 = vst.msk [vmem:[#allocation3 + $0x78] sm:$0xff] %vm3452, %v3291
  %3469 = vst.msk [vmem:[#allocation3 + $0x80] sm:$0xff] %vm3452, %v3293
  %3470 = vst.msk [vmem:[#allocation3 + $0x88] sm:$0xff] %vm3452, %v3295
  %3471 = vst.msk [vmem:[#allocation3 + $0x90] sm:$0xff] %vm3452, %v3297
  %3472 = vst.msk [vmem:[#allocation3 + $0x98] sm:$0xff] %vm3452, %v3299
  %3473 = vst.msk [vmem:[#allocation3 + $0xa0] sm:$0xff] %vm3452, %v3301
  %3474 = vst.msk [vmem:[#allocation3 + $0xa8] sm:$0xff] %vm3452, %v3303
  %3475 = vst.msk [vmem:[#allocation3 + $0xb0] sm:$0xff] %vm3452, %v3305
  %3476 = vst.msk [vmem:[#allocation3 + $0xb8] sm:$0xff] %vm3452, %v3307
  %3477 = vst.msk [vmem:[#allocation3 + $0xc0] sm:$0xff] %vm3452, %v3309
  %3478 = vst.msk [vmem:[#allocation3 + $0xc8] sm:$0xff] %vm3452, %v3311
  %3479 = vst.msk [vmem:[#allocation3 + $0xd0] sm:$0xff] %vm3452, %v3313
  %3480 = vst.msk [vmem:[#allocation3 + $0xd8] sm:$0xff] %vm3452, %v3315
  %3481 = vst.msk [vmem:[#allocation3 + $0xe0] sm:$0xff] %vm3452, %v3317
  %3482 = vst.msk [vmem:[#allocation3 + $0xe8] sm:$0xff] %vm3452, %v3319
  %3483 = vst.msk [vmem:[#allocation3 + $0xf0] sm:$0xff] %vm3452, %v3321
  %3484 = vst.msk [vmem:[#allocation3 + $0xf8] sm:$0xff] %vm3452, %v3323
  %3485 = vst.msk [vmem:[#allocation3 + $0x100] sm:$0xff] %vm3452, %v3325
  %3486 = vst.msk [vmem:[#allocation3 + $0x108] sm:$0xff] %vm3452, %v3327
  %3487 = vst.msk [vmem:[#allocation3 + $0x110] sm:$0xff] %vm3452, %v3329
  %3488 = vst.msk [vmem:[#allocation3 + $0x118] sm:$0xff] %vm3452, %v3331
  %3489 = vst.msk [vmem:[#allocation3 + $0x120] sm:$0xff] %vm3452, %v3333
  %3490 = vst.msk [vmem:[#allocation3 + $0x128] sm:$0xff] %vm3452, %v3335
  %3491 = vst.msk [vmem:[#allocation3 + $0x130] sm:$0xff] %vm3452, %v3337
  %3492 = vst.msk [vmem:[#allocation3 + $0x138] sm:$0xff] %vm3452, %v3339
  %3493 = vst.msk [vmem:[#allocation3 + $0x140] sm:$0xff] %vm3452, %v3341
  %3494 = vst.msk [vmem:[#allocation3 + $0x148] sm:$0xff] %vm3452, %v3343
  %3495 = vst.msk [vmem:[#allocation3 + $0x150] sm:$0xff] %vm3452, %v3345
  %3496 = vst.msk [vmem:[#allocation3 + $0x158] sm:$0xff] %vm3452, %v3347
  %3497 = vst.msk [vmem:[#allocation3 + $0x160] sm:$0xff] %vm3452, %v3349
  %3498 = vst.msk [vmem:[#allocation3 + $0x168] sm:$0xff] %vm3452, %v3351
  %3499 = vst.msk [vmem:[#allocation3 + $0x170] sm:$0xff] %vm3452, %v3353
  %3500 = vst.msk [vmem:[#allocation3 + $0x178] sm:$0xff] %vm3452, %v3355
  %3501 = vst.msk [vmem:[#allocation3 + $0x180] sm:$0xff] %vm3452, %v3357
  %3502 = vst.msk [vmem:[#allocation3 + $0x188] sm:$0xff] %vm3452, %v3359
  %3503 = vst.msk [vmem:[#allocation3 + $0x190] sm:$0xff] %vm3452, %v3361
  %3504 = vst.msk [vmem:[#allocation3 + $0x198] sm:$0xff] %vm3452, %v3363
  %3505 = vst.msk [vmem:[#allocation3 + $0x1a0] sm:$0xff] %vm3452, %v3365
  %3506 = vst.msk [vmem:[#allocation3 + $0x1a8] sm:$0xff] %vm3452, %v3367
  %3507 = vst.msk [vmem:[#allocation3 + $0x1b0] sm:$0xff] %vm3452, %v3369
  %3508 = vst.msk [vmem:[#allocation3 + $0x1b8] sm:$0xff] %vm3452, %v3371
  %3509 = vst.msk [vmem:[#allocation3 + $0x1c0] sm:$0xff] %vm3452, %v3373
  %3510 = vst.msk [vmem:[#allocation3 + $0x1c8] sm:$0xff] %vm3452, %v3375
  %3511 = vst.msk [vmem:[#allocation3 + $0x1d0] sm:$0xff] %vm3452, %v3377
  %3512 = vst.msk [vmem:[#allocation3 + $0x1d8] sm:$0xff] %vm3452, %v3379
  %3513 = vst.msk [vmem:[#allocation3 + $0x1e0] sm:$0xff] %vm3452, %v3381
  %3514 = vst.msk [vmem:[#allocation3 + $0x1e8] sm:$0xff] %vm3452, %v3383
  %3515 = vst.msk [vmem:[#allocation3 + $0x1f0] sm:$0xff] %vm3452, %v3385
  %3516 = vst.msk [vmem:[#allocation3 + $0x1f8] sm:$0xff] %vm3452, %v3387
  %v3517 = vld [vmem:[%s2] sm:$0x1]
  %v3518 = vld [vmem:[#allocation3] sm:$0xff]
  %v3519 = vld [vmem:[#allocation3 + $0x8] sm:$0xff]
  %v3520 = vld [vmem:[#allocation3 + $0x10] sm:$0xff]
  %v3521 = vld [vmem:[#allocation3 + $0x18] sm:$0xff]
  %v3522 = vld [vmem:[#allocation3 + $0x20] sm:$0xff]
  %v3523 = vld [vmem:[#allocation3 + $0x28] sm:$0xff]
  %v3524 = vld [vmem:[#allocation3 + $0x30] sm:$0xff]
  %v3525 = vld [vmem:[#allocation3 + $0x38] sm:$0xff]
  %v3526 = vld [vmem:[#allocation3 + $0x40] sm:$0xff]
  %v3527 = vld [vmem:[#allocation3 + $0x48] sm:$0xff]
  %v3528 = vld [vmem:[#allocation3 + $0x50] sm:$0xff]
  %v3529 = vld [vmem:[#allocation3 + $0x58] sm:$0xff]
  %v3530 = vld [vmem:[#allocation3 + $0x60] sm:$0xff]
  %v3531 = vld [vmem:[#allocation3 + $0x68] sm:$0xff]
  %v3532 = vld [vmem:[#allocation3 + $0x70] sm:$0xff]
  %v3533 = vld [vmem:[#allocation3 + $0x78] sm:$0xff]
  %v3534 = vld [vmem:[#allocation3 + $0x80] sm:$0xff]
  %v3535 = vld [vmem:[#allocation3 + $0x88] sm:$0xff]
  %v3536 = vld [vmem:[#allocation3 + $0x90] sm:$0xff]
  %v3537 = vld [vmem:[#allocation3 + $0x98] sm:$0xff]
  %v3538 = vld [vmem:[#allocation3 + $0xa0] sm:$0xff]
  %v3539 = vld [vmem:[#allocation3 + $0xa8] sm:$0xff]
  %v3540 = vld [vmem:[#allocation3 + $0xb0] sm:$0xff]
  %v3541 = vld [vmem:[#allocation3 + $0xb8] sm:$0xff]
  %v3542 = vld [vmem:[#allocation3 + $0xc0] sm:$0xff]
  %v3543 = vld [vmem:[#allocation3 + $0xc8] sm:$0xff]
  %v3544 = vld [vmem:[#allocation3 + $0xd0] sm:$0xff]
  %v3545 = vld [vmem:[#allocation3 + $0xd8] sm:$0xff]
  %v3546 = vld [vmem:[#allocation3 + $0xe0] sm:$0xff]
  %v3547 = vld [vmem:[#allocation3 + $0xe8] sm:$0xff]
  %v3548 = vld [vmem:[#allocation3 + $0xf0] sm:$0xff]
  %v3549 = vld [vmem:[#allocation3 + $0xf8] sm:$0xff]
  %v3550 = vld [vmem:[%s1] sm:$0xff]
  %v3551 = vld [vmem:[%s1 + $0x8] sm:$0xff]
  %v3552 = vld [vmem:[%s1 + $0x10] sm:$0xff]
  %v3553 = vld [vmem:[%s1 + $0x18] sm:$0xff]
  %v3554 = vld [vmem:[%s1 + $0x20] sm:$0xf]
  %v3556 = vlaneseq
  %v3557 = vshrl.u32 %v3556, 7
  %v3558 = vsub.s32 0, %v3557
  %v3559 = vrot.slane %v3517, %v3558
  %vm3561 = vcmask 293888
  %v3563 = vsel %vm3561, %v3518, 0
  %v3566 = vsel %vm3561, %v3519, 0
  %v3569 = vsel %vm3561, %v3520, 0
  %v3572 = vsel %vm3561, %v3521, 0
  %v3575 = vsel %vm3561, %v3522, 0
  %v3578 = vsel %vm3561, %v3523, 0
  %v3581 = vsel %vm3561, %v3524, 0
  %v3584 = vsel %vm3561, %v3525, 0
  %v3587 = vsel %vm3561, %v3526, 0
  %v3590 = vsel %vm3561, %v3527, 0
  %v3593 = vsel %vm3561, %v3528, 0
  %v3596 = vsel %vm3561, %v3529, 0
  %v3599 = vsel %vm3561, %v3530, 0
  %v3602 = vsel %vm3561, %v3531, 0
  %v3605 = vsel %vm3561, %v3532, 0
  %v3608 = vsel %vm3561, %v3533, 0
  %v3611 = vsel %vm3561, %v3534, 0
  %v3614 = vsel %vm3561, %v3535, 0
  %v3617 = vsel %vm3561, %v3536, 0
  %v3620 = vsel %vm3561, %v3537, 0
  %v3623 = vsel %vm3561, %v3538, 0
  %v3626 = vsel %vm3561, %v3539, 0
  %v3629 = vsel %vm3561, %v3540, 0
  %v3632 = vsel %vm3561, %v3541, 0
  %v3635 = vsel %vm3561, %v3542, 0
  %v3638 = vsel %vm3561, %v3543, 0
  %v3641 = vsel %vm3561, %v3544, 0
  %v3644 = vsel %vm3561, %v3545, 0
  %v3647 = vsel %vm3561, %v3546, 0
  %v3650 = vsel %vm3561, %v3547, 0
  %v3653 = vsel %vm3561, %v3548, 0
  %v3656 = vsel %vm3561, %v3549, 0
  %vm3658 = vcmask 1043456
  %v3660 = vsel %vm3658, %v3554, 0
  %3662 = vmatprep.subr.mxu0 0.0
  %3663 = vmatpush1.msra.mxu0 %v3550
  %3664 = vmatprep.subr.mxu0 0.0
  %3665 = vmatpush1.msra.mxu0 %v3551
  %3666 = vmatprep.subr.mxu0 0.0
  %3667 = vmatpush1.msra.mxu0 %v3552
  %3668 = vmatprep.subr.mxu0 0.0
  %3669 = vmatpush1.msra.mxu0 %v3553
  %3670 = vmatprep.subr.mxu0 0.0
  %3671 = vmatpush1.msra.mxu0 %v3660
  %3672 = vmatprep.subr.mxu0 0.0
  %3673 = vmatpush1.msra.mxu0 0.0
  %3674 = vmatprep.subr.mxu0 0.0
  %3675 = vmatpush1.msra.mxu0 0.0
  %3676 = vmatprep.subr.mxu0 0.0
  %3677 = vmatpush1.msra.mxu0 0.0
  %3678 = vmatprep.subr.mxu0 0.0
  %3679 = vmatpush1.msra.mxu0 0.0
  %3680 = vmatprep.subr.mxu0 0.0
  %3681 = vmatpush1.msra.mxu0 0.0
  %3682 = vmatprep.subr.mxu0 0.0
  %3683 = vmatpush1.msra.mxu0 0.0
  %3684 = vmatprep.subr.mxu0 0.0
  %3685 = vmatpush1.msra.mxu0 0.0
  %3686 = vmatprep.subr.mxu0 0.0
  %3687 = vmatpush1.msra.mxu0 0.0
  %3688 = vmatprep.subr.mxu0 0.0
  %3689 = vmatpush1.msra.mxu0 0.0
  %3690 = vmatprep.subr.mxu0 0.0
  %3691 = vmatpush1.msra.mxu0 0.0
  %3692 = vmatprep.subr.mxu0 0.0
  %3693 = vmatpush1.msra.mxu0 0.0
  %3694 = vmatprep.subr.mxu0 0.0
  %3695 = vmatpush1.msra.mxu0 0.0
  %3696 = vmatprep.subr.mxu0 0.0
  %3697 = vmatpush1.msra.mxu0 0.0
  %3698 = vmatprep.subr.mxu0 0.0
  %3699 = vmatpush1.msra.mxu0 0.0
  %3700 = vmatprep.subr.mxu0 0.0
  %3701 = vmatpush1.msra.mxu0 0.0
  %3702 = vmatprep.subr.mxu0 0.0
  %3703 = vmatpush1.msra.mxu0 0.0
  %3704 = vmatprep.subr.mxu0 0.0
  %3705 = vmatpush1.msra.mxu0 0.0
  %3706 = vmatprep.subr.mxu0 0.0
  %3707 = vmatpush1.msra.mxu0 0.0
  %3708 = vmatprep.subr.mxu0 0.0
  %3709 = vmatpush1.msra.mxu0 0.0
  %3710 = vmatprep.subr.mxu0 0.0
  %3711 = vmatpush1.msra.mxu0 0.0
  %3712 = vmatprep.subr.mxu0 0.0
  %3713 = vmatpush1.msra.mxu0 0.0
  %3714 = vmatprep.subr.mxu0 0.0
  %3715 = vmatpush1.msra.mxu0 0.0
  %3716 = vmatprep.subr.mxu0 0.0
  %3717 = vmatpush1.msra.mxu0 0.0
  %3718 = vmatprep.subr.mxu0 0.0
  %3719 = vmatpush1.msra.mxu0 0.0
  %3720 = vmatprep.subr.mxu0 0.0
  %3721 = vmatpush1.msra.mxu0 0.0
  %3722 = vmatprep.subr.mxu0 0.0
  %3723 = vmatpush1.msra.mxu0 0.0
  %3724 = vmatprep.subr.mxu0 0.0
  %3725 = vmatpush1.msra.mxu0 0.0
  %3726 = vmatprep.mubr.f32.mxu0 0.0
  %3727 = vmatmul.mubr.f32.gmra.mrb[0].mxu0 %v3563
  %v3728 = vpop.f32.mrb[0].mxu0
  %v3729 = vadd.f32 %v3559, %v3728
  %v3730 = vpop.f32.mrb[0].mxu0
  %3731 = vmatprep.mubr.f32.mxu0 0.0
  %3732 = vmatmul.mubr.f32.gmra.mrb[0].mxu0 %v3566
  %v3733 = vpop.f32.mrb[0].mxu0
  %v3734 = vadd.f32 %v3559, %v3733
  %v3735 = vpop.f32.mrb[0].mxu0
  %3736 = vmatprep.mubr.f32.mxu0 0.0
  %3737 = vmatmul.mubr.f32.gmra.mrb[0].mxu0 %v3569
  %v3738 = vpop.f32.mrb[0].mxu0
  %v3739 = vadd.f32 %v3559, %v3738
  %v3740 = vpop.f32.mrb[0].mxu0
  %3741 = vmatprep.mubr.f32.mxu0 0.0
  %3742 = vmatmul.mubr.f32.gmra.mrb[0].mxu0 %v3572
  %v3743 = vpop.f32.mrb[0].mxu0
  %v3744 = vadd.f32 %v3559, %v3743
  %v3745 = vpop.f32.mrb[0].mxu0
  %3746 = vmatprep.mubr.f32.mxu0 0.0
  %3747 = vmatmul.mubr.f32.gmra.mrb[0].mxu0 %v3575
  %v3748 = vpop.f32.mrb[0].mxu0
  %v3749 = vadd.f32 %v3559, %v3748
  %v3750 = vpop.f32.mrb[0].mxu0
  %3751 = vmatprep.mubr.f32.mxu0 0.0
  %3752 = vmatmul.mubr.f32.gmra.mrb[0].mxu0 %v3578
  %v3753 = vpop.f32.mrb[0].mxu0
  %v3754 = vadd.f32 %v3559, %v3753
  %v3755 = vpop.f32.mrb[0].mxu0
  %3756 = vmatprep.mubr.f32.mxu0 0.0
  %3757 = vmatmul.mubr.f32.gmra.mrb[0].mxu0 %v3581
  %v3758 = vpop.f32.mrb[0].mxu0
  %v3759 = vadd.f32 %v3559, %v3758
  %v3760 = vpop.f32.mrb[0].mxu0
  %3761 = vmatprep.mubr.f32.mxu0 0.0
  %3762 = vmatmul.mubr.f32.gmra.mrb[0].mxu0 %v3584
  %v3763 = vpop.f32.mrb[0].mxu0
  %v3764 = vadd.f32 %v3559, %v3763
  %v3765 = vpop.f32.mrb[0].mxu0
  %3766 = vmatprep.mubr.f32.mxu0 0.0
  %3767 = vmatmul.mubr.f32.gmra.mrb[0].mxu0 %v3587
  %v3768 = vpop.f32.mrb[0].mxu0
  %v3769 = vadd.f32 %v3559, %v3768
  %v3770 = vpop.f32.mrb[0].mxu0
  %3771 = vmatprep.mubr.f32.mxu0 0.0
  %3772 = vmatmul.mubr.f32.gmra.mrb[0].mxu0 %v3590
  %v3773 = vpop.f32.mrb[0].mxu0
  %v3774 = vadd.f32 %v3559, %v3773
  %v3775 = vpop.f32.mrb[0].mxu0
  %3776 = vmatprep.mubr.f32.mxu0 0.0
  %3777 = vmatmul.mubr.f32.gmra.mrb[0].mxu0 %v3593
  %v3778 = vpop.f32.mrb[0].mxu0
  %v3779 = vadd.f32 %v3559, %v3778
  %v3780 = vpop.f32.mrb[0].mxu0
  %3781 = vmatprep.mubr.f32.mxu0 0.0
  %3782 = vmatmul.mubr.f32.gmra.mrb[0].mxu0 %v3596
  %v3783 = vpop.f32.mrb[0].mxu0
  %v3784 = vadd.f32 %v3559, %v3783
  %v3785 = vpop.f32.mrb[0].mxu0
  %3786 = vmatprep.mubr.f32.mxu0 0.0
  %3787 = vmatmul.mubr.f32.gmra.mrb[0].mxu0 %v3599
  %v3788 = vpop.f32.mrb[0].mxu0
  %v3789 = vadd.f32 %v3559, %v3788
  %v3790 = vpop.f32.mrb[0].mxu0
  %3791 = vmatprep.mubr.f32.mxu0 0.0
  %3792 = vmatmul.mubr.f32.gmra.mrb[0].mxu0 %v3602
  %v3793 = vpop.f32.mrb[0].mxu0
  %v3794 = vadd.f32 %v3559, %v3793
  %v3795 = vpop.f32.mrb[0].mxu0
  %3796 = vmatprep.mubr.f32.mxu0 0.0
  %3797 = vmatmul.mubr.f32.gmra.mrb[0].mxu0 %v3605
  %v3798 = vpop.f32.mrb[0].mxu0
  %v3799 = vadd.f32 %v3559, %v3798
  %v3800 = vpop.f32.mrb[0].mxu0
  %3801 = vmatprep.mubr.f32.mxu0 0.0
  %3802 = vmatmul.mubr.f32.gmra.mrb[0].mxu0 %v3608
  %v3803 = vpop.f32.mrb[0].mxu0
  %v3804 = vadd.f32 %v3559, %v3803
  %v3805 = vpop.f32.mrb[0].mxu0
  %3806 = vmatprep.mubr.f32.mxu0 0.0
  %3807 = vmatmul.mubr.f32.gmra.mrb[0].mxu0 %v3611
  %v3808 = vpop.f32.mrb[0].mxu0
  %v3809 = vadd.f32 %v3559, %v3808
  %v3810 = vpop.f32.mrb[0].mxu0
  %3811 = vmatprep.mubr.f32.mxu0 0.0
  %3812 = vmatmul.mubr.f32.gmra.mrb[0].mxu0 %v3614
  %v3813 = vpop.f32.mrb[0].mxu0
  %v3814 = vadd.f32 %v3559, %v3813
  %v3815 = vpop.f32.mrb[0].mxu0
  %3816 = vmatprep.mubr.f32.mxu0 0.0
  %3817 = vmatmul.mubr.f32.gmra.mrb[0].mxu0 %v3617
  %v3818 = vpop.f32.mrb[0].mxu0
  %v3819 = vadd.f32 %v3559, %v3818
  %v3820 = vpop.f32.mrb[0].mxu0
  %3821 = vmatprep.mubr.f32.mxu0 0.0
  %3822 = vmatmul.mubr.f32.gmra.mrb[0].mxu0 %v3620
  %v3823 = vpop.f32.mrb[0].mxu0
  %v3824 = vadd.f32 %v3559, %v3823
  %v3825 = vpop.f32.mrb[0].mxu0
  %3826 = vmatprep.mubr.f32.mxu0 0.0
  %3827 = vmatmul.mubr.f32.gmra.mrb[0].mxu0 %v3623
  %v3828 = vpop.f32.mrb[0].mxu0
  %v3829 = vadd.f32 %v3559, %v3828
  %v3830 = vpop.f32.mrb[0].mxu0
  %3831 = vmatprep.mubr.f32.mxu0 0.0
  %3832 = vmatmul.mubr.f32.gmra.mrb[0].mxu0 %v3626
  %v3833 = vpop.f32.mrb[0].mxu0
  %v3834 = vadd.f32 %v3559, %v3833
  %v3835 = vpop.f32.mrb[0].mxu0
  %3836 = vmatprep.mubr.f32.mxu0 0.0
  %3837 = vmatmul.mubr.f32.gmra.mrb[0].mxu0 %v3629
  %v3838 = vpop.f32.mrb[0].mxu0
  %v3839 = vadd.f32 %v3559, %v3838
  %v3840 = vpop.f32.mrb[0].mxu0
  %3841 = vmatprep.mubr.f32.mxu0 0.0
  %3842 = vmatmul.mubr.f32.gmra.mrb[0].mxu0 %v3632
  %v3843 = vpop.f32.mrb[0].mxu0
  %v3844 = vadd.f32 %v3559, %v3843
  %v3845 = vpop.f32.mrb[0].mxu0
  %3846 = vmatprep.mubr.f32.mxu0 0.0
  %3847 = vmatmul.mubr.f32.gmra.mrb[0].mxu0 %v3635
  %v3848 = vpop.f32.mrb[0].mxu0
  %v3849 = vadd.f32 %v3559, %v3848
  %v3850 = vpop.f32.mrb[0].mxu0
  %3851 = vmatprep.mubr.f32.mxu0 0.0
  %3852 = vmatmul.mubr.f32.gmra.mrb[0].mxu0 %v3638
  %v3853 = vpop.f32.mrb[0].mxu0
  %v3854 = vadd.f32 %v3559, %v3853
  %v3855 = vpop.f32.mrb[0].mxu0
  %3856 = vmatprep.mubr.f32.mxu0 0.0
  %3857 = vmatmul.mubr.f32.gmra.mrb[0].mxu0 %v3641
  %v3858 = vpop.f32.mrb[0].mxu0
  %v3859 = vadd.f32 %v3559, %v3858
  %v3860 = vpop.f32.mrb[0].mxu0
  %3861 = vmatprep.mubr.f32.mxu0 0.0
  %3862 = vmatmul.mubr.f32.gmra.mrb[0].mxu0 %v3644
  %v3863 = vpop.f32.mrb[0].mxu0
  %v3864 = vadd.f32 %v3559, %v3863
  %v3865 = vpop.f32.mrb[0].mxu0
  %3866 = vmatprep.mubr.f32.mxu0 0.0
  %3867 = vmatmul.mubr.f32.gmra.mrb[0].mxu0 %v3647
  %v3868 = vpop.f32.mrb[0].mxu0
  %v3869 = vadd.f32 %v3559, %v3868
  %v3870 = vpop.f32.mrb[0].mxu0
  %3871 = vmatprep.mubr.f32.mxu0 0.0
  %3872 = vmatmul.mubr.f32.gmra.mrb[0].mxu0 %v3650
  %v3873 = vpop.f32.mrb[0].mxu0
  %v3874 = vadd.f32 %v3559, %v3873
  %v3875 = vpop.f32.mrb[0].mxu0
  %3876 = vmatprep.mubr.f32.mxu0 0.0
  %3877 = vmatmul.mubr.f32.gmra.mrb[0].mxu0 %v3653
  %v3878 = vpop.f32.mrb[0].mxu0
  %v3879 = vadd.f32 %v3559, %v3878
  %v3880 = vpop.f32.mrb[0].mxu0
  %3881 = vmatprep.mubr.f32.mxu0 0.0
  %3882 = vmatmul.mubr.f32.gmra.mrb[0].mxu0 %v3656
  %v3883 = vpop.f32.mrb[0].mxu0
  %v3884 = vadd.f32 %v3559, %v3883
  %v3885 = vpop.f32.mrb[0].mxu0
  %3886 = vdwg.mxu0
  %vm3887 = vcmask 64512
  %3888 = vst.msk [vmem:[%s3] sm:$0xff] %vm3887, %v3729
  %3889 = vst.msk [vmem:[%s3 + $0x8] sm:$0xff] %vm3887, %v3734
  %3890 = vst.msk [vmem:[%s3 + $0x10] sm:$0xff] %vm3887, %v3739
  %3891 = vst.msk [vmem:[%s3 + $0x18] sm:$0xff] %vm3887, %v3744
  %3892 = vst.msk [vmem:[%s3 + $0x20] sm:$0xff] %vm3887, %v3749
  %3893 = vst.msk [vmem:[%s3 + $0x28] sm:$0xff] %vm3887, %v3754
  %3894 = vst.msk [vmem:[%s3 + $0x30] sm:$0xff] %vm3887, %v3759
  %3895 = vst.msk [vmem:[%s3 + $0x38] sm:$0xff] %vm3887, %v3764
  %3896 = vst.msk [vmem:[%s3 + $0x40] sm:$0xff] %vm3887, %v3769
  %3897 = vst.msk [vmem:[%s3 + $0x48] sm:$0xff] %vm3887, %v3774
  %3898 = vst.msk [vmem:[%s3 + $0x50] sm:$0xff] %vm3887, %v3779
  %3899 = vst.msk [vmem:[%s3 + $0x58] sm:$0xff] %vm3887, %v3784
  %3900 = vst.msk [vmem:[%s3 + $0x60] sm:$0xff] %vm3887, %v3789
  %3901 = vst.msk [vmem:[%s3 + $0x68] sm:$0xff] %vm3887, %v3794
  %3902 = vst.msk [vmem:[%s3 + $0x70] sm:$0xff] %vm3887, %v3799
  %3903 = vst.msk [vmem:[%s3 + $0x78] sm:$0xff] %vm3887, %v3804
  %3904 = vst.msk [vmem:[%s3 + $0x80] sm:$0xff] %vm3887, %v3809
  %3905 = vst.msk [vmem:[%s3 + $0x88] sm:$0xff] %vm3887, %v3814
  %3906 = vst.msk [vmem:[%s3 + $0x90] sm:$0xff] %vm3887, %v3819
  %3907 = vst.msk [vmem:[%s3 + $0x98] sm:$0xff] %vm3887, %v3824
  %3908 = vst.msk [vmem:[%s3 + $0xa0] sm:$0xff] %vm3887, %v3829
  %3909 = vst.msk [vmem:[%s3 + $0xa8] sm:$0xff] %vm3887, %v3834
  %3910 = vst.msk [vmem:[%s3 + $0xb0] sm:$0xff] %vm3887, %v3839
  %3911 = vst.msk [vmem:[%s3 + $0xb8] sm:$0xff] %vm3887, %v3844
  %3912 = vst.msk [vmem:[%s3 + $0xc0] sm:$0xff] %vm3887, %v3849
  %3913 = vst.msk [vmem:[%s3 + $0xc8] sm:$0xff] %vm3887, %v3854
  %3914 = vst.msk [vmem:[%s3 + $0xd0] sm:$0xff] %vm3887, %v3859
  %3915 = vst.msk [vmem:[%s3 + $0xd8] sm:$0xff] %vm3887, %v3864
  %3916 = vst.msk [vmem:[%s3 + $0xe0] sm:$0xff] %vm3887, %v3869
  %3917 = vst.msk [vmem:[%s3 + $0xe8] sm:$0xff] %vm3887, %v3874
  %3918 = vst.msk [vmem:[%s3 + $0xf0] sm:$0xff] %vm3887, %v3879
  %3919 = vst.msk [vmem:[%s3 + $0xf8] sm:$0xff] %vm3887, %v3884
  %s3920 = scalar_lea.vmem [#allocation3], 256
  %v3921 = vld [vmem:[%s3920] sm:$0xff]
  %v3922 = vld [vmem:[%s3920 + $0x8] sm:$0xff]
  %v3923 = vld [vmem:[%s3920 + $0x10] sm:$0xff]
  %v3924 = vld [vmem:[%s3920 + $0x18] sm:$0xff]
  %v3925 = vld [vmem:[%s3920 + $0x20] sm:$0xff]
  %v3926 = vld [vmem:[%s3920 + $0x28] sm:$0xff]
  %v3927 = vld [vmem:[%s3920 + $0x30] sm:$0xff]
  %v3928 = vld [vmem:[%s3920 + $0x38] sm:$0xff]
  %v3929 = vld [vmem:[%s3920 + $0x40] sm:$0xff]
  %v3930 = vld [vmem:[%s3920 + $0x48] sm:$0xff]
  %v3931 = vld [vmem:[%s3920 + $0x50] sm:$0xff]
  %v3932 = vld [vmem:[%s3920 + $0x58] sm:$0xff]
  %v3933 = vld [vmem:[%s3920 + $0x60] sm:$0xff]
  %v3934 = vld [vmem:[%s3920 + $0x68] sm:$0xff]
  %v3935 = vld [vmem:[%s3920 + $0x70] sm:$0xff]
  %v3936 = vld [vmem:[%s3920 + $0x78] sm:$0xff]
  %v3937 = vld [vmem:[%s3920 + $0x80] sm:$0xff]
  %v3938 = vld [vmem:[%s3920 + $0x88] sm:$0xff]
  %v3939 = vld [vmem:[%s3920 + $0x90] sm:$0xff]
  %v3940 = vld [vmem:[%s3920 + $0x98] sm:$0xff]
  %v3941 = vld [vmem:[%s3920 + $0xa0] sm:$0xff]
  %v3942 = vld [vmem:[%s3920 + $0xa8] sm:$0xff]
  %v3943 = vld [vmem:[%s3920 + $0xb0] sm:$0xff]
  %v3944 = vld [vmem:[%s3920 + $0xb8] sm:$0xff]
  %v3945 = vld [vmem:[%s3920 + $0xc0] sm:$0xff]
  %v3946 = vld [vmem:[%s3920 + $0xc8] sm:$0xff]
  %v3947 = vld [vmem:[%s3920 + $0xd0] sm:$0xff]
  %v3948 = vld [vmem:[%s3920 + $0xd8] sm:$0xff]
  %v3949 = vld [vmem:[%s3920 + $0xe0] sm:$0xff]
  %v3950 = vld [vmem:[%s3920 + $0xe8] sm:$0xff]
  %v3951 = vld [vmem:[%s3920 + $0xf0] sm:$0xff]
  %v3952 = vld [vmem:[%s3920 + $0xf8] sm:$0xff]
  %v3953 = vld [vmem:[%s1] sm:$0xff]
  %v3954 = vld [vmem:[%s1 + $0x8] sm:$0xff]
  %v3955 = vld [vmem:[%s1 + $0x10] sm:$0xff]
  %v3956 = vld [vmem:[%s1 + $0x18] sm:$0xff]
  %v3957 = vld [vmem:[%s1 + $0x20] sm:$0xf]
  %v3959 = vsel %vm3561, %v3921, 0
  %v3962 = vsel %vm3561, %v3922, 0
  %v3965 = vsel %vm3561, %v3923, 0
  %v3968 = vsel %vm3561, %v3924, 0
  %v3971 = vsel %vm3561, %v3925, 0
  %v3974 = vsel %vm3561, %v3926, 0
  %v3977 = vsel %vm3561, %v3927, 0
  %v3980 = vsel %vm3561, %v3928, 0
  %v3983 = vsel %vm3561, %v3929, 0
  %v3986 = vsel %vm3561, %v3930, 0
  %v3989 = vsel %vm3561, %v3931, 0
  %v3992 = vsel %vm3561, %v3932, 0
  %v3995 = vsel %vm3561, %v3933, 0
  %v3998 = vsel %vm3561, %v3934, 0
  %v4001 = vsel %vm3561, %v3935, 0
  %v4004 = vsel %vm3561, %v3936, 0
  %v4007 = vsel %vm3561, %v3937, 0
  %v4010 = vsel %vm3561, %v3938, 0
  %v4013 = vsel %vm3561, %v3939, 0
  %v4016 = vsel %vm3561, %v3940, 0
  %v4019 = vsel %vm3561, %v3941, 0
  %v4022 = vsel %vm3561, %v3942, 0
  %v4025 = vsel %vm3561, %v3943, 0
  %v4028 = vsel %vm3561, %v3944, 0
  %v4031 = vsel %vm3561, %v3945, 0
  %v4034 = vsel %vm3561, %v3946, 0
  %v4037 = vsel %vm3561, %v3947, 0
  %v4040 = vsel %vm3561, %v3948, 0
  %v4043 = vsel %vm3561, %v3949, 0
  %v4046 = vsel %vm3561, %v3950, 0
  %v4049 = vsel %vm3561, %v3951, 0
  %v4052 = vsel %vm3561, %v3952, 0
  %v4055 = vsel %vm3658, %v3957, 0
  %4057 = vmatprep.subr.mxu0 0.0
  %4058 = vmatpush1.msra.mxu0 %v3953
  %4059 = vmatprep.subr.mxu0 0.0
  %4060 = vmatpush1.msra.mxu0 %v3954
  %4061 = vmatprep.subr.mxu0 0.0
  %4062 = vmatpush1.msra.mxu0 %v3955
  %4063 = vmatprep.subr.mxu0 0.0
  %4064 = vmatpush1.msra.mxu0 %v3956
  %4065 = vmatprep.subr.mxu0 0.0
  %4066 = vmatpush1.msra.mxu0 %v4055
  %4067 = vmatprep.subr.mxu0 0.0
  %4068 = vmatpush1.msra.mxu0 0.0
  %4069 = vmatprep.subr.mxu0 0.0
  %4070 = vmatpush1.msra.mxu0 0.0
  %4071 = vmatprep.subr.mxu0 0.0
  %4072 = vmatpush1.msra.mxu0 0.0
  %4073 = vmatprep.subr.mxu0 0.0
  %4074 = vmatpush1.msra.mxu0 0.0
  %4075 = vmatprep.subr.mxu0 0.0
  %4076 = vmatpush1.msra.mxu0 0.0
  %4077 = vmatprep.subr.mxu0 0.0
  %4078 = vmatpush1.msra.mxu0 0.0
  %4079 = vmatprep.subr.mxu0 0.0
  %4080 = vmatpush1.msra.mxu0 0.0
  %4081 = vmatprep.subr.mxu0 0.0
  %4082 = vmatpush1.msra.mxu0 0.0
  %4083 = vmatprep.subr.mxu0 0.0
  %4084 = vmatpush1.msra.mxu0 0.0
  %4085 = vmatprep.subr.mxu0 0.0
  %4086 = vmatpush1.msra.mxu0 0.0
  %4087 = vmatprep.subr.mxu0 0.0
  %4088 = vmatpush1.msra.mxu0 0.0
  %4089 = vmatprep.subr.mxu0 0.0
  %4090 = vmatpush1.msra.mxu0 0.0
  %4091 = vmatprep.subr.mxu0 0.0
  %4092 = vmatpush1.msra.mxu0 0.0
  %4093 = vmatprep.subr.mxu0 0.0
  %4094 = vmatpush1.msra.mxu0 0.0
  %4095 = vmatprep.subr.mxu0 0.0
  %4096 = vmatpush1.msra.mxu0 0.0
  %4097 = vmatprep.subr.mxu0 0.0
  %4098 = vmatpush1.msra.mxu0 0.0
  %4099 = vmatprep.subr.mxu0 0.0
  %4100 = vmatpush1.msra.mxu0 0.0
  %4101 = vmatprep.subr.mxu0 0.0
  %4102 = vmatpush1.msra.mxu0 0.0
  %4103 = vmatprep.subr.mxu0 0.0
  %4104 = vmatpush1.msra.mxu0 0.0
  %4105 = vmatprep.subr.mxu0 0.0
  %4106 = vmatpush1.msra.mxu0 0.0
  %4107 = vmatprep.subr.mxu0 0.0
  %4108 = vmatpush1.msra.mxu0 0.0
  %4109 = vmatprep.subr.mxu0 0.0
  %4110 = vmatpush1.msra.mxu0 0.0
  %4111 = vmatprep.subr.mxu0 0.0
  %4112 = vmatpush1.msra.mxu0 0.0
  %4113 = vmatprep.subr.mxu0 0.0
  %4114 = vmatpush1.msra.mxu0 0.0
  %4115 = vmatprep.subr.mxu0 0.0
  %4116 = vmatpush1.msra.mxu0 0.0
  %4117 = vmatprep.subr.mxu0 0.0
  %4118 = vmatpush1.msra.mxu0 0.0
  %4119 = vmatprep.subr.mxu0 0.0
  %4120 = vmatpush1.msra.mxu0 0.0
  %4121 = vmatprep.mubr.f32.mxu0 0.0
  %4122 = vmatmul.mubr.f32.gmra.mrb[0].mxu0 %v3959
  %v4123 = vpop.f32.mrb[0].mxu0
  %v4124 = vadd.f32 %v3559, %v4123
  %v4125 = vpop.f32.mrb[0].mxu0
  %4126 = vmatprep.mubr.f32.mxu0 0.0
  %4127 = vmatmul.mubr.f32.gmra.mrb[0].mxu0 %v3962
  %v4128 = vpop.f32.mrb[0].mxu0
  %v4129 = vadd.f32 %v3559, %v4128
  %v4130 = vpop.f32.mrb[0].mxu0
  %4131 = vmatprep.mubr.f32.mxu0 0.0
  %4132 = vmatmul.mubr.f32.gmra.mrb[0].mxu0 %v3965
  %v4133 = vpop.f32.mrb[0].mxu0
  %v4134 = vadd.f32 %v3559, %v4133
  %v4135 = vpop.f32.mrb[0].mxu0
  %4136 = vmatprep.mubr.f32.mxu0 0.0
  %4137 = vmatmul.mubr.f32.gmra.mrb[0].mxu0 %v3968
  %v4138 = vpop.f32.mrb[0].mxu0
  %v4139 = vadd.f32 %v3559, %v4138
  %v4140 = vpop.f32.mrb[0].mxu0
  %4141 = vmatprep.mubr.f32.mxu0 0.0
  %4142 = vmatmul.mubr.f32.gmra.mrb[0].mxu0 %v3971
  %v4143 = vpop.f32.mrb[0].mxu0
  %v4144 = vadd.f32 %v3559, %v4143
  %v4145 = vpop.f32.mrb[0].mxu0
  %4146 = vmatprep.mubr.f32.mxu0 0.0
  %4147 = vmatmul.mubr.f32.gmra.mrb[0].mxu0 %v3974
  %v4148 = vpop.f32.mrb[0].mxu0
  %v4149 = vadd.f32 %v3559, %v4148
  %v4150 = vpop.f32.mrb[0].mxu0
  %4151 = vmatprep.mubr.f32.mxu0 0.0
  %4152 = vmatmul.mubr.f32.gmra.mrb[0].mxu0 %v3977
  %v4153 = vpop.f32.mrb[0].mxu0
  %v4154 = vadd.f32 %v3559, %v4153
  %v4155 = vpop.f32.mrb[0].mxu0
  %4156 = vmatprep.mubr.f32.mxu0 0.0
  %4157 = vmatmul.mubr.f32.gmra.mrb[0].mxu0 %v3980
  %v4158 = vpop.f32.mrb[0].mxu0
  %v4159 = vadd.f32 %v3559, %v4158
  %v4160 = vpop.f32.mrb[0].mxu0
  %4161 = vmatprep.mubr.f32.mxu0 0.0
  %4162 = vmatmul.mubr.f32.gmra.mrb[0].mxu0 %v3983
  %v4163 = vpop.f32.mrb[0].mxu0
  %v4164 = vadd.f32 %v3559, %v4163
  %v4165 = vpop.f32.mrb[0].mxu0
  %4166 = vmatprep.mubr.f32.mxu0 0.0
  %4167 = vmatmul.mubr.f32.gmra.mrb[0].mxu0 %v3986
  %v4168 = vpop.f32.mrb[0].mxu0
  %v4169 = vadd.f32 %v3559, %v4168
  %v4170 = vpop.f32.mrb[0].mxu0
  %4171 = vmatprep.mubr.f32.mxu0 0.0
  %4172 = vmatmul.mubr.f32.gmra.mrb[0].mxu0 %v3989
  %v4173 = vpop.f32.mrb[0].mxu0
  %v4174 = vadd.f32 %v3559, %v4173
  %v4175 = vpop.f32.mrb[0].mxu0
  %4176 = vmatprep.mubr.f32.mxu0 0.0
  %4177 = vmatmul.mubr.f32.gmra.mrb[0].mxu0 %v3992
  %v4178 = vpop.f32.mrb[0].mxu0
  %v4179 = vadd.f32 %v3559, %v4178
  %v4180 = vpop.f32.mrb[0].mxu0
  %4181 = vmatprep.mubr.f32.mxu0 0.0
  %4182 = vmatmul.mubr.f32.gmra.mrb[0].mxu0 %v3995
  %v4183 = vpop.f32.mrb[0].mxu0
  %v4184 = vadd.f32 %v3559, %v4183
  %v4185 = vpop.f32.mrb[0].mxu0
  %4186 = vmatprep.mubr.f32.mxu0 0.0
  %4187 = vmatmul.mubr.f32.gmra.mrb[0].mxu0 %v3998
  %v4188 = vpop.f32.mrb[0].mxu0
  %v4189 = vadd.f32 %v3559, %v4188
  %v4190 = vpop.f32.mrb[0].mxu0
  %4191 = vmatprep.mubr.f32.mxu0 0.0
  %4192 = vmatmul.mubr.f32.gmra.mrb[0].mxu0 %v4001
  %v4193 = vpop.f32.mrb[0].mxu0
  %v4194 = vadd.f32 %v3559, %v4193
  %v4195 = vpop.f32.mrb[0].mxu0
  %4196 = vmatprep.mubr.f32.mxu0 0.0
  %4197 = vmatmul.mubr.f32.gmra.mrb[0].mxu0 %v4004
  %v4198 = vpop.f32.mrb[0].mxu0
  %v4199 = vadd.f32 %v3559, %v4198
  %v4200 = vpop.f32.mrb[0].mxu0
  %4201 = vmatprep.mubr.f32.mxu0 0.0
  %4202 = vmatmul.mubr.f32.gmra.mrb[0].mxu0 %v4007
  %v4203 = vpop.f32.mrb[0].mxu0
  %v4204 = vadd.f32 %v3559, %v4203
  %v4205 = vpop.f32.mrb[0].mxu0
  %4206 = vmatprep.mubr.f32.mxu0 0.0
  %4207 = vmatmul.mubr.f32.gmra.mrb[0].mxu0 %v4010
  %v4208 = vpop.f32.mrb[0].mxu0
  %v4209 = vadd.f32 %v3559, %v4208
  %v4210 = vpop.f32.mrb[0].mxu0
  %4211 = vmatprep.mubr.f32.mxu0 0.0
  %4212 = vmatmul.mubr.f32.gmra.mrb[0].mxu0 %v4013
  %v4213 = vpop.f32.mrb[0].mxu0
  %v4214 = vadd.f32 %v3559, %v4213
  %v4215 = vpop.f32.mrb[0].mxu0
  %4216 = vmatprep.mubr.f32.mxu0 0.0
  %4217 = vmatmul.mubr.f32.gmra.mrb[0].mxu0 %v4016
  %v4218 = vpop.f32.mrb[0].mxu0
  %v4219 = vadd.f32 %v3559, %v4218
  %v4220 = vpop.f32.mrb[0].mxu0
  %4221 = vmatprep.mubr.f32.mxu0 0.0
  %4222 = vmatmul.mubr.f32.gmra.mrb[0].mxu0 %v4019
  %v4223 = vpop.f32.mrb[0].mxu0
  %v4224 = vadd.f32 %v3559, %v4223
  %v4225 = vpop.f32.mrb[0].mxu0
  %4226 = vmatprep.mubr.f32.mxu0 0.0
  %4227 = vmatmul.mubr.f32.gmra.mrb[0].mxu0 %v4022
  %v4228 = vpop.f32.mrb[0].mxu0
  %v4229 = vadd.f32 %v3559, %v4228
  %v4230 = vpop.f32.mrb[0].mxu0
  %4231 = vmatprep.mubr.f32.mxu0 0.0
  %4232 = vmatmul.mubr.f32.gmra.mrb[0].mxu0 %v4025
  %v4233 = vpop.f32.mrb[0].mxu0
  %v4234 = vadd.f32 %v3559, %v4233
  %v4235 = vpop.f32.mrb[0].mxu0
  %4236 = vmatprep.mubr.f32.mxu0 0.0
  %4237 = vmatmul.mubr.f32.gmra.mrb[0].mxu0 %v4028
  %v4238 = vpop.f32.mrb[0].mxu0
  %v4239 = vadd.f32 %v3559, %v4238
  %v4240 = vpop.f32.mrb[0].mxu0
  %4241 = vmatprep.mubr.f32.mxu0 0.0
  %4242 = vmatmul.mubr.f32.gmra.mrb[0].mxu0 %v4031
  %v4243 = vpop.f32.mrb[0].mxu0
  %v4244 = vadd.f32 %v3559, %v4243
  %v4245 = vpop.f32.mrb[0].mxu0
  %4246 = vmatprep.mubr.f32.mxu0 0.0
  %4247 = vmatmul.mubr.f32.gmra.mrb[0].mxu0 %v4034
  %v4248 = vpop.f32.mrb[0].mxu0
  %v4249 = vadd.f32 %v3559, %v4248
  %v4250 = vpop.f32.mrb[0].mxu0
  %4251 = vmatprep.mubr.f32.mxu0 0.0
  %4252 = vmatmul.mubr.f32.gmra.mrb[0].mxu0 %v4037
  %v4253 = vpop.f32.mrb[0].mxu0
  %v4254 = vadd.f32 %v3559, %v4253
  %v4255 = vpop.f32.mrb[0].mxu0
  %4256 = vmatprep.mubr.f32.mxu0 0.0
  %4257 = vmatmul.mubr.f32.gmra.mrb[0].mxu0 %v4040
  %v4258 = vpop.f32.mrb[0].mxu0
  %v4259 = vadd.f32 %v3559, %v4258
  %v4260 = vpop.f32.mrb[0].mxu0
  %4261 = vmatprep.mubr.f32.mxu0 0.0
  %4262 = vmatmul.mubr.f32.gmra.mrb[0].mxu0 %v4043
  %v4263 = vpop.f32.mrb[0].mxu0
  %v4264 = vadd.f32 %v3559, %v4263
  %v4265 = vpop.f32.mrb[0].mxu0
  %4266 = vmatprep.mubr.f32.mxu0 0.0
  %4267 = vmatmul.mubr.f32.gmra.mrb[0].mxu0 %v4046
  %v4268 = vpop.f32.mrb[0].mxu0
  %v4269 = vadd.f32 %v3559, %v4268
  %v4270 = vpop.f32.mrb[0].mxu0
  %4271 = vmatprep.mubr.f32.mxu0 0.0
  %4272 = vmatmul.mubr.f32.gmra.mrb[0].mxu0 %v4049
  %v4273 = vpop.f32.mrb[0].mxu0
  %v4274 = vadd.f32 %v3559, %v4273
  %v4275 = vpop.f32.mrb[0].mxu0
  %4276 = vmatprep.mubr.f32.mxu0 0.0
  %4277 = vmatmul.mubr.f32.gmra.mrb[0].mxu0 %v4052
  %v4278 = vpop.f32.mrb[0].mxu0
  %v4279 = vadd.f32 %v3559, %v4278
  %v4280 = vpop.f32.mrb[0].mxu0
  %4281 = vdwg.mxu0
  %s4282 = scalar_lea.vmem %s3, 256
  %4283 = vst.msk [vmem:[%s4282] sm:$0xff] %vm3887, %v4124
  %4284 = vst.msk [vmem:[%s4282 + $0x8] sm:$0xff] %vm3887, %v4129
  %4285 = vst.msk [vmem:[%s4282 + $0x10] sm:$0xff] %vm3887, %v4134
  %4286 = vst.msk [vmem:[%s4282 + $0x18] sm:$0xff] %vm3887, %v4139
  %4287 = vst.msk [vmem:[%s4282 + $0x20] sm:$0xff] %vm3887, %v4144
  %4288 = vst.msk [vmem:[%s4282 + $0x28] sm:$0xff] %vm3887, %v4149
  %4289 = vst.msk [vmem:[%s4282 + $0x30] sm:$0xff] %vm3887, %v4154
  %4290 = vst.msk [vmem:[%s4282 + $0x38] sm:$0xff] %vm3887, %v4159
  %4291 = vst.msk [vmem:[%s4282 + $0x40] sm:$0xff] %vm3887, %v4164
  %4292 = vst.msk [vmem:[%s4282 + $0x48] sm:$0xff] %vm3887, %v4169
  %4293 = vst.msk [vmem:[%s4282 + $0x50] sm:$0xff] %vm3887, %v4174
  %4294 = vst.msk [vmem:[%s4282 + $0x58] sm:$0xff] %vm3887, %v4179
  %4295 = vst.msk [vmem:[%s4282 + $0x60] sm:$0xff] %vm3887, %v4184
  %4296 = vst.msk [vmem:[%s4282 + $0x68] sm:$0xff] %vm3887, %v4189
  %4297 = vst.msk [vmem:[%s4282 + $0x70] sm:$0xff] %vm3887, %v4194
  %4298 = vst.msk [vmem:[%s4282 + $0x78] sm:$0xff] %vm3887, %v4199
  %4299 = vst.msk [vmem:[%s4282 + $0x80] sm:$0xff] %vm3887, %v4204
  %4300 = vst.msk [vmem:[%s4282 + $0x88] sm:$0xff] %vm3887, %v4209
  %4301 = vst.msk [vmem:[%s4282 + $0x90] sm:$0xff] %vm3887, %v4214
  %4302 = vst.msk [vmem:[%s4282 + $0x98] sm:$0xff] %vm3887, %v4219
  %4303 = vst.msk [vmem:[%s4282 + $0xa0] sm:$0xff] %vm3887, %v4224
  %4304 = vst.msk [vmem:[%s4282 + $0xa8] sm:$0xff] %vm3887, %v4229
  %4305 = vst.msk [vmem:[%s4282 + $0xb0] sm:$0xff] %vm3887, %v4234
  %4306 = vst.msk [vmem:[%s4282 + $0xb8] sm:$0xff] %vm3887, %v4239
  %4307 = vst.msk [vmem:[%s4282 + $0xc0] sm:$0xff] %vm3887, %v4244
  %4308 = vst.msk [vmem:[%s4282 + $0xc8] sm:$0xff] %vm3887, %v4249
  %4309 = vst.msk [vmem:[%s4282 + $0xd0] sm:$0xff] %vm3887, %v4254
  %4310 = vst.msk [vmem:[%s4282 + $0xd8] sm:$0xff] %vm3887, %v4259
  %4311 = vst.msk [vmem:[%s4282 + $0xe0] sm:$0xff] %vm3887, %v4264
  %4312 = vst.msk [vmem:[%s4282 + $0xe8] sm:$0xff] %vm3887, %v4269
  %4313 = vst.msk [vmem:[%s4282 + $0xf0] sm:$0xff] %vm3887, %v4274
  %4314 = vst.msk [vmem:[%s4282 + $0xf8] sm:$0xff] %vm3887, %v4279
  // Predicated region
  $region14: #{tpu_custom_call.1} parent=0 // pred_check
    _
  $region15: #{tpu_custom_call.1} parent=0 // pred_check_branch
    %4316 = sbr.rel (0) target = $region17
  $region16: #{tpu_custom_call.1} parent=0 // pred_region
    _
  $region17: #{tpu_custom_call.1} parent=0 // pred_fallthru
    _
  // Predicated region
  $region18: #{tpu_custom_call.1} parent=0 // pred_check
    _
  $region19: #{tpu_custom_call.1} parent=0 // pred_check_branch
    %4318 = sbr.rel (0) target = $region21
  $region20: #{tpu_custom_call.1} parent=0 // pred_region
    _
  $region21: #{tpu_custom_call.1} parent=0 // pred_fallthru
    _

</llo_original>
